<compile_context>
chip_gen: v6e
topology: v6e:2x2x1
jax: 0.10.0
libtpu: 0.0.40
codegen_flags: <defaults>
</compile_context>

<pallas_src>
import functools

import jax
import jax.numpy as jnp
from jax import lax
from jax.experimental import pallas as pl
from jax.experimental.pallas import tpu as pltpu


CFG = dict(
    vocab_size=50,
    max_position=16,
    type_vocab=2,
    hidden=32,
    heads=4,
    layers=2,
    intermediate=64,
    n_classes=3,
)
C_PAD = 128      # lane-dense classifier output width (multiple of 128)
LN_EPS = 1e-12


# ------------------------------ in-kernel helpers ------------------------------ #

def _gelu(y):
    # tanh approximation of GELU (HF BERT uses erf-GELU; numerically very close)
    return 0.5 * y * (1.0 + jnp.tanh(0.7978845608028654 * (y + 0.044715 * y * y * y)))


def _layernorm(h, g, b, eps):
    mu = jnp.mean(h, axis=-1, keepdims=True)
    var = jnp.mean((h - mu) ** 2, axis=-1, keepdims=True)
    return (h - mu) * lax.rsqrt(var + eps) * g + b


# ------------------------------- fused Pallas kernel ---------------------------- #

def _fused_forward_kernel(emb_ref, mask_ref, embg_ref, embb_ref,
                          wqkv_ref, bqkv_ref, wo_ref, bo_ref,
                          ln1g_ref, ln1b_ref, w1_ref, b1_ref,
                          w2_ref, b2_ref, ln2g_ref, ln2b_ref,
                          pw_ref, pb_ref, cw_ref, cb_ref,
                          o_ref, *, num_layers, num_heads, eps):
    """Full BERT forward (emb-LN -> L encoder layers -> pooler -> head) for one
    batch element, entirely resident in VMEM."""
    # ---- embedding LayerNorm ----
    h = _layernorm(emb_ref[0].astype(jnp.float32), embg_ref[...], embb_ref[...], eps)  # [S, H]
    m = mask_ref[0]                                   # [1, S] additive mask (key axis)
    S, H = h.shape
    nH = num_heads
    dH = H // nH

    # ---- encoder layers (weights stacked on leading L axis, static unroll) ----
    for l in range(num_layers):
        # fused QKV projection: one [S,H] @ [H,3H] matmul (scale folded into Q cols)
        qkv = jnp.dot(h, wqkv_ref[l], preferred_element_type=jnp.float32) + bqkv_ref[l]  # [S, 3H]
        q = qkv[:, 0 * H:1 * H].reshape(S, nH, dH)
        k = qkv[:, 1 * H:2 * H].reshape(S, nH, dH)
        v = qkv[:, 2 * H:3 * H].reshape(S, nH, dH)

        # all-head attention
        s = jnp.einsum("qnd,knd->nqk", q, k, preferred_element_type=jnp.float32)  # [nH,S,S]
        s = s + m[None]                                # broadcast over heads & query rows
        s = s - jnp.max(s, axis=-1, keepdims=True)
        p = jnp.exp(s)
        p = p * pl.reciprocal(jnp.sum(p, axis=-1, keepdims=True), approx=True)
        ctx = jnp.einsum("nqk,knd->qnd", p, v, preferred_element_type=jnp.float32)  # [S,nH,dH]

        # output projection (single [S,H] @ [H,H] matmul) + residual + LayerNorm
        attn = jnp.dot(ctx.reshape(S, H), wo_ref[l],
                       preferred_element_type=jnp.float32) + bo_ref[l]             # [S, H]
        h1 = _layernorm(attn + h, ln1g_ref[l], ln1b_ref[l], eps)

        # feed-forward (GELU) + residual + LayerNorm
        ffn = jnp.dot(h1, w1_ref[l], preferred_element_type=jnp.float32) + b1_ref[l]
        ffn = _gelu(ffn)
        ffn = jnp.dot(ffn, w2_ref[l], preferred_element_type=jnp.float32) + b2_ref[l]
        h = _layernorm(ffn + h1, ln2g_ref[l], ln2b_ref[l], eps)

    # ---- pooler (tanh on CLS) + dropout(identity at inference) + classifier ----
    cls_tok = h[0:1, :]                                                             # [1, H]
    pooled = jnp.tanh(jnp.dot(cls_tok, pw_ref[...],
                              preferred_element_type=jnp.float32) + pb_ref[...])
    logits = jnp.dot(pooled, cw_ref[...],
                     preferred_element_type=jnp.float32) + cb_ref[...]              # [1, C_PAD]
    o_ref[0] = logits.astype(o_ref.dtype)


def pallas_natureza_forward(emb, mask_add, kp, *, num_layers, num_heads, eps=LN_EPS):
    B, S, H = emb.shape
    L = num_layers
    I = kp["w1"].shape[-1]
    Cp = kp["cls_w"].shape[-1]

    def const(shape):
        # Whole-array, grid-invariant block (DMA'd once; never re-fetched).
        # TODO(synk): pipeline_mode=pl.Buffered(1) here would halve weight VMEM on v7x.
        n = len(shape)
        return pl.BlockSpec(shape, lambda b, _n=n: (0,) * _n)

    kernel = functools.partial(_fused_forward_kernel,
                               num_layers=num_layers, num_heads=num_heads, eps=eps)
    out = pl.pallas_call(
        kernel,
        out_shape=jax.ShapeDtypeStruct((B, 1, Cp), emb.dtype),
        grid=(B,),
        in_specs=[
            pl.BlockSpec((1, S, H), lambda b: (b, 0, 0)),   # embeddings, per batch
            pl.BlockSpec((1, 1, S), lambda b: (b, 0, 0)),   # additive mask, per batch
            const((1, H)), const((1, H)),                   # embedding LayerNorm
            const((L, H, 3 * H)), const((L, 1, 3 * H)),     # fused QKV (scale folded)
            const((L, H, H)), const((L, 1, H)),             # attention output proj
            const((L, 1, H)), const((L, 1, H)),             # attn LayerNorm
            const((L, H, I)), const((L, 1, I)),             # FFN up
            const((L, I, H)), const((L, 1, H)),             # FFN down
            const((L, 1, H)), const((L, 1, H)),             # FFN LayerNorm
            const((H, H)), const((1, H)),                   # pooler
            const((H, Cp)), const((1, Cp)),                 # classifier (lane-padded)
        ],
        out_specs=pl.BlockSpec((1, 1, Cp), lambda b: (b, 0, 0)),   # lane-dense (128)
        compiler_params=pltpu.CompilerParams(dimension_semantics=("parallel",)),
    )(emb, mask_add,
      kp["emb_ln_g"], kp["emb_ln_b"],
      kp["wqkv"], kp["bqkv"], kp["wo"], kp["bo"],
      kp["ln1_g"], kp["ln1_b"], kp["w1"], kp["b1"],
      kp["w2"], kp["b2"], kp["ln2_g"], kp["ln2_b"],
      kp["pooler_w"], kp["pooler_b"], kp["cls_w"], kp["cls_b"])
    return out[:, 0, :]          # [B, C_PAD]


# ------------------------------- model definition ------------------------------- #

def init_raw_params(key, cfg):
    """Raw, unpacked parameters (with NONZERO biases so the packing is exercised)."""
    H, I, C = cfg["hidden"], cfg["intermediate"], cfg["n_classes"]
    keys = iter(jax.random.split(key, 512))

    def w(shape, scale=0.02):
        return jax.random.normal(next(keys), shape, jnp.float32) * scale

    raw = {
        "word_emb": w((cfg["vocab_size"], H)),
        "pos_emb": w((cfg["max_position"], H)),
        "type_emb": w((cfg["type_vocab"], H)),
        "emb_ln_g": jnp.ones((1, H), jnp.float32), "emb_ln_b": w((1, H)),
        "pooler_w": w((H, H)), "pooler_b": w((1, H)),
        "cls_w": w((H, C)), "cls_b": w((1, C)),
        "layers": [],
    }
    for _ in range(cfg["layers"]):
        raw["layers"].append({
            "wq": w((H, H)), "bq": w((1, H)),
            "wk": w((H, H)), "bk": w((1, H)),
            "wv": w((H, H)), "bv": w((1, H)),
            "wo": w((H, H)), "bo": w((1, H)),
            "ln1_g": jnp.ones((1, H), jnp.float32), "ln1_b": w((1, H)),
            "w1": w((H, I)), "b1": w((1, I)),
            "w2": w((I, H)), "b2": w((1, H)),
            "ln2_g": jnp.ones((1, H), jnp.float32), "ln2_b": w((1, H)),
        })
    return raw


def pack_params(raw, cfg):
    """Host-side packing: fused [H, 3H] QKV (1/sqrt(dH) folded into Q columns+bias),
    per-layer weights stacked on a leading L axis, lane-padded classifier head."""
    # TODO(synk): store packed weights in bf16 (keep f32 MXU accumulation / LN / softmax)
    #             to halve HBM->VMEM DMA bytes at real BERT-base shapes.
    H, nH, C = cfg["hidden"], cfg["heads"], cfg["n_classes"]
    dH = H // nH
    scale = 1.0 / (dH ** 0.5)

    def stack(name):
        return jnp.stack([lp[name] for lp in raw["layers"]], axis=0)

    return {
        "word_emb": raw["word_emb"], "pos_emb": raw["pos_emb"], "type_emb": raw["type_emb"],
        "emb_ln_g": raw["emb_ln_g"], "emb_ln_b": raw["emb_ln_b"],
        "wqkv": jnp.stack([jnp.concatenate([lp["wq"] * scale, lp["wk"], lp["wv"]], axis=1)
                           for lp in raw["layers"]], axis=0),                  # [L, H, 3H]
        "bqkv": jnp.stack([jnp.concatenate([lp["bq"] * scale, lp["bk"], lp["bv"]], axis=1)
                           for lp in raw["layers"]], axis=0),                  # [L, 1, 3H]
        "wo": stack("wo"), "bo": stack("bo"),
        "ln1_g": stack("ln1_g"), "ln1_b": stack("ln1_b"),
        "w1": stack("w1"), "b1": stack("b1"),
        "w2": stack("w2"), "b2": stack("b2"),
        "ln2_g": stack("ln2_g"), "ln2_b": stack("ln2_b"),
        "pooler_w": raw["pooler_w"], "pooler_b": raw["pooler_b"],
        "cls_w": jnp.zeros((H, C_PAD), jnp.float32).at[:, :C].set(raw["cls_w"]),
        "cls_b": jnp.zeros((1, C_PAD), jnp.float32).at[:, :C].set(raw["cls_b"]),
    }


def natureza_classifier_forward(kp, input_ids, attention_mask, cfg):
    B, S = input_ids.shape
    # ---- embeddings (gather glue in plain JAX) ----
    pos_ids = jnp.arange(S)
    type_ids = jnp.zeros((B, S), jnp.int32)          # token_type_ids default to zeros
    emb = (jnp.take(kp["word_emb"], input_ids, axis=0)
           + jnp.take(kp["pos_emb"], pos_ids, axis=0)[None, :, :]
           + jnp.take(kp["type_emb"], type_ids, axis=0))
    # additive attention mask kept at [B, 1, S] (no per-head duplication)
    mask_add = ((1.0 - attention_mask.astype(jnp.float32)) * -1e9).reshape(B, 1, S)
    # ---- single fused Pallas call for the whole transformer + head ----
    logits_pad = pallas_natureza_forward(emb, mask_add, kp,
                                         num_layers=cfg["layers"], num_heads=cfg["heads"])
    return logits_pad[:, :cfg["n_classes"]]


# ------------------------------ plain-JAX reference ------------------------------ #

def reference_forward(raw, input_ids, attention_mask, cfg):
    """Standard per-head BERT forward from the UNPACKED weights (validates the fused
    QKV packing, scale folding and output-projection merge in the kernel)."""
    B, S = input_ids.shape
    H, nH = cfg["hidden"], cfg["heads"]
    dH = H // nH
    pos_ids = jnp.arange(S)
    emb = (jnp.take(raw["word_emb"], input_ids, axis=0)
           + jnp.take(raw["pos_emb"], pos_ids, axis=0)[None, :, :]
           + raw["type_emb"][0][None, None, :])
    h = _layernorm(emb, raw["emb_ln_g"], raw["emb_ln_b"], LN_EPS)
    mask_add = ((1.0 - attention_mask.astype(jnp.float32)) * -1e9)[:, None, None, :]
    for lp in raw["layers"]:
        def split(x):
            return x.reshape(B, S, nH, dH).transpose(0, 2, 1, 3)
        q = split(h @ lp["wq"] + lp["bq"])
        k = split(h @ lp["wk"] + lp["bk"])
        v = split(h @ lp["wv"] + lp["bv"])
        s = jnp.einsum("bnqd,bnkd->bnqk", q, k) / (dH ** 0.5) + mask_add
        p = jax.nn.softmax(s, axis=-1)
        ctx = jnp.einsum("bnqk,bnkd->bnqd", p, v).transpose(0, 2, 1, 3).reshape(B, S, H)
        h1 = _layernorm(ctx @ lp["wo"] + lp["bo"] + h, lp["ln1_g"], lp["ln1_b"], LN_EPS)
        ffn = _gelu(h1 @ lp["w1"] + lp["b1"]) @ lp["w2"] + lp["b2"]
        h = _layernorm(ffn + h1, lp["ln2_g"], lp["ln2_b"], LN_EPS)
    pooled = jnp.tanh(h[:, 0, :] @ raw["pooler_w"] + raw["pooler_b"])
    return pooled @ raw["cls_w"] + raw["cls_b"]


# ------------------------------------ main -------------------------------------- #

if __name__ == "__main__":
    key = jax.random.PRNGKey(0)
    k_param, k_ids = jax.random.split(key)

    B, S = 2, 8
    raw = init_raw_params(k_param, CFG)
    kp = pack_params(raw, CFG)
    input_ids = jax.random.randint(k_ids, (B, S), 0, CFG["vocab_size"], dtype=jnp.int32)
    attention_mask = jnp.ones((B, S), jnp.int32).at[1, 6:].set(0)  # pad last 2 tokens of row 1

    fwd = jax.jit(functools.partial(natureza_classifier_forward, cfg=CFG))
    logits = fwd(kp, input_ids, attention_mask)
    jax.block_until_ready(logits)
    assert logits.shape == (B, CFG["n_classes"])

    ref = reference_forward(raw, input_ids, attention_mask, CFG)
    assert jnp.allclose(logits, ref, atol=2e-2, rtol=2e-2), (logits, ref)

    print("KERNEL_OK")
</pallas_src>

<mosaic_0001>
module attributes {stable_mosaic.version = 11 : i64} {
  func.func @_fused_forward_kernel(%arg0: i32, %arg1: memref<1x8x32xf32, #tpu.memory_space<vmem>>, %arg2: memref<1x1x8xf32, #tpu.memory_space<vmem>>, %arg3: memref<1x32xf32, #tpu.memory_space<vmem>>, %arg4: memref<1x32xf32, #tpu.memory_space<vmem>>, %arg5: memref<2x32x96xf32, #tpu.memory_space<vmem>>, %arg6: memref<2x1x96xf32, #tpu.memory_space<vmem>>, %arg7: memref<2x32x32xf32, #tpu.memory_space<vmem>>, %arg8: memref<2x1x32xf32, #tpu.memory_space<vmem>>, %arg9: memref<2x1x32xf32, #tpu.memory_space<vmem>>, %arg10: memref<2x1x32xf32, #tpu.memory_space<vmem>>, %arg11: memref<2x32x64xf32, #tpu.memory_space<vmem>>, %arg12: memref<2x1x64xf32, #tpu.memory_space<vmem>>, %arg13: memref<2x64x32xf32, #tpu.memory_space<vmem>>, %arg14: memref<2x1x32xf32, #tpu.memory_space<vmem>>, %arg15: memref<2x1x32xf32, #tpu.memory_space<vmem>>, %arg16: memref<2x1x32xf32, #tpu.memory_space<vmem>>, %arg17: memref<32x32xf32, #tpu.memory_space<vmem>>, %arg18: memref<1x32xf32, #tpu.memory_space<vmem>>, %arg19: memref<32x128xf32, #tpu.memory_space<vmem>>, %arg20: memref<1x128xf32, #tpu.memory_space<vmem>>, %arg21: memref<1x1x128xf32, #tpu.memory_space<vmem>>) attributes {dimension_semantics = [#tpu.dimension_semantics<parallel>], iteration_bounds = array<i64: 2>, scalar_prefetch = 0 : i64, scratch_operands = 0 : i64, tpu.core_type = #tpu.core_type<tc>, window_params = [{transform_indices = @transform_0, window_bounds = array<i64: 1, 8, 32>}, {transform_indices = @transform_1, window_bounds = array<i64: 1, 1, 8>}, {pipeline_mode = #tpu.pipeline_mode<synchronous>, transform_indices = @transform_2, window_bounds = array<i64: 1, 32>}, {pipeline_mode = #tpu.pipeline_mode<synchronous>, transform_indices = @transform_3, window_bounds = array<i64: 1, 32>}, {pipeline_mode = #tpu.pipeline_mode<synchronous>, transform_indices = @transform_4, window_bounds = array<i64: 2, 32, 96>}, {pipeline_mode = #tpu.pipeline_mode<synchronous>, transform_indices = @transform_5, window_bounds = array<i64: 2, 1, 96>}, {pipeline_mode = #tpu.pipeline_mode<synchronous>, transform_indices = @transform_6, window_bounds = array<i64: 2, 32, 32>}, {pipeline_mode = #tpu.pipeline_mode<synchronous>, transform_indices = @transform_7, window_bounds = array<i64: 2, 1, 32>}, {pipeline_mode = #tpu.pipeline_mode<synchronous>, transform_indices = @transform_8, window_bounds = array<i64: 2, 1, 32>}, {pipeline_mode = #tpu.pipeline_mode<synchronous>, transform_indices = @transform_9, window_bounds = array<i64: 2, 1, 32>}, {pipeline_mode = #tpu.pipeline_mode<synchronous>, transform_indices = @transform_10, window_bounds = array<i64: 2, 32, 64>}, {pipeline_mode = #tpu.pipeline_mode<synchronous>, transform_indices = @transform_11, window_bounds = array<i64: 2, 1, 64>}, {pipeline_mode = #tpu.pipeline_mode<synchronous>, transform_indices = @transform_12, window_bounds = array<i64: 2, 64, 32>}, {pipeline_mode = #tpu.pipeline_mode<synchronous>, transform_indices = @transform_13, window_bounds = array<i64: 2, 1, 32>}, {pipeline_mode = #tpu.pipeline_mode<synchronous>, transform_indices = @transform_14, window_bounds = array<i64: 2, 1, 32>}, {pipeline_mode = #tpu.pipeline_mode<synchronous>, transform_indices = @transform_15, window_bounds = array<i64: 2, 1, 32>}, {pipeline_mode = #tpu.pipeline_mode<synchronous>, transform_indices = @transform_16, window_bounds = array<i64: 32, 32>}, {pipeline_mode = #tpu.pipeline_mode<synchronous>, transform_indices = @transform_17, window_bounds = array<i64: 1, 32>}, {pipeline_mode = #tpu.pipeline_mode<synchronous>, transform_indices = @transform_18, window_bounds = array<i64: 32, 128>}, {pipeline_mode = #tpu.pipeline_mode<synchronous>, transform_indices = @transform_19, window_bounds = array<i64: 1, 128>}, {transform_indices = @transform_20, window_bounds = array<i64: 1, 1, 128>}]} {
    %c0 = arith.constant 0 : index
    %c0_0 = arith.constant 0 : index
    %c0_1 = arith.constant 0 : index
    %0 = vector.load %arg1[%c0, %c0_0, %c0_1] : memref<1x8x32xf32, #tpu.memory_space<vmem>>, vector<1x8x32xf32>
    %1 = vector.shape_cast %0 : vector<1x8x32xf32> to vector<8x32xf32>
    %c0_2 = arith.constant 0 : index
    %c0_3 = arith.constant 0 : index
    %2 = vector.load %arg3[%c0_2, %c0_3] : memref<1x32xf32, #tpu.memory_space<vmem>>, vector<1x32xf32>
    %c0_4 = arith.constant 0 : index
    %c0_5 = arith.constant 0 : index
    %3 = vector.load %arg4[%c0_4, %c0_5] : memref<1x32xf32, #tpu.memory_space<vmem>>, vector<1x32xf32>
    %cst = arith.constant dense<0.000000e+00> : vector<8xf32>
    %4 = vector.multi_reduction <add>, %1, %cst [1] : vector<8x32xf32> to vector<8xf32>
    %5 = vector.shape_cast %4 : vector<8xf32> to vector<8x1xf32>
    %cst_6 = arith.constant 3.200000e+01 : f32
    %6 = vector.broadcast %cst_6 : f32 to vector<8x1xf32>
    %7 = arith.divf %5, %6 : vector<8x1xf32>
    %8 = vector.broadcast %7 : vector<8x1xf32> to vector<8x32xf32>
    %9 = arith.subf %1, %8 : vector<8x32xf32>
    %10 = arith.mulf %9, %9 : vector<8x32xf32>
    %cst_7 = arith.constant dense<0.000000e+00> : vector<8xf32>
    %11 = vector.multi_reduction <add>, %10, %cst_7 [1] : vector<8x32xf32> to vector<8xf32>
    %12 = vector.shape_cast %11 : vector<8xf32> to vector<8x1xf32>
    %cst_8 = arith.constant 3.200000e+01 : f32
    %13 = vector.broadcast %cst_8 : f32 to vector<8x1xf32>
    %14 = arith.divf %12, %13 : vector<8x1xf32>
    %15 = vector.broadcast %7 : vector<8x1xf32> to vector<8x32xf32>
    %16 = arith.subf %1, %15 : vector<8x32xf32>
    %cst_9 = arith.constant 9.99999996E-13 : f32
    %17 = vector.broadcast %cst_9 : f32 to vector<8x1xf32>
    %18 = arith.addf %14, %17 : vector<8x1xf32>
    %19 = math.rsqrt %18 : vector<8x1xf32>
    %20 = vector.broadcast %19 : vector<8x1xf32> to vector<8x32xf32>
    %21 = arith.mulf %16, %20 : vector<8x32xf32>
    %22 = vector.broadcast %2 : vector<1x32xf32> to vector<8x32xf32>
    %23 = arith.mulf %21, %22 : vector<8x32xf32>
    %24 = vector.broadcast %3 : vector<1x32xf32> to vector<8x32xf32>
    %25 = arith.addf %23, %24 : vector<8x32xf32>
    %c0_10 = arith.constant 0 : index
    %c0_11 = arith.constant 0 : index
    %c0_12 = arith.constant 0 : index
    %26 = vector.load %arg2[%c0_10, %c0_11, %c0_12] : memref<1x1x8xf32, #tpu.memory_space<vmem>>, vector<1x1x8xf32>
    %27 = vector.shape_cast %26 : vector<1x1x8xf32> to vector<1x8xf32>
    %c0_13 = arith.constant 0 : index
    %c0_14 = arith.constant 0 : index
    %c0_15 = arith.constant 0 : index
    %28 = vector.load %arg5[%c0_13, %c0_14, %c0_15] : memref<2x32x96xf32, #tpu.memory_space<vmem>>, vector<1x32x96xf32>
    %29 = vector.shape_cast %28 : vector<1x32x96xf32> to vector<32x96xf32>
    %cst_16 = arith.constant dense<0.000000e+00> : vector<8x96xf32>
    %30 = tpu.matmul %25, %29, %cst_16 {dimension_numbers = #tpu.dot_dimension_numbers<[1], [0], [0], [1], [0, 0, 1, 1], [], []>} : vector<8x32xf32>, vector<32x96xf32>, vector<8x96xf32> -> vector<8x96xf32>
    %c0_17 = arith.constant 0 : index
    %c0_18 = arith.constant 0 : index
    %c0_19 = arith.constant 0 : index
    %31 = vector.load %arg6[%c0_17, %c0_18, %c0_19] : memref<2x1x96xf32, #tpu.memory_space<vmem>>, vector<1x1x96xf32>
    %32 = vector.shape_cast %31 : vector<1x1x96xf32> to vector<1x96xf32>
    %33 = vector.broadcast %32 : vector<1x96xf32> to vector<8x96xf32>
    %34 = arith.addf %30, %33 : vector<8x96xf32>
    %35 = vector.extract_strided_slice %34 {offsets = [0, 0], sizes = [8, 32], strides = [1, 1]} : vector<8x96xf32> to vector<8x32xf32>
    %36 = vector.shape_cast %35 : vector<8x32xf32> to vector<8x4x8xf32>
    %37 = vector.extract_strided_slice %34 {offsets = [0, 32], sizes = [8, 32], strides = [1, 1]} : vector<8x96xf32> to vector<8x32xf32>
    %38 = vector.shape_cast %37 : vector<8x32xf32> to vector<8x4x8xf32>
    %39 = vector.extract_strided_slice %34 {offsets = [0, 64], sizes = [8, 32], strides = [1, 1]} : vector<8x96xf32> to vector<8x32xf32>
    %40 = vector.shape_cast %39 : vector<8x32xf32> to vector<8x4x8xf32>
    "tpu.trace_start"() <{level = 10 : i32, message = "qnd,knd->nqk"}> : () -> ()
    %cst_20 = arith.constant dense<0.000000e+00> : vector<4x8x8xf32>
    %41 = tpu.matmul %36, %38, %cst_20 {dimension_numbers = #tpu.dot_dimension_numbers<[2], [2], [0], [0], [0, 1, 0, 0, 1, 0], [1], [1]>} : vector<8x4x8xf32>, vector<8x4x8xf32>, vector<4x8x8xf32> -> vector<4x8x8xf32>
    "tpu.trace_stop"() : () -> ()
    %42 = vector.shape_cast %27 : vector<1x8xf32> to vector<1x1x8xf32>
    %43 = vector.broadcast %42 : vector<1x1x8xf32> to vector<4x8x8xf32>
    %44 = arith.addf %41, %43 : vector<4x8x8xf32>
    %cst_21 = arith.constant dense<0xFF800000> : vector<4x8xf32>
    %45 = vector.multi_reduction <maximumf>, %44, %cst_21 [2] : vector<4x8x8xf32> to vector<4x8xf32>
    %46 = vector.shape_cast %45 : vector<4x8xf32> to vector<4x8x1xf32>
    %47 = vector.broadcast %46 : vector<4x8x1xf32> to vector<4x8x8xf32>
    %48 = arith.subf %44, %47 : vector<4x8x8xf32>
    %49 = math.exp %48 : vector<4x8x8xf32>
    %cst_22 = arith.constant dense<0.000000e+00> : vector<4x8xf32>
    %50 = vector.multi_reduction <add>, %49, %cst_22 [2] : vector<4x8x8xf32> to vector<4x8xf32>
    %51 = vector.shape_cast %50 : vector<4x8xf32> to vector<4x8x1xf32>
    %52 = tpu.reciprocal %51 {approx = true} : vector<4x8x1xf32> -> vector<4x8x1xf32>
    %53 = vector.broadcast %52 : vector<4x8x1xf32> to vector<4x8x8xf32>
    %54 = arith.mulf %49, %53 : vector<4x8x8xf32>
    "tpu.trace_start"() <{level = 10 : i32, message = "nqk,knd->qnd"}> : () -> ()
    %cst_23 = arith.constant dense<0.000000e+00> : vector<4x8x8xf32>
    %55 = tpu.matmul %40, %54, %cst_23 {dimension_numbers = #tpu.dot_dimension_numbers<[0], [2], [2], [1], [0, 1, 0, 2, 1, 1], [1], [0]>} : vector<8x4x8xf32>, vector<4x8x8xf32>, vector<4x8x8xf32> -> vector<4x8x8xf32>
    %56 = tpu.transpose %55, [2, 0, 1] : vector<4x8x8xf32> -> vector<8x4x8xf32>
    "tpu.trace_stop"() : () -> ()
    %57 = vector.shape_cast %56 : vector<8x4x8xf32> to vector<8x32xf32>
    %c0_24 = arith.constant 0 : index
    %c0_25 = arith.constant 0 : index
    %c0_26 = arith.constant 0 : index
    %58 = vector.load %arg7[%c0_24, %c0_25, %c0_26] : memref<2x32x32xf32, #tpu.memory_space<vmem>>, vector<1x32x32xf32>
    %59 = vector.shape_cast %58 : vector<1x32x32xf32> to vector<32x32xf32>
    %cst_27 = arith.constant dense<0.000000e+00> : vector<8x32xf32>
    %60 = tpu.matmul %57, %59, %cst_27 {dimension_numbers = #tpu.dot_dimension_numbers<[1], [0], [0], [1], [0, 0, 1, 1], [], []>} : vector<8x32xf32>, vector<32x32xf32>, vector<8x32xf32> -> vector<8x32xf32>
    %c0_28 = arith.constant 0 : index
    %c0_29 = arith.constant 0 : index
    %c0_30 = arith.constant 0 : index
    %61 = vector.load %arg8[%c0_28, %c0_29, %c0_30] : memref<2x1x32xf32, #tpu.memory_space<vmem>>, vector<1x1x32xf32>
    %62 = vector.shape_cast %61 : vector<1x1x32xf32> to vector<1x32xf32>
    %63 = vector.broadcast %62 : vector<1x32xf32> to vector<8x32xf32>
    %64 = arith.addf %60, %63 : vector<8x32xf32>
    %65 = arith.addf %64, %25 : vector<8x32xf32>
    %c0_31 = arith.constant 0 : index
    %c0_32 = arith.constant 0 : index
    %c0_33 = arith.constant 0 : index
    %66 = vector.load %arg9[%c0_31, %c0_32, %c0_33] : memref<2x1x32xf32, #tpu.memory_space<vmem>>, vector<1x1x32xf32>
    %67 = vector.shape_cast %66 : vector<1x1x32xf32> to vector<1x32xf32>
    %c0_34 = arith.constant 0 : index
    %c0_35 = arith.constant 0 : index
    %c0_36 = arith.constant 0 : index
    %68 = vector.load %arg10[%c0_34, %c0_35, %c0_36] : memref<2x1x32xf32, #tpu.memory_space<vmem>>, vector<1x1x32xf32>
    %69 = vector.shape_cast %68 : vector<1x1x32xf32> to vector<1x32xf32>
    %cst_37 = arith.constant dense<0.000000e+00> : vector<8xf32>
    %70 = vector.multi_reduction <add>, %65, %cst_37 [1] : vector<8x32xf32> to vector<8xf32>
    %71 = vector.shape_cast %70 : vector<8xf32> to vector<8x1xf32>
    %cst_38 = arith.constant 3.200000e+01 : f32
    %72 = vector.broadcast %cst_38 : f32 to vector<8x1xf32>
    %73 = arith.divf %71, %72 : vector<8x1xf32>
    %74 = vector.broadcast %73 : vector<8x1xf32> to vector<8x32xf32>
    %75 = arith.subf %65, %74 : vector<8x32xf32>
    %76 = arith.mulf %75, %75 : vector<8x32xf32>
    %cst_39 = arith.constant dense<0.000000e+00> : vector<8xf32>
    %77 = vector.multi_reduction <add>, %76, %cst_39 [1] : vector<8x32xf32> to vector<8xf32>
    %78 = vector.shape_cast %77 : vector<8xf32> to vector<8x1xf32>
    %cst_40 = arith.constant 3.200000e+01 : f32
    %79 = vector.broadcast %cst_40 : f32 to vector<8x1xf32>
    %80 = arith.divf %78, %79 : vector<8x1xf32>
    %81 = vector.broadcast %73 : vector<8x1xf32> to vector<8x32xf32>
    %82 = arith.subf %65, %81 : vector<8x32xf32>
    %cst_41 = arith.constant 9.99999996E-13 : f32
    %83 = vector.broadcast %cst_41 : f32 to vector<8x1xf32>
    %84 = arith.addf %80, %83 : vector<8x1xf32>
    %85 = math.rsqrt %84 : vector<8x1xf32>
    %86 = vector.broadcast %85 : vector<8x1xf32> to vector<8x32xf32>
    %87 = arith.mulf %82, %86 : vector<8x32xf32>
    %88 = vector.broadcast %67 : vector<1x32xf32> to vector<8x32xf32>
    %89 = arith.mulf %87, %88 : vector<8x32xf32>
    %90 = vector.broadcast %69 : vector<1x32xf32> to vector<8x32xf32>
    %91 = arith.addf %89, %90 : vector<8x32xf32>
    %c0_42 = arith.constant 0 : index
    %c0_43 = arith.constant 0 : index
    %c0_44 = arith.constant 0 : index
    %92 = vector.load %arg11[%c0_42, %c0_43, %c0_44] : memref<2x32x64xf32, #tpu.memory_space<vmem>>, vector<1x32x64xf32>
    %93 = vector.shape_cast %92 : vector<1x32x64xf32> to vector<32x64xf32>
    %cst_45 = arith.constant dense<0.000000e+00> : vector<8x64xf32>
    %94 = tpu.matmul %91, %93, %cst_45 {dimension_numbers = #tpu.dot_dimension_numbers<[1], [0], [0], [1], [0, 0, 1, 1], [], []>} : vector<8x32xf32>, vector<32x64xf32>, vector<8x64xf32> -> vector<8x64xf32>
    %c0_46 = arith.constant 0 : index
    %c0_47 = arith.constant 0 : index
    %c0_48 = arith.constant 0 : index
    %95 = vector.load %arg12[%c0_46, %c0_47, %c0_48] : memref<2x1x64xf32, #tpu.memory_space<vmem>>, vector<1x1x64xf32>
    %96 = vector.shape_cast %95 : vector<1x1x64xf32> to vector<1x64xf32>
    %97 = vector.broadcast %96 : vector<1x64xf32> to vector<8x64xf32>
    %98 = arith.addf %94, %97 : vector<8x64xf32>
    %cst_49 = arith.constant 5.000000e-01 : f32
    %99 = vector.broadcast %cst_49 : f32 to vector<8x64xf32>
    %100 = arith.mulf %99, %98 : vector<8x64xf32>
    %cst_50 = arith.constant 4.471500e-02 : f32
    %101 = vector.broadcast %cst_50 : f32 to vector<8x64xf32>
    %102 = arith.mulf %101, %98 : vector<8x64xf32>
    %103 = arith.mulf %102, %98 : vector<8x64xf32>
    %104 = arith.mulf %103, %98 : vector<8x64xf32>
    %105 = arith.addf %98, %104 : vector<8x64xf32>
    %cst_51 = arith.constant 0.797884583 : f32
    %106 = vector.broadcast %cst_51 : f32 to vector<8x64xf32>
    %107 = arith.mulf %106, %105 : vector<8x64xf32>
    %108 = math.tanh %107 : vector<8x64xf32>
    %cst_52 = arith.constant 1.000000e+00 : f32
    %109 = vector.broadcast %cst_52 : f32 to vector<8x64xf32>
    %110 = arith.addf %109, %108 : vector<8x64xf32>
    %111 = arith.mulf %100, %110 : vector<8x64xf32>
    %c0_53 = arith.constant 0 : index
    %c0_54 = arith.constant 0 : index
    %c0_55 = arith.constant 0 : index
    %112 = vector.load %arg13[%c0_53, %c0_54, %c0_55] : memref<2x64x32xf32, #tpu.memory_space<vmem>>, vector<1x64x32xf32>
    %113 = vector.shape_cast %112 : vector<1x64x32xf32> to vector<64x32xf32>
    %cst_56 = arith.constant dense<0.000000e+00> : vector<8x32xf32>
    %114 = tpu.matmul %111, %113, %cst_56 {dimension_numbers = #tpu.dot_dimension_numbers<[1], [0], [0], [1], [0, 0, 1, 1], [], []>} : vector<8x64xf32>, vector<64x32xf32>, vector<8x32xf32> -> vector<8x32xf32>
    %c0_57 = arith.constant 0 : index
    %c0_58 = arith.constant 0 : index
    %c0_59 = arith.constant 0 : index
    %115 = vector.load %arg14[%c0_57, %c0_58, %c0_59] : memref<2x1x32xf32, #tpu.memory_space<vmem>>, vector<1x1x32xf32>
    %116 = vector.shape_cast %115 : vector<1x1x32xf32> to vector<1x32xf32>
    %117 = vector.broadcast %116 : vector<1x32xf32> to vector<8x32xf32>
    %118 = arith.addf %114, %117 : vector<8x32xf32>
    %119 = arith.addf %118, %91 : vector<8x32xf32>
    %c0_60 = arith.constant 0 : index
    %c0_61 = arith.constant 0 : index
    %c0_62 = arith.constant 0 : index
    %120 = vector.load %arg15[%c0_60, %c0_61, %c0_62] : memref<2x1x32xf32, #tpu.memory_space<vmem>>, vector<1x1x32xf32>
    %121 = vector.shape_cast %120 : vector<1x1x32xf32> to vector<1x32xf32>
    %c0_63 = arith.constant 0 : index
    %c0_64 = arith.constant 0 : index
    %c0_65 = arith.constant 0 : index
    %122 = vector.load %arg16[%c0_63, %c0_64, %c0_65] : memref<2x1x32xf32, #tpu.memory_space<vmem>>, vector<1x1x32xf32>
    %123 = vector.shape_cast %122 : vector<1x1x32xf32> to vector<1x32xf32>
    %cst_66 = arith.constant dense<0.000000e+00> : vector<8xf32>
    %124 = vector.multi_reduction <add>, %119, %cst_66 [1] : vector<8x32xf32> to vector<8xf32>
    %125 = vector.shape_cast %124 : vector<8xf32> to vector<8x1xf32>
    %cst_67 = arith.constant 3.200000e+01 : f32
    %126 = vector.broadcast %cst_67 : f32 to vector<8x1xf32>
    %127 = arith.divf %125, %126 : vector<8x1xf32>
    %128 = vector.broadcast %127 : vector<8x1xf32> to vector<8x32xf32>
    %129 = arith.subf %119, %128 : vector<8x32xf32>
    %130 = arith.mulf %129, %129 : vector<8x32xf32>
    %cst_68 = arith.constant dense<0.000000e+00> : vector<8xf32>
    %131 = vector.multi_reduction <add>, %130, %cst_68 [1] : vector<8x32xf32> to vector<8xf32>
    %132 = vector.shape_cast %131 : vector<8xf32> to vector<8x1xf32>
    %cst_69 = arith.constant 3.200000e+01 : f32
    %133 = vector.broadcast %cst_69 : f32 to vector<8x1xf32>
    %134 = arith.divf %132, %133 : vector<8x1xf32>
    %135 = vector.broadcast %127 : vector<8x1xf32> to vector<8x32xf32>
    %136 = arith.subf %119, %135 : vector<8x32xf32>
    %cst_70 = arith.constant 9.99999996E-13 : f32
    %137 = vector.broadcast %cst_70 : f32 to vector<8x1xf32>
    %138 = arith.addf %134, %137 : vector<8x1xf32>
    %139 = math.rsqrt %138 : vector<8x1xf32>
    %140 = vector.broadcast %139 : vector<8x1xf32> to vector<8x32xf32>
    %141 = arith.mulf %136, %140 : vector<8x32xf32>
    %142 = vector.broadcast %121 : vector<1x32xf32> to vector<8x32xf32>
    %143 = arith.mulf %141, %142 : vector<8x32xf32>
    %144 = vector.broadcast %123 : vector<1x32xf32> to vector<8x32xf32>
    %145 = arith.addf %143, %144 : vector<8x32xf32>
    %c1 = arith.constant 1 : index
    %c0_71 = arith.constant 0 : index
    %c0_72 = arith.constant 0 : index
    %146 = vector.load %arg5[%c1, %c0_71, %c0_72] : memref<2x32x96xf32, #tpu.memory_space<vmem>>, vector<1x32x96xf32>
    %147 = vector.shape_cast %146 : vector<1x32x96xf32> to vector<32x96xf32>
    %cst_73 = arith.constant dense<0.000000e+00> : vector<8x96xf32>
    %148 = tpu.matmul %145, %147, %cst_73 {dimension_numbers = #tpu.dot_dimension_numbers<[1], [0], [0], [1], [0, 0, 1, 1], [], []>} : vector<8x32xf32>, vector<32x96xf32>, vector<8x96xf32> -> vector<8x96xf32>
    %c1_74 = arith.constant 1 : index
    %c0_75 = arith.constant 0 : index
    %c0_76 = arith.constant 0 : index
    %149 = vector.load %arg6[%c1_74, %c0_75, %c0_76] : memref<2x1x96xf32, #tpu.memory_space<vmem>>, vector<1x1x96xf32>
    %150 = vector.shape_cast %149 : vector<1x1x96xf32> to vector<1x96xf32>
    %151 = vector.broadcast %150 : vector<1x96xf32> to vector<8x96xf32>
    %152 = arith.addf %148, %151 : vector<8x96xf32>
    %153 = vector.extract_strided_slice %152 {offsets = [0, 0], sizes = [8, 32], strides = [1, 1]} : vector<8x96xf32> to vector<8x32xf32>
    %154 = vector.shape_cast %153 : vector<8x32xf32> to vector<8x4x8xf32>
    %155 = vector.extract_strided_slice %152 {offsets = [0, 32], sizes = [8, 32], strides = [1, 1]} : vector<8x96xf32> to vector<8x32xf32>
    %156 = vector.shape_cast %155 : vector<8x32xf32> to vector<8x4x8xf32>
    %157 = vector.extract_strided_slice %152 {offsets = [0, 64], sizes = [8, 32], strides = [1, 1]} : vector<8x96xf32> to vector<8x32xf32>
    %158 = vector.shape_cast %157 : vector<8x32xf32> to vector<8x4x8xf32>
    "tpu.trace_start"() <{level = 10 : i32, message = "qnd,knd->nqk"}> : () -> ()
    %cst_77 = arith.constant dense<0.000000e+00> : vector<4x8x8xf32>
    %159 = tpu.matmul %154, %156, %cst_77 {dimension_numbers = #tpu.dot_dimension_numbers<[2], [2], [0], [0], [0, 1, 0, 0, 1, 0], [1], [1]>} : vector<8x4x8xf32>, vector<8x4x8xf32>, vector<4x8x8xf32> -> vector<4x8x8xf32>
    "tpu.trace_stop"() : () -> ()
    %160 = vector.shape_cast %27 : vector<1x8xf32> to vector<1x1x8xf32>
    %161 = vector.broadcast %160 : vector<1x1x8xf32> to vector<4x8x8xf32>
    %162 = arith.addf %159, %161 : vector<4x8x8xf32>
    %cst_78 = arith.constant dense<0xFF800000> : vector<4x8xf32>
    %163 = vector.multi_reduction <maximumf>, %162, %cst_78 [2] : vector<4x8x8xf32> to vector<4x8xf32>
    %164 = vector.shape_cast %163 : vector<4x8xf32> to vector<4x8x1xf32>
    %165 = vector.broadcast %164 : vector<4x8x1xf32> to vector<4x8x8xf32>
    %166 = arith.subf %162, %165 : vector<4x8x8xf32>
    %167 = math.exp %166 : vector<4x8x8xf32>
    %cst_79 = arith.constant dense<0.000000e+00> : vector<4x8xf32>
    %168 = vector.multi_reduction <add>, %167, %cst_79 [2] : vector<4x8x8xf32> to vector<4x8xf32>
    %169 = vector.shape_cast %168 : vector<4x8xf32> to vector<4x8x1xf32>
    %170 = tpu.reciprocal %169 {approx = true} : vector<4x8x1xf32> -> vector<4x8x1xf32>
    %171 = vector.broadcast %170 : vector<4x8x1xf32> to vector<4x8x8xf32>
    %172 = arith.mulf %167, %171 : vector<4x8x8xf32>
    "tpu.trace_start"() <{level = 10 : i32, message = "nqk,knd->qnd"}> : () -> ()
    %cst_80 = arith.constant dense<0.000000e+00> : vector<4x8x8xf32>
    %173 = tpu.matmul %158, %172, %cst_80 {dimension_numbers = #tpu.dot_dimension_numbers<[0], [2], [2], [1], [0, 1, 0, 2, 1, 1], [1], [0]>} : vector<8x4x8xf32>, vector<4x8x8xf32>, vector<4x8x8xf32> -> vector<4x8x8xf32>
    %174 = tpu.transpose %173, [2, 0, 1] : vector<4x8x8xf32> -> vector<8x4x8xf32>
    "tpu.trace_stop"() : () -> ()
    %175 = vector.shape_cast %174 : vector<8x4x8xf32> to vector<8x32xf32>
    %c1_81 = arith.constant 1 : index
    %c0_82 = arith.constant 0 : index
    %c0_83 = arith.constant 0 : index
    %176 = vector.load %arg7[%c1_81, %c0_82, %c0_83] : memref<2x32x32xf32, #tpu.memory_space<vmem>>, vector<1x32x32xf32>
    %177 = vector.shape_cast %176 : vector<1x32x32xf32> to vector<32x32xf32>
    %cst_84 = arith.constant dense<0.000000e+00> : vector<8x32xf32>
    %178 = tpu.matmul %175, %177, %cst_84 {dimension_numbers = #tpu.dot_dimension_numbers<[1], [0], [0], [1], [0, 0, 1, 1], [], []>} : vector<8x32xf32>, vector<32x32xf32>, vector<8x32xf32> -> vector<8x32xf32>
    %c1_85 = arith.constant 1 : index
    %c0_86 = arith.constant 0 : index
    %c0_87 = arith.constant 0 : index
    %179 = vector.load %arg8[%c1_85, %c0_86, %c0_87] : memref<2x1x32xf32, #tpu.memory_space<vmem>>, vector<1x1x32xf32>
    %180 = vector.shape_cast %179 : vector<1x1x32xf32> to vector<1x32xf32>
    %181 = vector.broadcast %180 : vector<1x32xf32> to vector<8x32xf32>
    %182 = arith.addf %178, %181 : vector<8x32xf32>
    %183 = arith.addf %182, %145 : vector<8x32xf32>
    %c1_88 = arith.constant 1 : index
    %c0_89 = arith.constant 0 : index
    %c0_90 = arith.constant 0 : index
    %184 = vector.load %arg9[%c1_88, %c0_89, %c0_90] : memref<2x1x32xf32, #tpu.memory_space<vmem>>, vector<1x1x32xf32>
    %185 = vector.shape_cast %184 : vector<1x1x32xf32> to vector<1x32xf32>
    %c1_91 = arith.constant 1 : index
    %c0_92 = arith.constant 0 : index
    %c0_93 = arith.constant 0 : index
    %186 = vector.load %arg10[%c1_91, %c0_92, %c0_93] : memref<2x1x32xf32, #tpu.memory_space<vmem>>, vector<1x1x32xf32>
    %187 = vector.shape_cast %186 : vector<1x1x32xf32> to vector<1x32xf32>
    %cst_94 = arith.constant dense<0.000000e+00> : vector<8xf32>
    %188 = vector.multi_reduction <add>, %183, %cst_94 [1] : vector<8x32xf32> to vector<8xf32>
    %189 = vector.shape_cast %188 : vector<8xf32> to vector<8x1xf32>
    %cst_95 = arith.constant 3.200000e+01 : f32
    %190 = vector.broadcast %cst_95 : f32 to vector<8x1xf32>
    %191 = arith.divf %189, %190 : vector<8x1xf32>
    %192 = vector.broadcast %191 : vector<8x1xf32> to vector<8x32xf32>
    %193 = arith.subf %183, %192 : vector<8x32xf32>
    %194 = arith.mulf %193, %193 : vector<8x32xf32>
    %cst_96 = arith.constant dense<0.000000e+00> : vector<8xf32>
    %195 = vector.multi_reduction <add>, %194, %cst_96 [1] : vector<8x32xf32> to vector<8xf32>
    %196 = vector.shape_cast %195 : vector<8xf32> to vector<8x1xf32>
    %cst_97 = arith.constant 3.200000e+01 : f32
    %197 = vector.broadcast %cst_97 : f32 to vector<8x1xf32>
    %198 = arith.divf %196, %197 : vector<8x1xf32>
    %199 = vector.broadcast %191 : vector<8x1xf32> to vector<8x32xf32>
    %200 = arith.subf %183, %199 : vector<8x32xf32>
    %cst_98 = arith.constant 9.99999996E-13 : f32
    %201 = vector.broadcast %cst_98 : f32 to vector<8x1xf32>
    %202 = arith.addf %198, %201 : vector<8x1xf32>
    %203 = math.rsqrt %202 : vector<8x1xf32>
    %204 = vector.broadcast %203 : vector<8x1xf32> to vector<8x32xf32>
    %205 = arith.mulf %200, %204 : vector<8x32xf32>
    %206 = vector.broadcast %185 : vector<1x32xf32> to vector<8x32xf32>
    %207 = arith.mulf %205, %206 : vector<8x32xf32>
    %208 = vector.broadcast %187 : vector<1x32xf32> to vector<8x32xf32>
    %209 = arith.addf %207, %208 : vector<8x32xf32>
    %c1_99 = arith.constant 1 : index
    %c0_100 = arith.constant 0 : index
    %c0_101 = arith.constant 0 : index
    %210 = vector.load %arg11[%c1_99, %c0_100, %c0_101] : memref<2x32x64xf32, #tpu.memory_space<vmem>>, vector<1x32x64xf32>
    %211 = vector.shape_cast %210 : vector<1x32x64xf32> to vector<32x64xf32>
    %cst_102 = arith.constant dense<0.000000e+00> : vector<8x64xf32>
    %212 = tpu.matmul %209, %211, %cst_102 {dimension_numbers = #tpu.dot_dimension_numbers<[1], [0], [0], [1], [0, 0, 1, 1], [], []>} : vector<8x32xf32>, vector<32x64xf32>, vector<8x64xf32> -> vector<8x64xf32>
    %c1_103 = arith.constant 1 : index
    %c0_104 = arith.constant 0 : index
    %c0_105 = arith.constant 0 : index
    %213 = vector.load %arg12[%c1_103, %c0_104, %c0_105] : memref<2x1x64xf32, #tpu.memory_space<vmem>>, vector<1x1x64xf32>
    %214 = vector.shape_cast %213 : vector<1x1x64xf32> to vector<1x64xf32>
    %215 = vector.broadcast %214 : vector<1x64xf32> to vector<8x64xf32>
    %216 = arith.addf %212, %215 : vector<8x64xf32>
    %cst_106 = arith.constant 5.000000e-01 : f32
    %217 = vector.broadcast %cst_106 : f32 to vector<8x64xf32>
    %218 = arith.mulf %217, %216 : vector<8x64xf32>
    %cst_107 = arith.constant 4.471500e-02 : f32
    %219 = vector.broadcast %cst_107 : f32 to vector<8x64xf32>
    %220 = arith.mulf %219, %216 : vector<8x64xf32>
    %221 = arith.mulf %220, %216 : vector<8x64xf32>
    %222 = arith.mulf %221, %216 : vector<8x64xf32>
    %223 = arith.addf %216, %222 : vector<8x64xf32>
    %cst_108 = arith.constant 0.797884583 : f32
    %224 = vector.broadcast %cst_108 : f32 to vector<8x64xf32>
    %225 = arith.mulf %224, %223 : vector<8x64xf32>
    %226 = math.tanh %225 : vector<8x64xf32>
    %cst_109 = arith.constant 1.000000e+00 : f32
    %227 = vector.broadcast %cst_109 : f32 to vector<8x64xf32>
    %228 = arith.addf %227, %226 : vector<8x64xf32>
    %229 = arith.mulf %218, %228 : vector<8x64xf32>
    %c1_110 = arith.constant 1 : index
    %c0_111 = arith.constant 0 : index
    %c0_112 = arith.constant 0 : index
    %230 = vector.load %arg13[%c1_110, %c0_111, %c0_112] : memref<2x64x32xf32, #tpu.memory_space<vmem>>, vector<1x64x32xf32>
    %231 = vector.shape_cast %230 : vector<1x64x32xf32> to vector<64x32xf32>
    %cst_113 = arith.constant dense<0.000000e+00> : vector<8x32xf32>
    %232 = tpu.matmul %229, %231, %cst_113 {dimension_numbers = #tpu.dot_dimension_numbers<[1], [0], [0], [1], [0, 0, 1, 1], [], []>} : vector<8x64xf32>, vector<64x32xf32>, vector<8x32xf32> -> vector<8x32xf32>
    %c1_114 = arith.constant 1 : index
    %c0_115 = arith.constant 0 : index
    %c0_116 = arith.constant 0 : index
    %233 = vector.load %arg14[%c1_114, %c0_115, %c0_116] : memref<2x1x32xf32, #tpu.memory_space<vmem>>, vector<1x1x32xf32>
    %234 = vector.shape_cast %233 : vector<1x1x32xf32> to vector<1x32xf32>
    %235 = vector.broadcast %234 : vector<1x32xf32> to vector<8x32xf32>
    %236 = arith.addf %232, %235 : vector<8x32xf32>
    %237 = arith.addf %236, %209 : vector<8x32xf32>
    %c1_117 = arith.constant 1 : index
    %c0_118 = arith.constant 0 : index
    %c0_119 = arith.constant 0 : index
    %238 = vector.load %arg15[%c1_117, %c0_118, %c0_119] : memref<2x1x32xf32, #tpu.memory_space<vmem>>, vector<1x1x32xf32>
    %239 = vector.shape_cast %238 : vector<1x1x32xf32> to vector<1x32xf32>
    %c1_120 = arith.constant 1 : index
    %c0_121 = arith.constant 0 : index
    %c0_122 = arith.constant 0 : index
    %240 = vector.load %arg16[%c1_120, %c0_121, %c0_122] : memref<2x1x32xf32, #tpu.memory_space<vmem>>, vector<1x1x32xf32>
    %241 = vector.shape_cast %240 : vector<1x1x32xf32> to vector<1x32xf32>
    %cst_123 = arith.constant dense<0.000000e+00> : vector<8xf32>
    %242 = vector.multi_reduction <add>, %237, %cst_123 [1] : vector<8x32xf32> to vector<8xf32>
    %243 = vector.shape_cast %242 : vector<8xf32> to vector<8x1xf32>
    %cst_124 = arith.constant 3.200000e+01 : f32
    %244 = vector.broadcast %cst_124 : f32 to vector<8x1xf32>
    %245 = arith.divf %243, %244 : vector<8x1xf32>
    %246 = vector.broadcast %245 : vector<8x1xf32> to vector<8x32xf32>
    %247 = arith.subf %237, %246 : vector<8x32xf32>
    %248 = arith.mulf %247, %247 : vector<8x32xf32>
    %cst_125 = arith.constant dense<0.000000e+00> : vector<8xf32>
    %249 = vector.multi_reduction <add>, %248, %cst_125 [1] : vector<8x32xf32> to vector<8xf32>
    %250 = vector.shape_cast %249 : vector<8xf32> to vector<8x1xf32>
    %cst_126 = arith.constant 3.200000e+01 : f32
    %251 = vector.broadcast %cst_126 : f32 to vector<8x1xf32>
    %252 = arith.divf %250, %251 : vector<8x1xf32>
    %253 = vector.broadcast %245 : vector<8x1xf32> to vector<8x32xf32>
    %254 = arith.subf %237, %253 : vector<8x32xf32>
    %cst_127 = arith.constant 9.99999996E-13 : f32
    %255 = vector.broadcast %cst_127 : f32 to vector<8x1xf32>
    %256 = arith.addf %252, %255 : vector<8x1xf32>
    %257 = math.rsqrt %256 : vector<8x1xf32>
    %258 = vector.broadcast %257 : vector<8x1xf32> to vector<8x32xf32>
    %259 = arith.mulf %254, %258 : vector<8x32xf32>
    %260 = vector.broadcast %239 : vector<1x32xf32> to vector<8x32xf32>
    %261 = arith.mulf %259, %260 : vector<8x32xf32>
    %262 = vector.broadcast %241 : vector<1x32xf32> to vector<8x32xf32>
    %263 = arith.addf %261, %262 : vector<8x32xf32>
    %264 = vector.extract_strided_slice %263 {offsets = [0, 0], sizes = [1, 32], strides = [1, 1]} : vector<8x32xf32> to vector<1x32xf32>
    %c0_128 = arith.constant 0 : index
    %c0_129 = arith.constant 0 : index
    %265 = vector.load %arg17[%c0_128, %c0_129] : memref<32x32xf32, #tpu.memory_space<vmem>>, vector<32x32xf32>
    %cst_130 = arith.constant dense<0.000000e+00> : vector<1x32xf32>
    %266 = tpu.matmul %264, %265, %cst_130 {dimension_numbers = #tpu.dot_dimension_numbers<[1], [0], [0], [1], [0, 0, 1, 1], [], []>} : vector<1x32xf32>, vector<32x32xf32>, vector<1x32xf32> -> vector<1x32xf32>
    %c0_131 = arith.constant 0 : index
    %c0_132 = arith.constant 0 : index
    %267 = vector.load %arg18[%c0_131, %c0_132] : memref<1x32xf32, #tpu.memory_space<vmem>>, vector<1x32xf32>
    %268 = arith.addf %266, %267 : vector<1x32xf32>
    %269 = math.tanh %268 : vector<1x32xf32>
    %c0_133 = arith.constant 0 : index
    %c0_134 = arith.constant 0 : index
    %270 = vector.load %arg19[%c0_133, %c0_134] : memref<32x128xf32, #tpu.memory_space<vmem>>, vector<32x128xf32>
    %cst_135 = arith.constant dense<0.000000e+00> : vector<1x128xf32>
    %271 = tpu.matmul %269, %270, %cst_135 {dimension_numbers = #tpu.dot_dimension_numbers<[1], [0], [0], [1], [0, 0, 1, 1], [], []>} : vector<1x32xf32>, vector<32x128xf32>, vector<1x128xf32> -> vector<1x128xf32>
    %c0_136 = arith.constant 0 : index
    %c0_137 = arith.constant 0 : index
    %272 = vector.load %arg20[%c0_136, %c0_137] : memref<1x128xf32, #tpu.memory_space<vmem>>, vector<1x128xf32>
    %273 = arith.addf %271, %272 : vector<1x128xf32>
    %c0_138 = arith.constant 0 : index
    %c0_139 = arith.constant 0 : index
    %c0_140 = arith.constant 0 : index
    %274 = vector.load %arg21[%c0_138, %c0_139, %c0_140] : memref<1x1x128xf32, #tpu.memory_space<vmem>>, vector<1x1x128xf32>
    %275 = vector.shape_cast %274 : vector<1x1x128xf32> to vector<1x128xf32>
    %276 = vector.shape_cast %273 : vector<1x128xf32> to vector<1x1x128xf32>
    tpu.vector_store %arg21[%c0_138, %c0_139, %c0_140], %276 {strides = array<i32>} : memref<1x1x128xf32, #tpu.memory_space<vmem>>, vector<1x1x128xf32>,
    return
  }
  func.func @transform_0(%arg0: i32) -> (i32, i32, i32) {
    %c0_i32 = arith.constant 0 : i32
    %c0_i32_0 = arith.constant 0 : i32
    %c0_i32_1 = arith.constant 0 : i32
    return %arg0, %c0_i32, %c0_i32_0 : i32, i32, i32
  }
  func.func @transform_1(%arg0: i32) -> (i32, i32, i32) {
    %c0_i32 = arith.constant 0 : i32
    %c0_i32_0 = arith.constant 0 : i32
    %c0_i32_1 = arith.constant 0 : i32
    return %arg0, %c0_i32, %c0_i32_0 : i32, i32, i32
  }
  func.func @transform_2(%arg0: i32) -> (i32, i32) {
    %c0_i32 = arith.constant 0 : i32
    %c0_i32_0 = arith.constant 0 : i32
    %c0_i32_1 = arith.constant 0 : i32
    return %c0_i32, %c0_i32_0 : i32, i32
  }
  func.func @transform_3(%arg0: i32) -> (i32, i32) {
    %c0_i32 = arith.constant 0 : i32
    %c0_i32_0 = arith.constant 0 : i32
    %c0_i32_1 = arith.constant 0 : i32
    return %c0_i32, %c0_i32_0 : i32, i32
  }
  func.func @transform_4(%arg0: i32) -> (i32, i32, i32) {
    %c0_i32 = arith.constant 0 : i32
    %c0_i32_0 = arith.constant 0 : i32
    %c0_i32_1 = arith.constant 0 : i32
    %c0_i32_2 = arith.constant 0 : i32
    return %c0_i32, %c0_i32_0, %c0_i32_1 : i32, i32, i32
  }
  func.func @transform_5(%arg0: i32) -> (i32, i32, i32) {
    %c0_i32 = arith.constant 0 : i32
    %c0_i32_0 = arith.constant 0 : i32
    %c0_i32_1 = arith.constant 0 : i32
    %c0_i32_2 = arith.constant 0 : i32
    return %c0_i32, %c0_i32_0, %c0_i32_1 : i32, i32, i32
  }
  func.func @transform_6(%arg0: i32) -> (i32, i32, i32) {
    %c0_i32 = arith.constant 0 : i32
    %c0_i32_0 = arith.constant 0 : i32
    %c0_i32_1 = arith.constant 0 : i32
    %c0_i32_2 = arith.constant 0 : i32
    return %c0_i32, %c0_i32_0, %c0_i32_1 : i32, i32, i32
  }
  func.func @transform_7(%arg0: i32) -> (i32, i32, i32) {
    %c0_i32 = arith.constant 0 : i32
    %c0_i32_0 = arith.constant 0 : i32
    %c0_i32_1 = arith.constant 0 : i32
    %c0_i32_2 = arith.constant 0 : i32
    return %c0_i32, %c0_i32_0, %c0_i32_1 : i32, i32, i32
  }
  func.func @transform_8(%arg0: i32) -> (i32, i32, i32) {
    %c0_i32 = arith.constant 0 : i32
    %c0_i32_0 = arith.constant 0 : i32
    %c0_i32_1 = arith.constant 0 : i32
    %c0_i32_2 = arith.constant 0 : i32
    return %c0_i32, %c0_i32_0, %c0_i32_1 : i32, i32, i32
  }
  func.func @transform_9(%arg0: i32) -> (i32, i32, i32) {
    %c0_i32 = arith.constant 0 : i32
    %c0_i32_0 = arith.constant 0 : i32
    %c0_i32_1 = arith.constant 0 : i32
    %c0_i32_2 = arith.constant 0 : i32
    return %c0_i32, %c0_i32_0, %c0_i32_1 : i32, i32, i32
  }
  func.func @transform_10(%arg0: i32) -> (i32, i32, i32) {
    %c0_i32 = arith.constant 0 : i32
    %c0_i32_0 = arith.constant 0 : i32
    %c0_i32_1 = arith.constant 0 : i32
    %c0_i32_2 = arith.constant 0 : i32
    return %c0_i32, %c0_i32_0, %c0_i32_1 : i32, i32, i32
  }
  func.func @transform_11(%arg0: i32) -> (i32, i32, i32) {
    %c0_i32 = arith.constant 0 : i32
    %c0_i32_0 = arith.constant 0 : i32
    %c0_i32_1 = arith.constant 0 : i32
    %c0_i32_2 = arith.constant 0 : i32
    return %c0_i32, %c0_i32_0, %c0_i32_1 : i32, i32, i32
  }
  func.func @transform_12(%arg0: i32) -> (i32, i32, i32) {
    %c0_i32 = arith.constant 0 : i32
    %c0_i32_0 = arith.constant 0 : i32
    %c0_i32_1 = arith.constant 0 : i32
    %c0_i32_2 = arith.constant 0 : i32
    return %c0_i32, %c0_i32_0, %c0_i32_1 : i32, i32, i32
  }
  func.func @transform_13(%arg0: i32) -> (i32, i32, i32) {
    %c0_i32 = arith.constant 0 : i32
    %c0_i32_0 = arith.constant 0 : i32
    %c0_i32_1 = arith.constant 0 : i32
    %c0_i32_2 = arith.constant 0 : i32
    return %c0_i32, %c0_i32_0, %c0_i32_1 : i32, i32, i32
  }
  func.func @transform_14(%arg0: i32) -> (i32, i32, i32) {
    %c0_i32 = arith.constant 0 : i32
    %c0_i32_0 = arith.constant 0 : i32
    %c0_i32_1 = arith.constant 0 : i32
    %c0_i32_2 = arith.constant 0 : i32
    return %c0_i32, %c0_i32_0, %c0_i32_1 : i32, i32, i32
  }
  func.func @transform_15(%arg0: i32) -> (i32, i32, i32) {
    %c0_i32 = arith.constant 0 : i32
    %c0_i32_0 = arith.constant 0 : i32
    %c0_i32_1 = arith.constant 0 : i32
    %c0_i32_2 = arith.constant 0 : i32
    return %c0_i32, %c0_i32_0, %c0_i32_1 : i32, i32, i32
  }
  func.func @transform_16(%arg0: i32) -> (i32, i32) {
    %c0_i32 = arith.constant 0 : i32
    %c0_i32_0 = arith.constant 0 : i32
    %c0_i32_1 = arith.constant 0 : i32
    return %c0_i32, %c0_i32_0 : i32, i32
  }
  func.func @transform_17(%arg0: i32) -> (i32, i32) {
    %c0_i32 = arith.constant 0 : i32
    %c0_i32_0 = arith.constant 0 : i32
    %c0_i32_1 = arith.constant 0 : i32
    return %c0_i32, %c0_i32_0 : i32, i32
  }
  func.func @transform_18(%arg0: i32) -> (i32, i32) {
    %c0_i32 = arith.constant 0 : i32
    %c0_i32_0 = arith.constant 0 : i32
    %c0_i32_1 = arith.constant 0 : i32
    return %c0_i32, %c0_i32_0 : i32, i32
  }
  func.func @transform_19(%arg0: i32) -> (i32, i32) {
    %c0_i32 = arith.constant 0 : i32
    %c0_i32_0 = arith.constant 0 : i32
    %c0_i32_1 = arith.constant 0 : i32
    return %c0_i32, %c0_i32_0 : i32, i32
  }
  func.func @transform_20(%arg0: i32) -> (i32, i32, i32) {
    %c0_i32 = arith.constant 0 : i32
    %c0_i32_0 = arith.constant 0 : i32
    %c0_i32_1 = arith.constant 0 : i32
    return %arg0, %c0_i32, %c0_i32_0 : i32, i32, i32
  }
}

</mosaic_0001>

<llo_original>
// kernel: natureza_classifier_forward.1
$region0: #{natureza_classifier_forward.1}
  #allocation0 [shape = 'u32[]', space=smem, size = 0x4, offset = 0x4, fixed_abs, tag = 'smem constant byte address 0x4 - core index']
  #allocation1 [shape = 'u32[144,128]{1,0:T(1,128)}', space=vmem, size = 0x12000, scoped, tag = 'internal scratch']
  %s0 = inlined_call_operand.vmem [shape: f32[2,8,32], index: 0, kind: input, shape index: {}]
  %s1 = inlined_call_operand.vmem [shape: f32[2,1,8], index: 1, kind: input, shape index: {}]
  %s2 = inlined_call_operand.vmem [shape: f32[1,32], index: 2, kind: input, shape index: {}]
  %s3 = inlined_call_operand.vmem [shape: f32[1,32], index: 3, kind: input, shape index: {}]
  %s4 = inlined_call_operand.vmem [shape: f32[2,32,96], index: 4, kind: input, shape index: {}]
  %s5 = inlined_call_operand.vmem [shape: f32[2,1,96], index: 5, kind: input, shape index: {}]
  %s6 = inlined_call_operand.vmem [shape: f32[2,32,32], index: 6, kind: input, shape index: {}]
  %s7 = inlined_call_operand.vmem [shape: f32[2,1,32], index: 7, kind: input, shape index: {}]
  %s8 = inlined_call_operand.vmem [shape: f32[2,1,32], index: 8, kind: input, shape index: {}]
  %s9 = inlined_call_operand.vmem [shape: f32[2,1,32], index: 9, kind: input, shape index: {}]
  %s10 = inlined_call_operand.vmem [shape: f32[2,32,64], index: 10, kind: input, shape index: {}]
  %s11 = inlined_call_operand.vmem [shape: f32[2,1,64], index: 11, kind: input, shape index: {}]
  %s12 = inlined_call_operand.vmem [shape: f32[2,64,32], index: 12, kind: input, shape index: {}]
  %s13 = inlined_call_operand.vmem [shape: f32[2,1,32], index: 13, kind: input, shape index: {}]
  %s14 = inlined_call_operand.vmem [shape: f32[2,1,32], index: 14, kind: input, shape index: {}]
  %s15 = inlined_call_operand.vmem [shape: f32[2,1,32], index: 15, kind: input, shape index: {}]
  %s16 = inlined_call_operand.vmem [shape: f32[32,32], index: 16, kind: input, shape index: {}]
  %s17 = inlined_call_operand.vmem [shape: f32[1,32], index: 17, kind: input, shape index: {}]
  %s18 = inlined_call_operand.vmem [shape: f32[32,128], index: 18, kind: input, shape index: {}]
  %s19 = inlined_call_operand.vmem [shape: f32[1,128], index: 19, kind: input, shape index: {}]
  %s20 = inlined_call_operand.hbm [shape: f32[2,1,128], index: 20, kind: output, shape index: {}]
  %s21 = sld [smem:[#allocation0]]
  $region113: #{natureza_classifier_forward.1} parent=0
    _
  %s23 = ssub.s32 1, %s21
  %s24 = scalar_select 0, %s23, %s21
  $region1: #{natureza_classifier_forward.1} parent=0
    #allocation2 [shape = 'u8[1024]{0}', space=vmem, size = 0x400, scoped, tag = 'output window, operand 0']
    #allocation3 [shape = 's32[2]{0}', space=sflag, size = 0x8, scoped, tag = 'scoped memory for natureza_classifier_forward.1']
    %25 = vsyncpa [#allocation3], 0
    %s26 = scalar_lea.sflag [#allocation3], 1
    %27 = vsyncpa %s26, 0
    loop: start=0, step=1, limit=4
    $region2: #{natureza_classifier_forward.1} parent=1 // loop_pre_header
      _
    $region3: #{natureza_classifier_forward.1} parent=1 // loop_header
      %s29 = sphi 0, %s33
      %p30 = scmp.ge.s32.totalorder %s29, 4
      %s39 = sphi 0, %s41
      %s42 = sphi 0, %s39
      %s43 = sphi 0, %s42
      %s59 = sphi 0, %s43
      %s65 = sphi 0, %s67
      %s68 = sphi 0, %s65
      %s69 = sphi 0, %s68
      %s85 = sphi 0, %s69
      %s89 = sphi 0, %s89
      %s91 = sphi 0, %s89
      %s92 = sphi 0, %s91
      %s106 = sphi 0, %s92
      %s110 = sphi 0, %s110
      %s112 = sphi 0, %s110
      %s113 = sphi 0, %s112
      %s127 = sphi 0, %s113
      %s131 = sphi 0, %s131
      %s133 = sphi 0, %s131
      %s134 = sphi 0, %s133
      %s148 = sphi 0, %s134
      %s152 = sphi 0, %s152
      %s154 = sphi 0, %s152
      %s155 = sphi 0, %s154
      %s169 = sphi 0, %s155
      %s173 = sphi 0, %s173
      %s175 = sphi 0, %s173
      %s176 = sphi 0, %s175
      %s190 = sphi 0, %s176
      %s194 = sphi 0, %s194
      %s196 = sphi 0, %s194
      %s197 = sphi 0, %s196
      %s211 = sphi 0, %s197
      %s215 = sphi 0, %s215
      %s217 = sphi 0, %s215
      %s218 = sphi 0, %s217
      %s232 = sphi 0, %s218
      %s236 = sphi 0, %s236
      %s238 = sphi 0, %s236
      %s239 = sphi 0, %s238
      %s253 = sphi 0, %s239
      %s257 = sphi 0, %s257
      %s259 = sphi 0, %s257
      %s260 = sphi 0, %s259
      %s274 = sphi 0, %s260
      %s278 = sphi 0, %s278
      %s280 = sphi 0, %s278
      %s281 = sphi 0, %s280
      %s295 = sphi 0, %s281
      %s299 = sphi 0, %s299
      %s301 = sphi 0, %s299
      %s302 = sphi 0, %s301
      %s316 = sphi 0, %s302
      %s320 = sphi 0, %s320
      %s322 = sphi 0, %s320
      %s323 = sphi 0, %s322
      %s337 = sphi 0, %s323
      %s341 = sphi 0, %s341
      %s343 = sphi 0, %s341
      %s344 = sphi 0, %s343
      %s358 = sphi 0, %s344
      %s362 = sphi 0, %s362
      %s364 = sphi 0, %s362
      %s365 = sphi 0, %s364
      %s379 = sphi 0, %s365
      %s383 = sphi 0, %s383
      %s385 = sphi 0, %s383
      %s386 = sphi 0, %s385
      %s400 = sphi 0, %s386
      %s404 = sphi 0, %s404
      %s406 = sphi 0, %s404
      %s407 = sphi 0, %s406
      %s421 = sphi 0, %s407
      %s425 = sphi 0, %s425
      %s427 = sphi 0, %s425
      %s428 = sphi 0, %s427
      %s442 = sphi 0, %s428
      %s446 = sphi 0, %s446
      %s448 = sphi 0, %s446
      %s449 = sphi 0, %s448
      %s463 = sphi 0, %s449
      %s469 = sphi 0, %s471
      %s472 = sphi 0, %s469
      %s473 = sphi 0, %s472
      %s489 = sphi 0, %s473
    $region4: #{natureza_classifier_forward.1} parent=1 // loop_header_branch
      %32 = sbr.rel (%p30) target = $region8
    $region5: #{natureza_classifier_forward.1} parent=1 // loop_body
      %s34 = ssub.s32 %s29, 1
      %s35 = ssub.s32 %s29, 2
      %s36 = sadd.s32 %s29, 1
      %s37 = ssub.s32 %s29, %s36
      %p38 = scmp.eq.s32.totalorder %s37, 0
      %s40 = sadd.s32 %s39, 1
      %s41 = scalar_select %p38, %s39, %s40
      %p44 = pneg %p38
      %p45 = scmp.eq.s32.totalorder %s29, 1
      %p46 = por %p44, %p45
      %p47 = scmp.ne.s32.totalorder %s39, %s42
      %p48 = scmp.eq.s32.totalorder %s29, 0
      %p49 = por %p47, %p48
      %p50 = scmp.ne.s32.totalorder %s39, %s42
      %p51 = scmp.eq.s32.totalorder %s34, 1
      %p52 = por %p50, %p51
      %p53 = scmp.ne.s32.totalorder %s42, %s43
      %p54 = scmp.eq.s32.totalorder %s34, 0
      %p55 = por %p53, %p54
      %p56 = scmp.ne.s32.totalorder %s42, %s43
      %p57 = scmp.eq.s32.totalorder %s35, 1
      %p58 = por %p56, %p57
      %p60 = scmp.ne.s32.totalorder %s43, %s59
      %p61 = scmp.eq.s32.totalorder %s35, 0
      %p62 = por %p60, %p61
      %s63 = ssub.s32 %s29, %s36
      %p64 = scmp.eq.s32.totalorder %s63, 0
      %s66 = sadd.s32 %s65, 1
      %s67 = scalar_select %p64, %s65, %s66
      %p70 = pneg %p64
      %p71 = scmp.eq.s32.totalorder %s29, 1
      %p72 = por %p70, %p71
      %p73 = scmp.ne.s32.totalorder %s65, %s68
      %p74 = scmp.eq.s32.totalorder %s29, 0
      %p75 = por %p73, %p74
      %p76 = scmp.ne.s32.totalorder %s65, %s68
      %p77 = scmp.eq.s32.totalorder %s34, 1
      %p78 = por %p76, %p77
      %p79 = scmp.ne.s32.totalorder %s68, %s69
      %p80 = scmp.eq.s32.totalorder %s34, 0
      %p81 = por %p79, %p80
      %p82 = scmp.ne.s32.totalorder %s68, %s69
      %p83 = scmp.eq.s32.totalorder %s35, 1
      %p84 = por %p82, %p83
      %p86 = scmp.ne.s32.totalorder %s69, %s85
      %p87 = scmp.eq.s32.totalorder %s35, 0
      %p88 = por %p86, %p87
      %s90 = sadd.s32 %s89, 1
      %p93 = scmp.eq.s32.totalorder %s29, 1
      %p94 = scmp.ne.s32.totalorder %s89, %s91
      %p95 = scmp.eq.s32.totalorder %s29, 0
      %p96 = por %p94, %p95
      %p97 = scmp.ne.s32.totalorder %s89, %s91
      %p98 = scmp.eq.s32.totalorder %s34, 1
      %p99 = por %p97, %p98
      %p100 = scmp.ne.s32.totalorder %s91, %s92
      %p101 = scmp.eq.s32.totalorder %s34, 0
      %p102 = por %p100, %p101
      %p103 = scmp.ne.s32.totalorder %s91, %s92
      %p104 = scmp.eq.s32.totalorder %s35, 1
      %p105 = por %p103, %p104
      %p107 = scmp.ne.s32.totalorder %s92, %s106
      %p108 = scmp.eq.s32.totalorder %s35, 0
      %p109 = por %p107, %p108
      %s111 = sadd.s32 %s110, 1
      %p114 = scmp.eq.s32.totalorder %s29, 1
      %p115 = scmp.ne.s32.totalorder %s110, %s112
      %p116 = scmp.eq.s32.totalorder %s29, 0
      %p117 = por %p115, %p116
      %p118 = scmp.ne.s32.totalorder %s110, %s112
      %p119 = scmp.eq.s32.totalorder %s34, 1
      %p120 = por %p118, %p119
      %p121 = scmp.ne.s32.totalorder %s112, %s113
      %p122 = scmp.eq.s32.totalorder %s34, 0
      %p123 = por %p121, %p122
      %p124 = scmp.ne.s32.totalorder %s112, %s113
      %p125 = scmp.eq.s32.totalorder %s35, 1
      %p126 = por %p124, %p125
      %p128 = scmp.ne.s32.totalorder %s113, %s127
      %p129 = scmp.eq.s32.totalorder %s35, 0
      %p130 = por %p128, %p129
      %s132 = sadd.s32 %s131, 1
      %p135 = scmp.eq.s32.totalorder %s29, 1
      %p136 = scmp.ne.s32.totalorder %s131, %s133
      %p137 = scmp.eq.s32.totalorder %s29, 0
      %p138 = por %p136, %p137
      %p139 = scmp.ne.s32.totalorder %s131, %s133
      %p140 = scmp.eq.s32.totalorder %s34, 1
      %p141 = por %p139, %p140
      %p142 = scmp.ne.s32.totalorder %s133, %s134
      %p143 = scmp.eq.s32.totalorder %s34, 0
      %p144 = por %p142, %p143
      %p145 = scmp.ne.s32.totalorder %s133, %s134
      %p146 = scmp.eq.s32.totalorder %s35, 1
      %p147 = por %p145, %p146
      %p149 = scmp.ne.s32.totalorder %s134, %s148
      %p150 = scmp.eq.s32.totalorder %s35, 0
      %p151 = por %p149, %p150
      %s153 = sadd.s32 %s152, 1
      %p156 = scmp.eq.s32.totalorder %s29, 1
      %p157 = scmp.ne.s32.totalorder %s152, %s154
      %p158 = scmp.eq.s32.totalorder %s29, 0
      %p159 = por %p157, %p158
      %p160 = scmp.ne.s32.totalorder %s152, %s154
      %p161 = scmp.eq.s32.totalorder %s34, 1
      %p162 = por %p160, %p161
      %p163 = scmp.ne.s32.totalorder %s154, %s155
      %p164 = scmp.eq.s32.totalorder %s34, 0
      %p165 = por %p163, %p164
      %p166 = scmp.ne.s32.totalorder %s154, %s155
      %p167 = scmp.eq.s32.totalorder %s35, 1
      %p168 = por %p166, %p167
      %p170 = scmp.ne.s32.totalorder %s155, %s169
      %p171 = scmp.eq.s32.totalorder %s35, 0
      %p172 = por %p170, %p171
      %s174 = sadd.s32 %s173, 1
      %p177 = scmp.eq.s32.totalorder %s29, 1
      %p178 = scmp.ne.s32.totalorder %s173, %s175
      %p179 = scmp.eq.s32.totalorder %s29, 0
      %p180 = por %p178, %p179
      %p181 = scmp.ne.s32.totalorder %s173, %s175
      %p182 = scmp.eq.s32.totalorder %s34, 1
      %p183 = por %p181, %p182
      %p184 = scmp.ne.s32.totalorder %s175, %s176
      %p185 = scmp.eq.s32.totalorder %s34, 0
      %p186 = por %p184, %p185
      %p187 = scmp.ne.s32.totalorder %s175, %s176
      %p188 = scmp.eq.s32.totalorder %s35, 1
      %p189 = por %p187, %p188
      %p191 = scmp.ne.s32.totalorder %s176, %s190
      %p192 = scmp.eq.s32.totalorder %s35, 0
      %p193 = por %p191, %p192
      %s195 = sadd.s32 %s194, 1
      %p198 = scmp.eq.s32.totalorder %s29, 1
      %p199 = scmp.ne.s32.totalorder %s194, %s196
      %p200 = scmp.eq.s32.totalorder %s29, 0
      %p201 = por %p199, %p200
      %p202 = scmp.ne.s32.totalorder %s194, %s196
      %p203 = scmp.eq.s32.totalorder %s34, 1
      %p204 = por %p202, %p203
      %p205 = scmp.ne.s32.totalorder %s196, %s197
      %p206 = scmp.eq.s32.totalorder %s34, 0
      %p207 = por %p205, %p206
      %p208 = scmp.ne.s32.totalorder %s196, %s197
      %p209 = scmp.eq.s32.totalorder %s35, 1
      %p210 = por %p208, %p209
      %p212 = scmp.ne.s32.totalorder %s197, %s211
      %p213 = scmp.eq.s32.totalorder %s35, 0
      %p214 = por %p212, %p213
      %s216 = sadd.s32 %s215, 1
      %p219 = scmp.eq.s32.totalorder %s29, 1
      %p220 = scmp.ne.s32.totalorder %s215, %s217
      %p221 = scmp.eq.s32.totalorder %s29, 0
      %p222 = por %p220, %p221
      %p223 = scmp.ne.s32.totalorder %s215, %s217
      %p224 = scmp.eq.s32.totalorder %s34, 1
      %p225 = por %p223, %p224
      %p226 = scmp.ne.s32.totalorder %s217, %s218
      %p227 = scmp.eq.s32.totalorder %s34, 0
      %p228 = por %p226, %p227
      %p229 = scmp.ne.s32.totalorder %s217, %s218
      %p230 = scmp.eq.s32.totalorder %s35, 1
      %p231 = por %p229, %p230
      %p233 = scmp.ne.s32.totalorder %s218, %s232
      %p234 = scmp.eq.s32.totalorder %s35, 0
      %p235 = por %p233, %p234
      %s237 = sadd.s32 %s236, 1
      %p240 = scmp.eq.s32.totalorder %s29, 1
      %p241 = scmp.ne.s32.totalorder %s236, %s238
      %p242 = scmp.eq.s32.totalorder %s29, 0
      %p243 = por %p241, %p242
      %p244 = scmp.ne.s32.totalorder %s236, %s238
      %p245 = scmp.eq.s32.totalorder %s34, 1
      %p246 = por %p244, %p245
      %p247 = scmp.ne.s32.totalorder %s238, %s239
      %p248 = scmp.eq.s32.totalorder %s34, 0
      %p249 = por %p247, %p248
      %p250 = scmp.ne.s32.totalorder %s238, %s239
      %p251 = scmp.eq.s32.totalorder %s35, 1
      %p252 = por %p250, %p251
      %p254 = scmp.ne.s32.totalorder %s239, %s253
      %p255 = scmp.eq.s32.totalorder %s35, 0
      %p256 = por %p254, %p255
      %s258 = sadd.s32 %s257, 1
      %p261 = scmp.eq.s32.totalorder %s29, 1
      %p262 = scmp.ne.s32.totalorder %s257, %s259
      %p263 = scmp.eq.s32.totalorder %s29, 0
      %p264 = por %p262, %p263
      %p265 = scmp.ne.s32.totalorder %s257, %s259
      %p266 = scmp.eq.s32.totalorder %s34, 1
      %p267 = por %p265, %p266
      %p268 = scmp.ne.s32.totalorder %s259, %s260
      %p269 = scmp.eq.s32.totalorder %s34, 0
      %p270 = por %p268, %p269
      %p271 = scmp.ne.s32.totalorder %s259, %s260
      %p272 = scmp.eq.s32.totalorder %s35, 1
      %p273 = por %p271, %p272
      %p275 = scmp.ne.s32.totalorder %s260, %s274
      %p276 = scmp.eq.s32.totalorder %s35, 0
      %p277 = por %p275, %p276
      %s279 = sadd.s32 %s278, 1
      %p282 = scmp.eq.s32.totalorder %s29, 1
      %p283 = scmp.ne.s32.totalorder %s278, %s280
      %p284 = scmp.eq.s32.totalorder %s29, 0
      %p285 = por %p283, %p284
      %p286 = scmp.ne.s32.totalorder %s278, %s280
      %p287 = scmp.eq.s32.totalorder %s34, 1
      %p288 = por %p286, %p287
      %p289 = scmp.ne.s32.totalorder %s280, %s281
      %p290 = scmp.eq.s32.totalorder %s34, 0
      %p291 = por %p289, %p290
      %p292 = scmp.ne.s32.totalorder %s280, %s281
      %p293 = scmp.eq.s32.totalorder %s35, 1
      %p294 = por %p292, %p293
      %p296 = scmp.ne.s32.totalorder %s281, %s295
      %p297 = scmp.eq.s32.totalorder %s35, 0
      %p298 = por %p296, %p297
      %s300 = sadd.s32 %s299, 1
      %p303 = scmp.eq.s32.totalorder %s29, 1
      %p304 = scmp.ne.s32.totalorder %s299, %s301
      %p305 = scmp.eq.s32.totalorder %s29, 0
      %p306 = por %p304, %p305
      %p307 = scmp.ne.s32.totalorder %s299, %s301
      %p308 = scmp.eq.s32.totalorder %s34, 1
      %p309 = por %p307, %p308
      %p310 = scmp.ne.s32.totalorder %s301, %s302
      %p311 = scmp.eq.s32.totalorder %s34, 0
      %p312 = por %p310, %p311
      %p313 = scmp.ne.s32.totalorder %s301, %s302
      %p314 = scmp.eq.s32.totalorder %s35, 1
      %p315 = por %p313, %p314
      %p317 = scmp.ne.s32.totalorder %s302, %s316
      %p318 = scmp.eq.s32.totalorder %s35, 0
      %p319 = por %p317, %p318
      %s321 = sadd.s32 %s320, 1
      %p324 = scmp.eq.s32.totalorder %s29, 1
      %p325 = scmp.ne.s32.totalorder %s320, %s322
      %p326 = scmp.eq.s32.totalorder %s29, 0
      %p327 = por %p325, %p326
      %p328 = scmp.ne.s32.totalorder %s320, %s322
      %p329 = scmp.eq.s32.totalorder %s34, 1
      %p330 = por %p328, %p329
      %p331 = scmp.ne.s32.totalorder %s322, %s323
      %p332 = scmp.eq.s32.totalorder %s34, 0
      %p333 = por %p331, %p332
      %p334 = scmp.ne.s32.totalorder %s322, %s323
      %p335 = scmp.eq.s32.totalorder %s35, 1
      %p336 = por %p334, %p335
      %p338 = scmp.ne.s32.totalorder %s323, %s337
      %p339 = scmp.eq.s32.totalorder %s35, 0
      %p340 = por %p338, %p339
      %s342 = sadd.s32 %s341, 1
      %p345 = scmp.eq.s32.totalorder %s29, 1
      %p346 = scmp.ne.s32.totalorder %s341, %s343
      %p347 = scmp.eq.s32.totalorder %s29, 0
      %p348 = por %p346, %p347
      %p349 = scmp.ne.s32.totalorder %s341, %s343
      %p350 = scmp.eq.s32.totalorder %s34, 1
      %p351 = por %p349, %p350
      %p352 = scmp.ne.s32.totalorder %s343, %s344
      %p353 = scmp.eq.s32.totalorder %s34, 0
      %p354 = por %p352, %p353
      %p355 = scmp.ne.s32.totalorder %s343, %s344
      %p356 = scmp.eq.s32.totalorder %s35, 1
      %p357 = por %p355, %p356
      %p359 = scmp.ne.s32.totalorder %s344, %s358
      %p360 = scmp.eq.s32.totalorder %s35, 0
      %p361 = por %p359, %p360
      %s363 = sadd.s32 %s362, 1
      %p366 = scmp.eq.s32.totalorder %s29, 1
      %p367 = scmp.ne.s32.totalorder %s362, %s364
      %p368 = scmp.eq.s32.totalorder %s29, 0
      %p369 = por %p367, %p368
      %p370 = scmp.ne.s32.totalorder %s362, %s364
      %p371 = scmp.eq.s32.totalorder %s34, 1
      %p372 = por %p370, %p371
      %p373 = scmp.ne.s32.totalorder %s364, %s365
      %p374 = scmp.eq.s32.totalorder %s34, 0
      %p375 = por %p373, %p374
      %p376 = scmp.ne.s32.totalorder %s364, %s365
      %p377 = scmp.eq.s32.totalorder %s35, 1
      %p378 = por %p376, %p377
      %p380 = scmp.ne.s32.totalorder %s365, %s379
      %p381 = scmp.eq.s32.totalorder %s35, 0
      %p382 = por %p380, %p381
      %s384 = sadd.s32 %s383, 1
      %p387 = scmp.eq.s32.totalorder %s29, 1
      %p388 = scmp.ne.s32.totalorder %s383, %s385
      %p389 = scmp.eq.s32.totalorder %s29, 0
      %p390 = por %p388, %p389
      %p391 = scmp.ne.s32.totalorder %s383, %s385
      %p392 = scmp.eq.s32.totalorder %s34, 1
      %p393 = por %p391, %p392
      %p394 = scmp.ne.s32.totalorder %s385, %s386
      %p395 = scmp.eq.s32.totalorder %s34, 0
      %p396 = por %p394, %p395
      %p397 = scmp.ne.s32.totalorder %s385, %s386
      %p398 = scmp.eq.s32.totalorder %s35, 1
      %p399 = por %p397, %p398
      %p401 = scmp.ne.s32.totalorder %s386, %s400
      %p402 = scmp.eq.s32.totalorder %s35, 0
      %p403 = por %p401, %p402
      %s405 = sadd.s32 %s404, 1
      %p408 = scmp.eq.s32.totalorder %s29, 1
      %p409 = scmp.ne.s32.totalorder %s404, %s406
      %p410 = scmp.eq.s32.totalorder %s29, 0
      %p411 = por %p409, %p410
      %p412 = scmp.ne.s32.totalorder %s404, %s406
      %p413 = scmp.eq.s32.totalorder %s34, 1
      %p414 = por %p412, %p413
      %p415 = scmp.ne.s32.totalorder %s406, %s407
      %p416 = scmp.eq.s32.totalorder %s34, 0
      %p417 = por %p415, %p416
      %p418 = scmp.ne.s32.totalorder %s406, %s407
      %p419 = scmp.eq.s32.totalorder %s35, 1
      %p420 = por %p418, %p419
      %p422 = scmp.ne.s32.totalorder %s407, %s421
      %p423 = scmp.eq.s32.totalorder %s35, 0
      %p424 = por %p422, %p423
      %s426 = sadd.s32 %s425, 1
      %p429 = scmp.eq.s32.totalorder %s29, 1
      %p430 = scmp.ne.s32.totalorder %s425, %s427
      %p431 = scmp.eq.s32.totalorder %s29, 0
      %p432 = por %p430, %p431
      %p433 = scmp.ne.s32.totalorder %s425, %s427
      %p434 = scmp.eq.s32.totalorder %s34, 1
      %p435 = por %p433, %p434
      %p436 = scmp.ne.s32.totalorder %s427, %s428
      %p437 = scmp.eq.s32.totalorder %s34, 0
      %p438 = por %p436, %p437
      %p439 = scmp.ne.s32.totalorder %s427, %s428
      %p440 = scmp.eq.s32.totalorder %s35, 1
      %p441 = por %p439, %p440
      %p443 = scmp.ne.s32.totalorder %s428, %s442
      %p444 = scmp.eq.s32.totalorder %s35, 0
      %p445 = por %p443, %p444
      %s447 = sadd.s32 %s446, 1
      %p450 = scmp.eq.s32.totalorder %s29, 1
      %p451 = scmp.ne.s32.totalorder %s446, %s448
      %p452 = scmp.eq.s32.totalorder %s29, 0
      %p453 = por %p451, %p452
      %p454 = scmp.ne.s32.totalorder %s446, %s448
      %p455 = scmp.eq.s32.totalorder %s34, 1
      %p456 = por %p454, %p455
      %p457 = scmp.ne.s32.totalorder %s448, %s449
      %p458 = scmp.eq.s32.totalorder %s34, 0
      %p459 = por %p457, %p458
      %p460 = scmp.ne.s32.totalorder %s448, %s449
      %p461 = scmp.eq.s32.totalorder %s35, 1
      %p462 = por %p460, %p461
      %p464 = scmp.ne.s32.totalorder %s449, %s463
      %p465 = scmp.eq.s32.totalorder %s35, 0
      %p466 = por %p464, %p465
      %s467 = ssub.s32 %s29, %s36
      %p468 = scmp.eq.s32.totalorder %s467, 0
      %s470 = sadd.s32 %s469, 1
      %s471 = scalar_select %p468, %s469, %s470
      %p474 = pneg %p468
      %p475 = scmp.eq.s32.totalorder %s29, 1
      %p476 = por %p474, %p475
      %p477 = scmp.ne.s32.totalorder %s469, %s472
      %p478 = scmp.eq.s32.totalorder %s29, 0
      %p479 = por %p477, %p478
      %p480 = scmp.ne.s32.totalorder %s469, %s472
      %p481 = scmp.eq.s32.totalorder %s34, 1
      %p482 = por %p480, %p481
      %p483 = scmp.ne.s32.totalorder %s472, %s473
      %p484 = scmp.eq.s32.totalorder %s34, 0
      %p485 = por %p483, %p484
      %p486 = scmp.ne.s32.totalorder %s472, %s473
      %p487 = scmp.eq.s32.totalorder %s35, 1
      %p488 = por %p486, %p487
      %p490 = scmp.ne.s32.totalorder %s473, %s489
      %p491 = scmp.eq.s32.totalorder %s35, 0
      %p492 = por %p490, %p491
      %p493 = scmp.le.s32.totalorder 1, %s29
      %p494 = scmp.lt.s32.totalorder %s29, 3
      %p495 = pnand %p493, %p494
      %p496 = pneg %p495
      // Predicated region
      $region9: #{natureza_classifier_forward.1} parent=5 // pred_check
        _
      $region10: #{natureza_classifier_forward.1} parent=5 // pred_check_branch
        %498 = sbr.rel (%p495) target = $region12
      $region11: #{natureza_classifier_forward.1} parent=5 // pred_region
        %s499 = ssub.s32 %s29, 1
        // Predicated region
        $region13: #{natureza_classifier_forward.1} parent=11 // pred_check
          %p500 = pneg %p102
        $region14: #{natureza_classifier_forward.1} parent=11 // pred_check_branch
          %502 = sbr.rel (%p500) target = $region16
        $region15: #{natureza_classifier_forward.1} parent=11 // pred_region
          _
        $region16: #{natureza_classifier_forward.1} parent=11 // pred_fallthru
          _
        // Predicated region
        $region17: #{natureza_classifier_forward.1} parent=11 // pred_check
          %p503 = pneg %p123
        $region18: #{natureza_classifier_forward.1} parent=11 // pred_check_branch
          %505 = sbr.rel (%p503) target = $region20
        $region19: #{natureza_classifier_forward.1} parent=11 // pred_region
          _
        $region20: #{natureza_classifier_forward.1} parent=11 // pred_fallthru
          _
        // Predicated region
        $region21: #{natureza_classifier_forward.1} parent=11 // pred_check
          %p506 = pneg %p144
        $region22: #{natureza_classifier_forward.1} parent=11 // pred_check_branch
          %508 = sbr.rel (%p506) target = $region24
        $region23: #{natureza_classifier_forward.1} parent=11 // pred_region
          _
        $region24: #{natureza_classifier_forward.1} parent=11 // pred_fallthru
          _
        // Predicated region
        $region25: #{natureza_classifier_forward.1} parent=11 // pred_check
          %p509 = pneg %p165
        $region26: #{natureza_classifier_forward.1} parent=11 // pred_check_branch
          %511 = sbr.rel (%p509) target = $region28
        $region27: #{natureza_classifier_forward.1} parent=11 // pred_region
          _
        $region28: #{natureza_classifier_forward.1} parent=11 // pred_fallthru
          _
        // Predicated region
        $region29: #{natureza_classifier_forward.1} parent=11 // pred_check
          %p512 = pneg %p186
        $region30: #{natureza_classifier_forward.1} parent=11 // pred_check_branch
          %514 = sbr.rel (%p512) target = $region32
        $region31: #{natureza_classifier_forward.1} parent=11 // pred_region
          _
        $region32: #{natureza_classifier_forward.1} parent=11 // pred_fallthru
          _
        // Predicated region
        $region33: #{natureza_classifier_forward.1} parent=11 // pred_check
          %p515 = pneg %p207
        $region34: #{natureza_classifier_forward.1} parent=11 // pred_check_branch
          %517 = sbr.rel (%p515) target = $region36
        $region35: #{natureza_classifier_forward.1} parent=11 // pred_region
          _
        $region36: #{natureza_classifier_forward.1} parent=11 // pred_fallthru
          _
        // Predicated region
        $region37: #{natureza_classifier_forward.1} parent=11 // pred_check
          %p518 = pneg %p228
        $region38: #{natureza_classifier_forward.1} parent=11 // pred_check_branch
          %520 = sbr.rel (%p518) target = $region40
        $region39: #{natureza_classifier_forward.1} parent=11 // pred_region
          _
        $region40: #{natureza_classifier_forward.1} parent=11 // pred_fallthru
          _
        // Predicated region
        $region41: #{natureza_classifier_forward.1} parent=11 // pred_check
          %p521 = pneg %p249
        $region42: #{natureza_classifier_forward.1} parent=11 // pred_check_branch
          %523 = sbr.rel (%p521) target = $region44
        $region43: #{natureza_classifier_forward.1} parent=11 // pred_region
          _
        $region44: #{natureza_classifier_forward.1} parent=11 // pred_fallthru
          _
        // Predicated region
        $region45: #{natureza_classifier_forward.1} parent=11 // pred_check
          %p524 = pneg %p270
        $region46: #{natureza_classifier_forward.1} parent=11 // pred_check_branch
          %526 = sbr.rel (%p524) target = $region48
        $region47: #{natureza_classifier_forward.1} parent=11 // pred_region
          _
        $region48: #{natureza_classifier_forward.1} parent=11 // pred_fallthru
          _
        // Predicated region
        $region49: #{natureza_classifier_forward.1} parent=11 // pred_check
          %p527 = pneg %p291
        $region50: #{natureza_classifier_forward.1} parent=11 // pred_check_branch
          %529 = sbr.rel (%p527) target = $region52
        $region51: #{natureza_classifier_forward.1} parent=11 // pred_region
          _
        $region52: #{natureza_classifier_forward.1} parent=11 // pred_fallthru
          _
        // Predicated region
        $region53: #{natureza_classifier_forward.1} parent=11 // pred_check
          %p530 = pneg %p312
        $region54: #{natureza_classifier_forward.1} parent=11 // pred_check_branch
          %532 = sbr.rel (%p530) target = $region56
        $region55: #{natureza_classifier_forward.1} parent=11 // pred_region
          _
        $region56: #{natureza_classifier_forward.1} parent=11 // pred_fallthru
          _
        // Predicated region
        $region57: #{natureza_classifier_forward.1} parent=11 // pred_check
          %p533 = pneg %p333
        $region58: #{natureza_classifier_forward.1} parent=11 // pred_check_branch
          %535 = sbr.rel (%p533) target = $region60
        $region59: #{natureza_classifier_forward.1} parent=11 // pred_region
          _
        $region60: #{natureza_classifier_forward.1} parent=11 // pred_fallthru
          _
        // Predicated region
        $region61: #{natureza_classifier_forward.1} parent=11 // pred_check
          %p536 = pneg %p354
        $region62: #{natureza_classifier_forward.1} parent=11 // pred_check_branch
          %538 = sbr.rel (%p536) target = $region64
        $region63: #{natureza_classifier_forward.1} parent=11 // pred_region
          _
        $region64: #{natureza_classifier_forward.1} parent=11 // pred_fallthru
          _
        // Predicated region
        $region65: #{natureza_classifier_forward.1} parent=11 // pred_check
          %p539 = pneg %p375
        $region66: #{natureza_classifier_forward.1} parent=11 // pred_check_branch
          %541 = sbr.rel (%p539) target = $region68
        $region67: #{natureza_classifier_forward.1} parent=11 // pred_region
          _
        $region68: #{natureza_classifier_forward.1} parent=11 // pred_fallthru
          _
        // Predicated region
        $region69: #{natureza_classifier_forward.1} parent=11 // pred_check
          %p542 = pneg %p396
        $region70: #{natureza_classifier_forward.1} parent=11 // pred_check_branch
          %544 = sbr.rel (%p542) target = $region72
        $region71: #{natureza_classifier_forward.1} parent=11 // pred_region
          _
        $region72: #{natureza_classifier_forward.1} parent=11 // pred_fallthru
          _
        // Predicated region
        $region73: #{natureza_classifier_forward.1} parent=11 // pred_check
          %p545 = pneg %p417
        $region74: #{natureza_classifier_forward.1} parent=11 // pred_check_branch
          %547 = sbr.rel (%p545) target = $region76
        $region75: #{natureza_classifier_forward.1} parent=11 // pred_region
          _
        $region76: #{natureza_classifier_forward.1} parent=11 // pred_fallthru
          _
        // Predicated region
        $region77: #{natureza_classifier_forward.1} parent=11 // pred_check
          %p548 = pneg %p438
        $region78: #{natureza_classifier_forward.1} parent=11 // pred_check_branch
          %550 = sbr.rel (%p548) target = $region80
        $region79: #{natureza_classifier_forward.1} parent=11 // pred_region
          _
        $region80: #{natureza_classifier_forward.1} parent=11 // pred_fallthru
          _
        // Predicated region
        $region81: #{natureza_classifier_forward.1} parent=11 // pred_check
          %p551 = pneg %p459
        $region82: #{natureza_classifier_forward.1} parent=11 // pred_check_branch
          %553 = sbr.rel (%p551) target = $region84
        $region83: #{natureza_classifier_forward.1} parent=11 // pred_region
          _
        $region84: #{natureza_classifier_forward.1} parent=11 // pred_fallthru
          _
      $region12: #{natureza_classifier_forward.1} parent=5 // pred_fallthru
        _
      %p554 = scmp.lt.s32.totalorder %s29, 2
      // Predicated region
      $region85: #{natureza_classifier_forward.1} parent=5 // pred_check
        %p555 = pneg %p554
      $region86: #{natureza_classifier_forward.1} parent=5 // pred_check_branch
        %557 = sbr.rel (%p555) target = $region88
      $region87: #{natureza_classifier_forward.1} parent=5 // pred_region
        // Predicated region
        $region89: #{natureza_classifier_forward.1} parent=87 // pred_check
          %p558 = pneg %p49
        $region90: #{natureza_classifier_forward.1} parent=87 // pred_check_branch
          %560 = sbr.rel (%p558) target = $region92
        $region91: #{natureza_classifier_forward.1} parent=87 // pred_region
          %p561 = scmp.lt.s32.totalorder %s29, 1
          %s562 = scalar_select %p561, %s29, 1
          %s563 = smul.addr %s562, 8
          %s564 = scalar_lea.vmem %s0, %s563
        $region92: #{natureza_classifier_forward.1} parent=87 // pred_fallthru
          _
        // Predicated region
        $region93: #{natureza_classifier_forward.1} parent=87 // pred_check
          %p565 = pneg %p75
        $region94: #{natureza_classifier_forward.1} parent=87 // pred_check_branch
          %567 = sbr.rel (%p565) target = $region96
        $region95: #{natureza_classifier_forward.1} parent=87 // pred_region
          %p568 = scmp.lt.s32.totalorder %s29, 1
          %s569 = scalar_select %p568, %s29, 1
          %s570 = scalar_lea.vmem %s1, %s569
        $region96: #{natureza_classifier_forward.1} parent=87 // pred_fallthru
          _
      $region88: #{natureza_classifier_forward.1} parent=5 // pred_fallthru
        _
      %p571 = scmp.le.s32.totalorder 1, %s29
      %p572 = scmp.lt.s32.totalorder %s29, 3
      %p573 = pnand %p571, %p572
      %p574 = pneg %p573
      // Predicated region
      $region97: #{natureza_classifier_forward.1} parent=5 // pred_check
        _
      $region98: #{natureza_classifier_forward.1} parent=5 // pred_check_branch
        %576 = sbr.rel (%p573) target = $region100
      $region99: #{natureza_classifier_forward.1} parent=5 // pred_region
        %s577 = ssub.s32 %s29, 1
        %p578 = scmp.lt.s32.totalorder %s34, 1
        %s579 = scalar_select %p578, %s34, 1
        %s580 = smul.addr %s579, 8
        %s581 = scalar_lea.vmem %s0, %s580
        %p582 = pneg %p55
        %p583 = pneg %p52
        %p584 = scmp.lt.s32.totalorder %s34, 1
        %s585 = scalar_select %p584, %s34, 1
        %s586 = scalar_lea.vmem %s1, %s585
        %p587 = pneg %p81
        %p588 = pneg %p78
        %p589 = pneg %p102
        %p590 = pneg %p99
        %p591 = pneg %p123
        %p592 = pneg %p120
        %p593 = pneg %p144
        %p594 = pneg %p141
        %p595 = pneg %p165
        %p596 = pneg %p162
        %p597 = pneg %p186
        %p598 = pneg %p183
        %p599 = pneg %p207
        %p600 = pneg %p204
        %p601 = pneg %p228
        %p602 = pneg %p225
        %p603 = pneg %p249
        %p604 = pneg %p246
        %p605 = pneg %p270
        %p606 = pneg %p267
        %p607 = pneg %p291
        %p608 = pneg %p288
        %p609 = pneg %p312
        %p610 = pneg %p309
        %p611 = pneg %p333
        %p612 = pneg %p330
        %p613 = pneg %p354
        %p614 = pneg %p351
        %p615 = pneg %p375
        %p616 = pneg %p372
        %p617 = pneg %p396
        %p618 = pneg %p393
        %p619 = pneg %p417
        %p620 = pneg %p414
        %p621 = pneg %p438
        %p622 = pneg %p435
        %p623 = pneg %p459
        %p624 = pneg %p456
        %p625 = pneg %p485
        %p626 = pneg %p482
        %s627 = sand.u32 %s472, 1
        %s628 = scalar_lea.sflag [#allocation3], %s627
        %s629 = sand.u32 %s472, 1
        %s630 = scalar_lea.vmem [#allocation2], %s629
        %p631 = scmp.lt.s32.totalorder %s34, 1
        %s632 = scalar_select %p631, %s34, 1
        %s633 = smul.addr %s632, 8
        %s634 = scalar_lea.vmem %s0, %s633
        %p635 = scmp.lt.s32.totalorder %s34, 1
        %s636 = scalar_select %p635, %s34, 1
        %s637 = scalar_lea.vmem %s1, %s636
        %v638 = vld [vmem:[%s634] sm:$0xff]
        %v639 = vld [vmem:[%s2] sm:$0x1]
        %v640 = vld [vmem:[%s3] sm:$0x1]
        %vm641 = vcmask 261120
        %v642 = vsel %vm641, %v638, 0.0
        %643 = vadd.xlane.f32.xlu0 %v642
        %v644 = vpop.xlane.xlu0 %643
        %v645 = vrcp.pop 32.0
        %v646 = vmul.f32 %v644, %v645
        %v647 = vsub.f32 %v638, %v646
        %v648 = vmul.f32 %v647, %v647
        %v649 = vsel %vm641, %v648, 0.0
        %650 = vadd.xlane.f32.xlu0 %v649
        %v651 = vpop.xlane.xlu0 %650
        %v652 = vmul.f32 %v651, %v645
        %v653 = vadd.f32 %v652, 1e-12
        %v654 = vrsqrt.pop %v653
        %v655 = vmul.f32 %v647, %v654
        %v657 = vlaneseq
        %v658 = vshrl.u32 %v657, 7
        %v659 = vsub.s32 0, %v658
        %v660 = vrot.slane %v639, %v659
        %v662 = vmul.f32 %v655, %v660
        %v664 = vlaneseq
        %v665 = vshrl.u32 %v664, 7
        %v666 = vsub.s32 0, %v665
        %v667 = vrot.slane %v640, %v666
        %v669 = vadd.f32 %v662, %v667
        %v670 = vld [vmem:[%s637] sm:$0x1]
        %v671 = vld [vmem:[%s4] sm:$0xff]
        %v672 = vld [vmem:[%s4 + $0x8] sm:$0xff]
        %v673 = vld [vmem:[%s4 + $0x10] sm:$0xff]
        %v674 = vld [vmem:[%s4 + $0x18] sm:$0xff]
        %v675 = vld [vmem:[%s5] sm:$0x1]
        %v677 = vlaneseq
        %v678 = vshrl.u32 %v677, 7
        %v679 = vsub.s32 0, %v678
        %v680 = vrot.slane %v675, %v679
        %v683 = vsel %vm641, %v669, 0
        %685 = vmatprep.subr.mxu0 0.0
        %686 = vmatpush1.msra.mxu0 0.0
        %687 = vmatprep.subr.mxu0 0.0
        %688 = vmatpush1.msra.mxu0 0.0
        %689 = vmatprep.subr.mxu0 0.0
        %690 = vmatpush1.msra.mxu0 0.0
        %691 = vmatprep.subr.mxu0 0.0
        %692 = vmatpush1.msra.mxu0 0.0
        %693 = vmatprep.subr.mxu0 0.0
        %694 = vmatpush1.msra.mxu0 0.0
        %695 = vmatprep.subr.mxu0 0.0
        %696 = vmatpush1.msra.mxu0 0.0
        %697 = vmatprep.subr.mxu0 0.0
        %698 = vmatpush1.msra.mxu0 0.0
        %699 = vmatprep.subr.mxu0 0.0
        %700 = vmatpush1.msra.mxu0 0.0
        %701 = vmatprep.subr.mxu0 0.0
        %702 = vmatpush1.msra.mxu0 0.0
        %703 = vmatprep.subr.mxu0 0.0
        %704 = vmatpush1.msra.mxu0 0.0
        %705 = vmatprep.subr.mxu0 0.0
        %706 = vmatpush1.msra.mxu0 0.0
        %707 = vmatprep.subr.mxu0 0.0
        %708 = vmatpush1.msra.mxu0 0.0
        %709 = vmatprep.subr.mxu0 0.0
        %710 = vmatpush1.msra.mxu0 %v674
        %711 = vmatprep.subr.mxu0 0.0
        %712 = vmatpush1.msra.mxu0 %v673
        %713 = vmatprep.subr.mxu0 0.0
        %714 = vmatpush1.msra.mxu0 %v672
        %715 = vmatprep.subr.mxu0 0.0
        %716 = vmatpush1.msra.mxu0 %v671
        %717 = vmatprep.subr.mxu0 0.0
        %718 = vmatpush2.msra.mxu0 0.0
        %719 = vmatprep.subr.mxu0 0.0
        %720 = vmatpush2.msra.mxu0 0.0
        %721 = vmatprep.subr.mxu0 0.0
        %722 = vmatpush2.msra.mxu0 0.0
        %723 = vmatprep.subr.mxu0 0.0
        %724 = vmatpush2.msra.mxu0 0.0
        %725 = vmatprep.subr.mxu0 0.0
        %726 = vmatpush2.msra.mxu0 0.0
        %727 = vmatprep.subr.mxu0 0.0
        %728 = vmatpush2.msra.mxu0 0.0
        %729 = vmatprep.subr.mxu0 0.0
        %730 = vmatpush2.msra.mxu0 0.0
        %731 = vmatprep.subr.mxu0 0.0
        %732 = vmatpush2.msra.mxu0 0.0
        %733 = vmatprep.subr.mxu0 0.0
        %734 = vmatpush2.msra.mxu0 0.0
        %735 = vmatprep.subr.mxu0 0.0
        %736 = vmatpush2.msra.mxu0 0.0
        %737 = vmatprep.subr.mxu0 0.0
        %738 = vmatpush2.msra.mxu0 0.0
        %739 = vmatprep.subr.mxu0 0.0
        %740 = vmatpush2.msra.mxu0 0.0
        %741 = vmatprep.subr.mxu0 0.0
        %742 = vmatpush2.msra.mxu0 0.0
        %743 = vmatprep.subr.mxu0 0.0
        %744 = vmatpush2.msra.mxu0 0.0
        %745 = vmatprep.subr.mxu0 0.0
        %746 = vmatpush2.msra.mxu0 0.0
        %747 = vmatprep.subr.mxu0 0.0
        %748 = vmatpush2.msra.mxu0 0.0
        %749 = vmatprep.mubr.f32.mxu0 0.0
        %750 = vmatmul.mubr.f32.gmra.mxu0 %v683
        %v751 = vpop.f32.mrf.mxu0
        %v752 = vadd.f32 %v680, %v751
        %v753 = vpop.f32.mrf.mxu0
        %754 = vdwg.mxu0
        %756 = vrot.lane.b32.xlu0 %v752, 120
        %v757 = vpop.permute.xlu0 %756
        %758 = vrot.lane.b32.xlu0 %v752, 112
        %v759 = vpop.permute.xlu0 %758
        %760 = vrot.lane.b32.xlu0 %v752, 104
        %v761 = vpop.permute.xlu0 %760
        %v763 = vlaneseq
        %v764 = vshrl.u32 %v763, 7
        %v765 = vsub.s32 0, %v764
        %v766 = vrot.slane %v670, %v765
        %768 = vrot.lane.b32.xlu0 %v752, 96
        %v769 = vpop.permute.xlu0 %768
        %770 = vrot.lane.b32.xlu0 %v757, 96
        %v771 = vpop.permute.xlu0 %770
        %772 = vrot.lane.b32.xlu0 %v759, 96
        %v773 = vpop.permute.xlu0 %772
        %774 = vrot.lane.b32.xlu0 %v761, 96
        %v775 = vpop.permute.xlu0 %774
        %780 = vxpose.xlu0.b32.start [1/16] %v769, 128
        %781 = vxpose.xlu0.b32.cont [2/16] 0.0, 128
        %782 = vxpose.xlu0.b32.cont [3/16] 0.0, 128
        %783 = vxpose.xlu0.b32.cont [4/16] 0.0, 128
        %784 = vxpose.xlu0.b32.cont [5/16] 0.0, 128
        %785 = vxpose.xlu0.b32.cont [6/16] 0.0, 128
        %786 = vxpose.xlu0.b32.cont [7/16] 0.0, 128
        %787 = vxpose.xlu0.b32.cont [8/16] 0.0, 128
        %788 = vxpose.xlu0.b32.cont [9/16] 0.0, 128
        %789 = vxpose.xlu0.b32.cont [10/16] 0.0, 128
        %790 = vxpose.xlu0.b32.cont [11/16] 0.0, 128
        %791 = vxpose.xlu0.b32.cont [12/16] 0.0, 128
        %792 = vxpose.xlu0.b32.cont [13/16] 0.0, 128
        %793 = vxpose.xlu0.b32.cont [14/16] 0.0, 128
        %794 = vxpose.xlu0.b32.cont [15/16] 0.0, 128
        %795 = vxpose.xlu0.b32.end [16/16] 0.0, 128
        %v796 = vpop.trf.xlu0
        %v797 = vpop.trf.xlu0
        %v798 = vpop.trf.xlu0
        %v799 = vpop.trf.xlu0
        %v800 = vpop.trf.xlu0
        %v801 = vpop.trf.xlu0
        %v802 = vpop.trf.xlu0
        %v803 = vpop.trf.xlu0
        %v804 = vpop.trf.xlu0
        %v805 = vpop.trf.xlu0
        %v806 = vpop.trf.xlu0
        %v807 = vpop.trf.xlu0
        %v808 = vpop.trf.xlu0
        %v809 = vpop.trf.xlu0
        %v810 = vpop.trf.xlu0
        %v811 = vpop.trf.xlu0
        %812 = vxpose.xlu0.b32.start [1/16] %v771, 128
        %813 = vxpose.xlu0.b32.cont [2/16] 0.0, 128
        %814 = vxpose.xlu0.b32.cont [3/16] 0.0, 128
        %815 = vxpose.xlu0.b32.cont [4/16] 0.0, 128
        %816 = vxpose.xlu0.b32.cont [5/16] 0.0, 128
        %817 = vxpose.xlu0.b32.cont [6/16] 0.0, 128
        %818 = vxpose.xlu0.b32.cont [7/16] 0.0, 128
        %819 = vxpose.xlu0.b32.cont [8/16] 0.0, 128
        %820 = vxpose.xlu0.b32.cont [9/16] 0.0, 128
        %821 = vxpose.xlu0.b32.cont [10/16] 0.0, 128
        %822 = vxpose.xlu0.b32.cont [11/16] 0.0, 128
        %823 = vxpose.xlu0.b32.cont [12/16] 0.0, 128
        %824 = vxpose.xlu0.b32.cont [13/16] 0.0, 128
        %825 = vxpose.xlu0.b32.cont [14/16] 0.0, 128
        %826 = vxpose.xlu0.b32.cont [15/16] 0.0, 128
        %827 = vxpose.xlu0.b32.end [16/16] 0.0, 128
        %v828 = vpop.trf.xlu0
        %v829 = vpop.trf.xlu0
        %v830 = vpop.trf.xlu0
        %v831 = vpop.trf.xlu0
        %v832 = vpop.trf.xlu0
        %v833 = vpop.trf.xlu0
        %v834 = vpop.trf.xlu0
        %v835 = vpop.trf.xlu0
        %v836 = vpop.trf.xlu0
        %v837 = vpop.trf.xlu0
        %v838 = vpop.trf.xlu0
        %v839 = vpop.trf.xlu0
        %v840 = vpop.trf.xlu0
        %v841 = vpop.trf.xlu0
        %v842 = vpop.trf.xlu0
        %v843 = vpop.trf.xlu0
        %844 = vxpose.xlu0.b32.start [1/16] %v773, 128
        %845 = vxpose.xlu0.b32.cont [2/16] 0.0, 128
        %846 = vxpose.xlu0.b32.cont [3/16] 0.0, 128
        %847 = vxpose.xlu0.b32.cont [4/16] 0.0, 128
        %848 = vxpose.xlu0.b32.cont [5/16] 0.0, 128
        %849 = vxpose.xlu0.b32.cont [6/16] 0.0, 128
        %850 = vxpose.xlu0.b32.cont [7/16] 0.0, 128
        %851 = vxpose.xlu0.b32.cont [8/16] 0.0, 128
        %852 = vxpose.xlu0.b32.cont [9/16] 0.0, 128
        %853 = vxpose.xlu0.b32.cont [10/16] 0.0, 128
        %854 = vxpose.xlu0.b32.cont [11/16] 0.0, 128
        %855 = vxpose.xlu0.b32.cont [12/16] 0.0, 128
        %856 = vxpose.xlu0.b32.cont [13/16] 0.0, 128
        %857 = vxpose.xlu0.b32.cont [14/16] 0.0, 128
        %858 = vxpose.xlu0.b32.cont [15/16] 0.0, 128
        %859 = vxpose.xlu0.b32.end [16/16] 0.0, 128
        %v860 = vpop.trf.xlu0
        %v861 = vpop.trf.xlu0
        %v862 = vpop.trf.xlu0
        %v863 = vpop.trf.xlu0
        %v864 = vpop.trf.xlu0
        %v865 = vpop.trf.xlu0
        %v866 = vpop.trf.xlu0
        %v867 = vpop.trf.xlu0
        %v868 = vpop.trf.xlu0
        %v869 = vpop.trf.xlu0
        %v870 = vpop.trf.xlu0
        %v871 = vpop.trf.xlu0
        %v872 = vpop.trf.xlu0
        %v873 = vpop.trf.xlu0
        %v874 = vpop.trf.xlu0
        %v875 = vpop.trf.xlu0
        %876 = vxpose.xlu0.b32.start [1/16] %v775, 128
        %877 = vxpose.xlu0.b32.cont [2/16] 0.0, 128
        %878 = vxpose.xlu0.b32.cont [3/16] 0.0, 128
        %879 = vxpose.xlu0.b32.cont [4/16] 0.0, 128
        %880 = vxpose.xlu0.b32.cont [5/16] 0.0, 128
        %881 = vxpose.xlu0.b32.cont [6/16] 0.0, 128
        %882 = vxpose.xlu0.b32.cont [7/16] 0.0, 128
        %883 = vxpose.xlu0.b32.cont [8/16] 0.0, 128
        %884 = vxpose.xlu0.b32.cont [9/16] 0.0, 128
        %885 = vxpose.xlu0.b32.cont [10/16] 0.0, 128
        %886 = vxpose.xlu0.b32.cont [11/16] 0.0, 128
        %887 = vxpose.xlu0.b32.cont [12/16] 0.0, 128
        %888 = vxpose.xlu0.b32.cont [13/16] 0.0, 128
        %889 = vxpose.xlu0.b32.cont [14/16] 0.0, 128
        %890 = vxpose.xlu0.b32.cont [15/16] 0.0, 128
        %891 = vxpose.xlu0.b32.end [16/16] 0.0, 128
        %v892 = vpop.trf.xlu0
        %v893 = vpop.trf.xlu0
        %v894 = vpop.trf.xlu0
        %v895 = vpop.trf.xlu0
        %v896 = vpop.trf.xlu0
        %v897 = vpop.trf.xlu0
        %v898 = vpop.trf.xlu0
        %v899 = vpop.trf.xlu0
        %v900 = vpop.trf.xlu0
        %v901 = vpop.trf.xlu0
        %v902 = vpop.trf.xlu0
        %v903 = vpop.trf.xlu0
        %v904 = vpop.trf.xlu0
        %v905 = vpop.trf.xlu0
        %v906 = vpop.trf.xlu0
        %v907 = vpop.trf.xlu0
        %vm908 = vcmask 64512
        %v909 = vsel %vm908, %v752, 0
        %911 = vmatprep.subr.mxu0 0.0
        %912 = vmatpush1.msra.mxu0 0.0
        %913 = vmatprep.subr.mxu0 0.0
        %914 = vmatpush1.msra.mxu0 0.0
        %915 = vmatprep.subr.mxu0 0.0
        %916 = vmatpush1.msra.mxu0 0.0
        %917 = vmatprep.subr.mxu0 0.0
        %918 = vmatpush1.msra.mxu0 0.0
        %919 = vmatprep.subr.mxu0 0.0
        %920 = vmatpush1.msra.mxu0 0.0
        %921 = vmatprep.subr.mxu0 0.0
        %922 = vmatpush1.msra.mxu0 0.0
        %923 = vmatprep.subr.mxu0 0.0
        %924 = vmatpush1.msra.mxu0 0.0
        %925 = vmatprep.subr.mxu0 0.0
        %926 = vmatpush1.msra.mxu0 0.0
        %927 = vmatprep.subr.mxu0 0.0
        %928 = vmatpush1.msra.mxu0 0.0
        %929 = vmatprep.subr.mxu0 0.0
        %930 = vmatpush1.msra.mxu0 0.0
        %931 = vmatprep.subr.mxu0 0.0
        %932 = vmatpush1.msra.mxu0 0.0
        %933 = vmatprep.subr.mxu0 0.0
        %934 = vmatpush1.msra.mxu0 0.0
        %935 = vmatprep.subr.mxu0 0.0
        %936 = vmatpush1.msra.mxu0 0.0
        %937 = vmatprep.subr.mxu0 0.0
        %938 = vmatpush1.msra.mxu0 0.0
        %939 = vmatprep.subr.mxu0 0.0
        %940 = vmatpush1.msra.mxu0 0.0
        %941 = vmatprep.subr.mxu0 0.0
        %942 = vmatpush1.msra.mxu0 %v796
        %943 = vmatprep.subr.mxu0 0.0
        %944 = vmatpush2.msra.mxu0 0.0
        %945 = vmatprep.subr.mxu0 0.0
        %946 = vmatpush2.msra.mxu0 0.0
        %947 = vmatprep.subr.mxu0 0.0
        %948 = vmatpush2.msra.mxu0 0.0
        %949 = vmatprep.subr.mxu0 0.0
        %950 = vmatpush2.msra.mxu0 0.0
        %951 = vmatprep.subr.mxu0 0.0
        %952 = vmatpush2.msra.mxu0 0.0
        %953 = vmatprep.subr.mxu0 0.0
        %954 = vmatpush2.msra.mxu0 0.0
        %955 = vmatprep.subr.mxu0 0.0
        %956 = vmatpush2.msra.mxu0 0.0
        %957 = vmatprep.subr.mxu0 0.0
        %958 = vmatpush2.msra.mxu0 0.0
        %959 = vmatprep.subr.mxu0 0.0
        %960 = vmatpush2.msra.mxu0 0.0
        %961 = vmatprep.subr.mxu0 0.0
        %962 = vmatpush2.msra.mxu0 0.0
        %963 = vmatprep.subr.mxu0 0.0
        %964 = vmatpush2.msra.mxu0 0.0
        %965 = vmatprep.subr.mxu0 0.0
        %966 = vmatpush2.msra.mxu0 0.0
        %967 = vmatprep.subr.mxu0 0.0
        %968 = vmatpush2.msra.mxu0 0.0
        %969 = vmatprep.subr.mxu0 0.0
        %970 = vmatpush2.msra.mxu0 0.0
        %971 = vmatprep.subr.mxu0 0.0
        %972 = vmatpush2.msra.mxu0 0.0
        %973 = vmatprep.subr.mxu0 0.0
        %974 = vmatpush2.msra.mxu0 0.0
        %975 = vmatprep.mubr.f32.mxu0 0.0
        %976 = vmatmul.mubr.f32.gmra.mxu0 %v909
        %v977 = vpop.f32.mrf.mxu0
        %v978 = vadd.f32 %v766, %v977
        %v979 = vpop.f32.mrf.mxu0
        %980 = vdwg.mxu0
        %v981 = vsel %vm908, %v757, 0
        %983 = vmatprep.subr.mxu0 0.0
        %984 = vmatpush1.msra.mxu0 0.0
        %985 = vmatprep.subr.mxu0 0.0
        %986 = vmatpush1.msra.mxu0 0.0
        %987 = vmatprep.subr.mxu0 0.0
        %988 = vmatpush1.msra.mxu0 0.0
        %989 = vmatprep.subr.mxu0 0.0
        %990 = vmatpush1.msra.mxu0 0.0
        %991 = vmatprep.subr.mxu0 0.0
        %992 = vmatpush1.msra.mxu0 0.0
        %993 = vmatprep.subr.mxu0 0.0
        %994 = vmatpush1.msra.mxu0 0.0
        %995 = vmatprep.subr.mxu0 0.0
        %996 = vmatpush1.msra.mxu0 0.0
        %997 = vmatprep.subr.mxu0 0.0
        %998 = vmatpush1.msra.mxu0 0.0
        %999 = vmatprep.subr.mxu0 0.0
        %1000 = vmatpush1.msra.mxu0 0.0
        %1001 = vmatprep.subr.mxu0 0.0
        %1002 = vmatpush1.msra.mxu0 0.0
        %1003 = vmatprep.subr.mxu0 0.0
        %1004 = vmatpush1.msra.mxu0 0.0
        %1005 = vmatprep.subr.mxu0 0.0
        %1006 = vmatpush1.msra.mxu0 0.0
        %1007 = vmatprep.subr.mxu0 0.0
        %1008 = vmatpush1.msra.mxu0 0.0
        %1009 = vmatprep.subr.mxu0 0.0
        %1010 = vmatpush1.msra.mxu0 0.0
        %1011 = vmatprep.subr.mxu0 0.0
        %1012 = vmatpush1.msra.mxu0 0.0
        %1013 = vmatprep.subr.mxu0 0.0
        %1014 = vmatpush1.msra.mxu0 %v828
        %1015 = vmatprep.subr.mxu0 0.0
        %1016 = vmatpush2.msra.mxu0 0.0
        %1017 = vmatprep.subr.mxu0 0.0
        %1018 = vmatpush2.msra.mxu0 0.0
        %1019 = vmatprep.subr.mxu0 0.0
        %1020 = vmatpush2.msra.mxu0 0.0
        %1021 = vmatprep.subr.mxu0 0.0
        %1022 = vmatpush2.msra.mxu0 0.0
        %1023 = vmatprep.subr.mxu0 0.0
        %1024 = vmatpush2.msra.mxu0 0.0
        %1025 = vmatprep.subr.mxu0 0.0
        %1026 = vmatpush2.msra.mxu0 0.0
        %1027 = vmatprep.subr.mxu0 0.0
        %1028 = vmatpush2.msra.mxu0 0.0
        %1029 = vmatprep.subr.mxu0 0.0
        %1030 = vmatpush2.msra.mxu0 0.0
        %1031 = vmatprep.subr.mxu0 0.0
        %1032 = vmatpush2.msra.mxu0 0.0
        %1033 = vmatprep.subr.mxu0 0.0
        %1034 = vmatpush2.msra.mxu0 0.0
        %1035 = vmatprep.subr.mxu0 0.0
        %1036 = vmatpush2.msra.mxu0 0.0
        %1037 = vmatprep.subr.mxu0 0.0
        %1038 = vmatpush2.msra.mxu0 0.0
        %1039 = vmatprep.subr.mxu0 0.0
        %1040 = vmatpush2.msra.mxu0 0.0
        %1041 = vmatprep.subr.mxu0 0.0
        %1042 = vmatpush2.msra.mxu0 0.0
        %1043 = vmatprep.subr.mxu0 0.0
        %1044 = vmatpush2.msra.mxu0 0.0
        %1045 = vmatprep.subr.mxu0 0.0
        %1046 = vmatpush2.msra.mxu0 0.0
        %1047 = vmatprep.mubr.f32.mxu0 0.0
        %1048 = vmatmul.mubr.f32.gmra.mxu0 %v981
        %v1049 = vpop.f32.mrf.mxu0
        %v1050 = vadd.f32 %v766, %v1049
        %v1051 = vpop.f32.mrf.mxu0
        %1052 = vdwg.mxu0
        %v1053 = vsel %vm908, %v759, 0
        %1055 = vmatprep.subr.mxu0 0.0
        %1056 = vmatpush1.msra.mxu0 0.0
        %1057 = vmatprep.subr.mxu0 0.0
        %1058 = vmatpush1.msra.mxu0 0.0
        %1059 = vmatprep.subr.mxu0 0.0
        %1060 = vmatpush1.msra.mxu0 0.0
        %1061 = vmatprep.subr.mxu0 0.0
        %1062 = vmatpush1.msra.mxu0 0.0
        %1063 = vmatprep.subr.mxu0 0.0
        %1064 = vmatpush1.msra.mxu0 0.0
        %1065 = vmatprep.subr.mxu0 0.0
        %1066 = vmatpush1.msra.mxu0 0.0
        %1067 = vmatprep.subr.mxu0 0.0
        %1068 = vmatpush1.msra.mxu0 0.0
        %1069 = vmatprep.subr.mxu0 0.0
        %1070 = vmatpush1.msra.mxu0 0.0
        %1071 = vmatprep.subr.mxu0 0.0
        %1072 = vmatpush1.msra.mxu0 0.0
        %1073 = vmatprep.subr.mxu0 0.0
        %1074 = vmatpush1.msra.mxu0 0.0
        %1075 = vmatprep.subr.mxu0 0.0
        %1076 = vmatpush1.msra.mxu0 0.0
        %1077 = vmatprep.subr.mxu0 0.0
        %1078 = vmatpush1.msra.mxu0 0.0
        %1079 = vmatprep.subr.mxu0 0.0
        %1080 = vmatpush1.msra.mxu0 0.0
        %1081 = vmatprep.subr.mxu0 0.0
        %1082 = vmatpush1.msra.mxu0 0.0
        %1083 = vmatprep.subr.mxu0 0.0
        %1084 = vmatpush1.msra.mxu0 0.0
        %1085 = vmatprep.subr.mxu0 0.0
        %1086 = vmatpush1.msra.mxu0 %v860
        %1087 = vmatprep.subr.mxu0 0.0
        %1088 = vmatpush2.msra.mxu0 0.0
        %1089 = vmatprep.subr.mxu0 0.0
        %1090 = vmatpush2.msra.mxu0 0.0
        %1091 = vmatprep.subr.mxu0 0.0
        %1092 = vmatpush2.msra.mxu0 0.0
        %1093 = vmatprep.subr.mxu0 0.0
        %1094 = vmatpush2.msra.mxu0 0.0
        %1095 = vmatprep.subr.mxu0 0.0
        %1096 = vmatpush2.msra.mxu0 0.0
        %1097 = vmatprep.subr.mxu0 0.0
        %1098 = vmatpush2.msra.mxu0 0.0
        %1099 = vmatprep.subr.mxu0 0.0
        %1100 = vmatpush2.msra.mxu0 0.0
        %1101 = vmatprep.subr.mxu0 0.0
        %1102 = vmatpush2.msra.mxu0 0.0
        %1103 = vmatprep.subr.mxu0 0.0
        %1104 = vmatpush2.msra.mxu0 0.0
        %1105 = vmatprep.subr.mxu0 0.0
        %1106 = vmatpush2.msra.mxu0 0.0
        %1107 = vmatprep.subr.mxu0 0.0
        %1108 = vmatpush2.msra.mxu0 0.0
        %1109 = vmatprep.subr.mxu0 0.0
        %1110 = vmatpush2.msra.mxu0 0.0
        %1111 = vmatprep.subr.mxu0 0.0
        %1112 = vmatpush2.msra.mxu0 0.0
        %1113 = vmatprep.subr.mxu0 0.0
        %1114 = vmatpush2.msra.mxu0 0.0
        %1115 = vmatprep.subr.mxu0 0.0
        %1116 = vmatpush2.msra.mxu0 0.0
        %1117 = vmatprep.subr.mxu0 0.0
        %1118 = vmatpush2.msra.mxu0 0.0
        %1119 = vmatprep.mubr.f32.mxu0 0.0
        %1120 = vmatmul.mubr.f32.gmra.mxu0 %v1053
        %v1121 = vpop.f32.mrf.mxu0
        %v1122 = vadd.f32 %v766, %v1121
        %v1123 = vpop.f32.mrf.mxu0
        %1124 = vdwg.mxu0
        %v1125 = vsel %vm908, %v761, 0
        %1127 = vmatprep.subr.mxu0 0.0
        %1128 = vmatpush1.msra.mxu0 0.0
        %1129 = vmatprep.subr.mxu0 0.0
        %1130 = vmatpush1.msra.mxu0 0.0
        %1131 = vmatprep.subr.mxu0 0.0
        %1132 = vmatpush1.msra.mxu0 0.0
        %1133 = vmatprep.subr.mxu0 0.0
        %1134 = vmatpush1.msra.mxu0 0.0
        %1135 = vmatprep.subr.mxu0 0.0
        %1136 = vmatpush1.msra.mxu0 0.0
        %1137 = vmatprep.subr.mxu0 0.0
        %1138 = vmatpush1.msra.mxu0 0.0
        %1139 = vmatprep.subr.mxu0 0.0
        %1140 = vmatpush1.msra.mxu0 0.0
        %1141 = vmatprep.subr.mxu0 0.0
        %1142 = vmatpush1.msra.mxu0 0.0
        %1143 = vmatprep.subr.mxu0 0.0
        %1144 = vmatpush1.msra.mxu0 0.0
        %1145 = vmatprep.subr.mxu0 0.0
        %1146 = vmatpush1.msra.mxu0 0.0
        %1147 = vmatprep.subr.mxu0 0.0
        %1148 = vmatpush1.msra.mxu0 0.0
        %1149 = vmatprep.subr.mxu0 0.0
        %1150 = vmatpush1.msra.mxu0 0.0
        %1151 = vmatprep.subr.mxu0 0.0
        %1152 = vmatpush1.msra.mxu0 0.0
        %1153 = vmatprep.subr.mxu0 0.0
        %1154 = vmatpush1.msra.mxu0 0.0
        %1155 = vmatprep.subr.mxu0 0.0
        %1156 = vmatpush1.msra.mxu0 0.0
        %1157 = vmatprep.subr.mxu0 0.0
        %1158 = vmatpush1.msra.mxu0 %v892
        %1159 = vmatprep.subr.mxu0 0.0
        %1160 = vmatpush2.msra.mxu0 0.0
        %1161 = vmatprep.subr.mxu0 0.0
        %1162 = vmatpush2.msra.mxu0 0.0
        %1163 = vmatprep.subr.mxu0 0.0
        %1164 = vmatpush2.msra.mxu0 0.0
        %1165 = vmatprep.subr.mxu0 0.0
        %1166 = vmatpush2.msra.mxu0 0.0
        %1167 = vmatprep.subr.mxu0 0.0
        %1168 = vmatpush2.msra.mxu0 0.0
        %1169 = vmatprep.subr.mxu0 0.0
        %1170 = vmatpush2.msra.mxu0 0.0
        %1171 = vmatprep.subr.mxu0 0.0
        %1172 = vmatpush2.msra.mxu0 0.0
        %1173 = vmatprep.subr.mxu0 0.0
        %1174 = vmatpush2.msra.mxu0 0.0
        %1175 = vmatprep.subr.mxu0 0.0
        %1176 = vmatpush2.msra.mxu0 0.0
        %1177 = vmatprep.subr.mxu0 0.0
        %1178 = vmatpush2.msra.mxu0 0.0
        %1179 = vmatprep.subr.mxu0 0.0
        %1180 = vmatpush2.msra.mxu0 0.0
        %1181 = vmatprep.subr.mxu0 0.0
        %1182 = vmatpush2.msra.mxu0 0.0
        %1183 = vmatprep.subr.mxu0 0.0
        %1184 = vmatpush2.msra.mxu0 0.0
        %1185 = vmatprep.subr.mxu0 0.0
        %1186 = vmatpush2.msra.mxu0 0.0
        %1187 = vmatprep.subr.mxu0 0.0
        %1188 = vmatpush2.msra.mxu0 0.0
        %1189 = vmatprep.subr.mxu0 0.0
        %1190 = vmatpush2.msra.mxu0 0.0
        %1191 = vmatprep.mubr.f32.mxu0 0.0
        %1192 = vmatmul.mubr.f32.gmra.mxu0 %v1125
        %v1193 = vpop.f32.mrf.mxu0
        %v1194 = vadd.f32 %v766, %v1193
        %v1195 = vpop.f32.mrf.mxu0
        %1196 = vdwg.mxu0
        %v1197 = vsel %vm908, %v978, -inf
        %1198 = vmax.xlane.f32.xlu0 %v1197
        %v1199 = vpop.xlane.xlu0 %1198
        %v1200 = vsel %vm908, %v1050, -inf
        %1201 = vmax.xlane.f32.xlu0 %v1200
        %v1202 = vpop.xlane.xlu0 %1201
        %v1203 = vsel %vm908, %v1122, -inf
        %1204 = vmax.xlane.f32.xlu0 %v1203
        %v1205 = vpop.xlane.xlu0 %1204
        %v1206 = vsel %vm908, %v1194, -inf
        %1207 = vmax.xlane.f32.xlu0 %v1206
        %v1208 = vpop.xlane.xlu0 %1207
        %v1209 = vsub.f32 %v978, %v1199
        %v1210 = vsub.f32 %v1050, %v1202
        %v1211 = vsub.f32 %v1122, %v1205
        %v1212 = vsub.f32 %v1194, %v1208
        %v1213 = vmul.f32 %v1209, 1.442695
        %v1214 = vpow.pop %v1213
        %v1215 = vmul.f32 %v1210, 1.442695
        %v1216 = vpow.pop %v1215
        %v1217 = vmul.f32 %v1211, 1.442695
        %v1218 = vpow.pop %v1217
        %v1219 = vmul.f32 %v1212, 1.442695
        %v1220 = vpow.pop %v1219
        %v1221 = vsel %vm908, %v1214, 0.0
        %1222 = vadd.xlane.f32.xlu0 %v1221
        %v1223 = vpop.xlane.xlu0 %1222
        %v1224 = vsel %vm908, %v1216, 0.0
        %1225 = vadd.xlane.f32.xlu0 %v1224
        %v1226 = vpop.xlane.xlu0 %1225
        %v1227 = vsel %vm908, %v1218, 0.0
        %1228 = vadd.xlane.f32.xlu0 %v1227
        %v1229 = vpop.xlane.xlu0 %1228
        %v1230 = vsel %vm908, %v1220, 0.0
        %1231 = vadd.xlane.f32.xlu0 %v1230
        %v1232 = vpop.xlane.xlu0 %1231
        %v1233 = vrcp.pop %v1223
        %v1234 = vrcp.pop %v1226
        %v1235 = vrcp.pop %v1229
        %v1236 = vrcp.pop %v1232
        %v1237 = vmul.f32 %v1214, %v1233
        %v1238 = vmul.f32 %v1216, %v1234
        %v1239 = vmul.f32 %v1218, %v1235
        %v1240 = vmul.f32 %v1220, %v1236
        %1241 = vrot.lane.b32.xlu0 %v752, 64
        %v1242 = vpop.permute.xlu0 %1241
        %1243 = vrot.lane.b32.xlu0 %v757, 64
        %v1244 = vpop.permute.xlu0 %1243
        %1245 = vrot.lane.b32.xlu0 %v759, 64
        %v1246 = vpop.permute.xlu0 %1245
        %1247 = vrot.lane.b32.xlu0 %v761, 64
        %v1248 = vpop.permute.xlu0 %1247
        %1253 = vxpose.xlu0.b32.start [1/16] %v1242, 128
        %1254 = vxpose.xlu0.b32.cont [2/16] 0.0, 128
        %1255 = vxpose.xlu0.b32.cont [3/16] 0.0, 128
        %1256 = vxpose.xlu0.b32.cont [4/16] 0.0, 128
        %1257 = vxpose.xlu0.b32.cont [5/16] 0.0, 128
        %1258 = vxpose.xlu0.b32.cont [6/16] 0.0, 128
        %1259 = vxpose.xlu0.b32.cont [7/16] 0.0, 128
        %1260 = vxpose.xlu0.b32.cont [8/16] 0.0, 128
        %1261 = vxpose.xlu0.b32.cont [9/16] 0.0, 128
        %1262 = vxpose.xlu0.b32.cont [10/16] 0.0, 128
        %1263 = vxpose.xlu0.b32.cont [11/16] 0.0, 128
        %1264 = vxpose.xlu0.b32.cont [12/16] 0.0, 128
        %1265 = vxpose.xlu0.b32.cont [13/16] 0.0, 128
        %1266 = vxpose.xlu0.b32.cont [14/16] 0.0, 128
        %1267 = vxpose.xlu0.b32.cont [15/16] 0.0, 128
        %1268 = vxpose.xlu0.b32.end [16/16] 0.0, 128
        %v1269 = vpop.trf.xlu0
        %v1270 = vpop.trf.xlu0
        %v1271 = vpop.trf.xlu0
        %v1272 = vpop.trf.xlu0
        %v1273 = vpop.trf.xlu0
        %v1274 = vpop.trf.xlu0
        %v1275 = vpop.trf.xlu0
        %v1276 = vpop.trf.xlu0
        %v1277 = vpop.trf.xlu0
        %v1278 = vpop.trf.xlu0
        %v1279 = vpop.trf.xlu0
        %v1280 = vpop.trf.xlu0
        %v1281 = vpop.trf.xlu0
        %v1282 = vpop.trf.xlu0
        %v1283 = vpop.trf.xlu0
        %v1284 = vpop.trf.xlu0
        %1285 = vxpose.xlu0.b32.start [1/16] %v1244, 128
        %1286 = vxpose.xlu0.b32.cont [2/16] 0.0, 128
        %1287 = vxpose.xlu0.b32.cont [3/16] 0.0, 128
        %1288 = vxpose.xlu0.b32.cont [4/16] 0.0, 128
        %1289 = vxpose.xlu0.b32.cont [5/16] 0.0, 128
        %1290 = vxpose.xlu0.b32.cont [6/16] 0.0, 128
        %1291 = vxpose.xlu0.b32.cont [7/16] 0.0, 128
        %1292 = vxpose.xlu0.b32.cont [8/16] 0.0, 128
        %1293 = vxpose.xlu0.b32.cont [9/16] 0.0, 128
        %1294 = vxpose.xlu0.b32.cont [10/16] 0.0, 128
        %1295 = vxpose.xlu0.b32.cont [11/16] 0.0, 128
        %1296 = vxpose.xlu0.b32.cont [12/16] 0.0, 128
        %1297 = vxpose.xlu0.b32.cont [13/16] 0.0, 128
        %1298 = vxpose.xlu0.b32.cont [14/16] 0.0, 128
        %1299 = vxpose.xlu0.b32.cont [15/16] 0.0, 128
        %1300 = vxpose.xlu0.b32.end [16/16] 0.0, 128
        %v1301 = vpop.trf.xlu0
        %v1302 = vpop.trf.xlu0
        %v1303 = vpop.trf.xlu0
        %v1304 = vpop.trf.xlu0
        %v1305 = vpop.trf.xlu0
        %v1306 = vpop.trf.xlu0
        %v1307 = vpop.trf.xlu0
        %v1308 = vpop.trf.xlu0
        %v1309 = vpop.trf.xlu0
        %v1310 = vpop.trf.xlu0
        %v1311 = vpop.trf.xlu0
        %v1312 = vpop.trf.xlu0
        %v1313 = vpop.trf.xlu0
        %v1314 = vpop.trf.xlu0
        %v1315 = vpop.trf.xlu0
        %v1316 = vpop.trf.xlu0
        %1317 = vxpose.xlu0.b32.start [1/16] %v1246, 128
        %1318 = vxpose.xlu0.b32.cont [2/16] 0.0, 128
        %1319 = vxpose.xlu0.b32.cont [3/16] 0.0, 128
        %1320 = vxpose.xlu0.b32.cont [4/16] 0.0, 128
        %1321 = vxpose.xlu0.b32.cont [5/16] 0.0, 128
        %1322 = vxpose.xlu0.b32.cont [6/16] 0.0, 128
        %1323 = vxpose.xlu0.b32.cont [7/16] 0.0, 128
        %1324 = vxpose.xlu0.b32.cont [8/16] 0.0, 128
        %1325 = vxpose.xlu0.b32.cont [9/16] 0.0, 128
        %1326 = vxpose.xlu0.b32.cont [10/16] 0.0, 128
        %1327 = vxpose.xlu0.b32.cont [11/16] 0.0, 128
        %1328 = vxpose.xlu0.b32.cont [12/16] 0.0, 128
        %1329 = vxpose.xlu0.b32.cont [13/16] 0.0, 128
        %1330 = vxpose.xlu0.b32.cont [14/16] 0.0, 128
        %1331 = vxpose.xlu0.b32.cont [15/16] 0.0, 128
        %1332 = vxpose.xlu0.b32.end [16/16] 0.0, 128
        %v1333 = vpop.trf.xlu0
        %v1334 = vpop.trf.xlu0
        %v1335 = vpop.trf.xlu0
        %v1336 = vpop.trf.xlu0
        %v1337 = vpop.trf.xlu0
        %v1338 = vpop.trf.xlu0
        %v1339 = vpop.trf.xlu0
        %v1340 = vpop.trf.xlu0
        %v1341 = vpop.trf.xlu0
        %v1342 = vpop.trf.xlu0
        %v1343 = vpop.trf.xlu0
        %v1344 = vpop.trf.xlu0
        %v1345 = vpop.trf.xlu0
        %v1346 = vpop.trf.xlu0
        %v1347 = vpop.trf.xlu0
        %v1348 = vpop.trf.xlu0
        %1349 = vxpose.xlu0.b32.start [1/16] %v1248, 128
        %1350 = vxpose.xlu0.b32.cont [2/16] 0.0, 128
        %1351 = vxpose.xlu0.b32.cont [3/16] 0.0, 128
        %1352 = vxpose.xlu0.b32.cont [4/16] 0.0, 128
        %1353 = vxpose.xlu0.b32.cont [5/16] 0.0, 128
        %1354 = vxpose.xlu0.b32.cont [6/16] 0.0, 128
        %1355 = vxpose.xlu0.b32.cont [7/16] 0.0, 128
        %1356 = vxpose.xlu0.b32.cont [8/16] 0.0, 128
        %1357 = vxpose.xlu0.b32.cont [9/16] 0.0, 128
        %1358 = vxpose.xlu0.b32.cont [10/16] 0.0, 128
        %1359 = vxpose.xlu0.b32.cont [11/16] 0.0, 128
        %1360 = vxpose.xlu0.b32.cont [12/16] 0.0, 128
        %1361 = vxpose.xlu0.b32.cont [13/16] 0.0, 128
        %1362 = vxpose.xlu0.b32.cont [14/16] 0.0, 128
        %1363 = vxpose.xlu0.b32.cont [15/16] 0.0, 128
        %1364 = vxpose.xlu0.b32.end [16/16] 0.0, 128
        %v1365 = vpop.trf.xlu0
        %v1366 = vpop.trf.xlu0
        %v1367 = vpop.trf.xlu0
        %v1368 = vpop.trf.xlu0
        %v1369 = vpop.trf.xlu0
        %v1370 = vpop.trf.xlu0
        %v1371 = vpop.trf.xlu0
        %v1372 = vpop.trf.xlu0
        %v1373 = vpop.trf.xlu0
        %v1374 = vpop.trf.xlu0
        %v1375 = vpop.trf.xlu0
        %v1376 = vpop.trf.xlu0
        %v1377 = vpop.trf.xlu0
        %v1378 = vpop.trf.xlu0
        %v1379 = vpop.trf.xlu0
        %v1380 = vpop.trf.xlu0
        %v1382 = vsel %vm908, %v1269, 0
        %v1385 = vsel %vm908, %v1237, 0
        %1387 = vmatprep.subr.mxu0 0.0
        %1388 = vmatpush1.xpose.msra.mxu0 0.0
        %1389 = vmatprep.subr.mxu0 0.0
        %1390 = vmatpush1.xpose.msra.mxu0 0.0
        %1391 = vmatprep.subr.mxu0 0.0
        %1392 = vmatpush1.xpose.msra.mxu0 0.0
        %1393 = vmatprep.subr.mxu0 0.0
        %1394 = vmatpush1.xpose.msra.mxu0 0.0
        %1395 = vmatprep.subr.mxu0 0.0
        %1396 = vmatpush1.xpose.msra.mxu0 0.0
        %1397 = vmatprep.subr.mxu0 0.0
        %1398 = vmatpush1.xpose.msra.mxu0 0.0
        %1399 = vmatprep.subr.mxu0 0.0
        %1400 = vmatpush1.xpose.msra.mxu0 0.0
        %1401 = vmatprep.subr.mxu0 0.0
        %1402 = vmatpush1.xpose.msra.mxu0 0.0
        %1403 = vmatprep.subr.mxu0 0.0
        %1404 = vmatpush1.xpose.msra.mxu0 0.0
        %1405 = vmatprep.subr.mxu0 0.0
        %1406 = vmatpush1.xpose.msra.mxu0 0.0
        %1407 = vmatprep.subr.mxu0 0.0
        %1408 = vmatpush1.xpose.msra.mxu0 0.0
        %1409 = vmatprep.subr.mxu0 0.0
        %1410 = vmatpush1.xpose.msra.mxu0 0.0
        %1411 = vmatprep.subr.mxu0 0.0
        %1412 = vmatpush1.xpose.msra.mxu0 0.0
        %1413 = vmatprep.subr.mxu0 0.0
        %1414 = vmatpush1.xpose.msra.mxu0 0.0
        %1415 = vmatprep.subr.mxu0 0.0
        %1416 = vmatpush1.xpose.msra.mxu0 0.0
        %1417 = vmatprep.subr.mxu0 0.0
        %1418 = vmatpush1.xpose.msra.mxu0 %v1385
        %1419 = vmatprep.subr.mxu0 0.0
        %1420 = vmatpush2.xpose.msra.mxu0 0.0
        %1421 = vmatprep.subr.mxu0 0.0
        %1422 = vmatpush2.xpose.msra.mxu0 0.0
        %1423 = vmatprep.subr.mxu0 0.0
        %1424 = vmatpush2.xpose.msra.mxu0 0.0
        %1425 = vmatprep.subr.mxu0 0.0
        %1426 = vmatpush2.xpose.msra.mxu0 0.0
        %1427 = vmatprep.subr.mxu0 0.0
        %1428 = vmatpush2.xpose.msra.mxu0 0.0
        %1429 = vmatprep.subr.mxu0 0.0
        %1430 = vmatpush2.xpose.msra.mxu0 0.0
        %1431 = vmatprep.subr.mxu0 0.0
        %1432 = vmatpush2.xpose.msra.mxu0 0.0
        %1433 = vmatprep.subr.mxu0 0.0
        %1434 = vmatpush2.xpose.msra.mxu0 0.0
        %1435 = vmatprep.subr.mxu0 0.0
        %1436 = vmatpush2.xpose.msra.mxu0 0.0
        %1437 = vmatprep.subr.mxu0 0.0
        %1438 = vmatpush2.xpose.msra.mxu0 0.0
        %1439 = vmatprep.subr.mxu0 0.0
        %1440 = vmatpush2.xpose.msra.mxu0 0.0
        %1441 = vmatprep.subr.mxu0 0.0
        %1442 = vmatpush2.xpose.msra.mxu0 0.0
        %1443 = vmatprep.subr.mxu0 0.0
        %1444 = vmatpush2.xpose.msra.mxu0 0.0
        %1445 = vmatprep.subr.mxu0 0.0
        %1446 = vmatpush2.xpose.msra.mxu0 0.0
        %1447 = vmatprep.subr.mxu0 0.0
        %1448 = vmatpush2.xpose.msra.mxu0 0.0
        %1449 = vmatprep.subr.mxu0 0.0
        %1450 = vmatpush2.xpose.msra.mxu0 0.0
        %1451 = vmatprep.mubr.f32.mxu0 0.0
        %1452 = vmatmul.mubr.f32.gmra.mxu0 %v1382
        %v1453 = vpop.f32.mrf.mxu0
        %v1454 = vadd.f32 0.0, %v1453
        %v1455 = vpop.f32.mrf.mxu0
        %1456 = vdwg.mxu0
        %v1458 = vsel %vm908, %v1301, 0
        %v1461 = vsel %vm908, %v1238, 0
        %1463 = vmatprep.subr.mxu0 0.0
        %1464 = vmatpush1.xpose.msra.mxu0 0.0
        %1465 = vmatprep.subr.mxu0 0.0
        %1466 = vmatpush1.xpose.msra.mxu0 0.0
        %1467 = vmatprep.subr.mxu0 0.0
        %1468 = vmatpush1.xpose.msra.mxu0 0.0
        %1469 = vmatprep.subr.mxu0 0.0
        %1470 = vmatpush1.xpose.msra.mxu0 0.0
        %1471 = vmatprep.subr.mxu0 0.0
        %1472 = vmatpush1.xpose.msra.mxu0 0.0
        %1473 = vmatprep.subr.mxu0 0.0
        %1474 = vmatpush1.xpose.msra.mxu0 0.0
        %1475 = vmatprep.subr.mxu0 0.0
        %1476 = vmatpush1.xpose.msra.mxu0 0.0
        %1477 = vmatprep.subr.mxu0 0.0
        %1478 = vmatpush1.xpose.msra.mxu0 0.0
        %1479 = vmatprep.subr.mxu0 0.0
        %1480 = vmatpush1.xpose.msra.mxu0 0.0
        %1481 = vmatprep.subr.mxu0 0.0
        %1482 = vmatpush1.xpose.msra.mxu0 0.0
        %1483 = vmatprep.subr.mxu0 0.0
        %1484 = vmatpush1.xpose.msra.mxu0 0.0
        %1485 = vmatprep.subr.mxu0 0.0
        %1486 = vmatpush1.xpose.msra.mxu0 0.0
        %1487 = vmatprep.subr.mxu0 0.0
        %1488 = vmatpush1.xpose.msra.mxu0 0.0
        %1489 = vmatprep.subr.mxu0 0.0
        %1490 = vmatpush1.xpose.msra.mxu0 0.0
        %1491 = vmatprep.subr.mxu0 0.0
        %1492 = vmatpush1.xpose.msra.mxu0 0.0
        %1493 = vmatprep.subr.mxu0 0.0
        %1494 = vmatpush1.xpose.msra.mxu0 %v1461
        %1495 = vmatprep.subr.mxu0 0.0
        %1496 = vmatpush2.xpose.msra.mxu0 0.0
        %1497 = vmatprep.subr.mxu0 0.0
        %1498 = vmatpush2.xpose.msra.mxu0 0.0
        %1499 = vmatprep.subr.mxu0 0.0
        %1500 = vmatpush2.xpose.msra.mxu0 0.0
        %1501 = vmatprep.subr.mxu0 0.0
        %1502 = vmatpush2.xpose.msra.mxu0 0.0
        %1503 = vmatprep.subr.mxu0 0.0
        %1504 = vmatpush2.xpose.msra.mxu0 0.0
        %1505 = vmatprep.subr.mxu0 0.0
        %1506 = vmatpush2.xpose.msra.mxu0 0.0
        %1507 = vmatprep.subr.mxu0 0.0
        %1508 = vmatpush2.xpose.msra.mxu0 0.0
        %1509 = vmatprep.subr.mxu0 0.0
        %1510 = vmatpush2.xpose.msra.mxu0 0.0
        %1511 = vmatprep.subr.mxu0 0.0
        %1512 = vmatpush2.xpose.msra.mxu0 0.0
        %1513 = vmatprep.subr.mxu0 0.0
        %1514 = vmatpush2.xpose.msra.mxu0 0.0
        %1515 = vmatprep.subr.mxu0 0.0
        %1516 = vmatpush2.xpose.msra.mxu0 0.0
        %1517 = vmatprep.subr.mxu0 0.0
        %1518 = vmatpush2.xpose.msra.mxu0 0.0
        %1519 = vmatprep.subr.mxu0 0.0
        %1520 = vmatpush2.xpose.msra.mxu0 0.0
        %1521 = vmatprep.subr.mxu0 0.0
        %1522 = vmatpush2.xpose.msra.mxu0 0.0
        %1523 = vmatprep.subr.mxu0 0.0
        %1524 = vmatpush2.xpose.msra.mxu0 0.0
        %1525 = vmatprep.subr.mxu0 0.0
        %1526 = vmatpush2.xpose.msra.mxu0 0.0
        %1527 = vmatprep.mubr.f32.mxu0 0.0
        %1528 = vmatmul.mubr.f32.gmra.mxu0 %v1458
        %v1529 = vpop.f32.mrf.mxu0
        %v1530 = vadd.f32 0.0, %v1529
        %v1531 = vpop.f32.mrf.mxu0
        %1532 = vdwg.mxu0
        %v1534 = vsel %vm908, %v1333, 0
        %v1537 = vsel %vm908, %v1239, 0
        %1539 = vmatprep.subr.mxu0 0.0
        %1540 = vmatpush1.xpose.msra.mxu0 0.0
        %1541 = vmatprep.subr.mxu0 0.0
        %1542 = vmatpush1.xpose.msra.mxu0 0.0
        %1543 = vmatprep.subr.mxu0 0.0
        %1544 = vmatpush1.xpose.msra.mxu0 0.0
        %1545 = vmatprep.subr.mxu0 0.0
        %1546 = vmatpush1.xpose.msra.mxu0 0.0
        %1547 = vmatprep.subr.mxu0 0.0
        %1548 = vmatpush1.xpose.msra.mxu0 0.0
        %1549 = vmatprep.subr.mxu0 0.0
        %1550 = vmatpush1.xpose.msra.mxu0 0.0
        %1551 = vmatprep.subr.mxu0 0.0
        %1552 = vmatpush1.xpose.msra.mxu0 0.0
        %1553 = vmatprep.subr.mxu0 0.0
        %1554 = vmatpush1.xpose.msra.mxu0 0.0
        %1555 = vmatprep.subr.mxu0 0.0
        %1556 = vmatpush1.xpose.msra.mxu0 0.0
        %1557 = vmatprep.subr.mxu0 0.0
        %1558 = vmatpush1.xpose.msra.mxu0 0.0
        %1559 = vmatprep.subr.mxu0 0.0
        %1560 = vmatpush1.xpose.msra.mxu0 0.0
        %1561 = vmatprep.subr.mxu0 0.0
        %1562 = vmatpush1.xpose.msra.mxu0 0.0
        %1563 = vmatprep.subr.mxu0 0.0
        %1564 = vmatpush1.xpose.msra.mxu0 0.0
        %1565 = vmatprep.subr.mxu0 0.0
        %1566 = vmatpush1.xpose.msra.mxu0 0.0
        %1567 = vmatprep.subr.mxu0 0.0
        %1568 = vmatpush1.xpose.msra.mxu0 0.0
        %1569 = vmatprep.subr.mxu0 0.0
        %1570 = vmatpush1.xpose.msra.mxu0 %v1537
        %1571 = vmatprep.subr.mxu0 0.0
        %1572 = vmatpush2.xpose.msra.mxu0 0.0
        %1573 = vmatprep.subr.mxu0 0.0
        %1574 = vmatpush2.xpose.msra.mxu0 0.0
        %1575 = vmatprep.subr.mxu0 0.0
        %1576 = vmatpush2.xpose.msra.mxu0 0.0
        %1577 = vmatprep.subr.mxu0 0.0
        %1578 = vmatpush2.xpose.msra.mxu0 0.0
        %1579 = vmatprep.subr.mxu0 0.0
        %1580 = vmatpush2.xpose.msra.mxu0 0.0
        %1581 = vmatprep.subr.mxu0 0.0
        %1582 = vmatpush2.xpose.msra.mxu0 0.0
        %1583 = vmatprep.subr.mxu0 0.0
        %1584 = vmatpush2.xpose.msra.mxu0 0.0
        %1585 = vmatprep.subr.mxu0 0.0
        %1586 = vmatpush2.xpose.msra.mxu0 0.0
        %1587 = vmatprep.subr.mxu0 0.0
        %1588 = vmatpush2.xpose.msra.mxu0 0.0
        %1589 = vmatprep.subr.mxu0 0.0
        %1590 = vmatpush2.xpose.msra.mxu0 0.0
        %1591 = vmatprep.subr.mxu0 0.0
        %1592 = vmatpush2.xpose.msra.mxu0 0.0
        %1593 = vmatprep.subr.mxu0 0.0
        %1594 = vmatpush2.xpose.msra.mxu0 0.0
        %1595 = vmatprep.subr.mxu0 0.0
        %1596 = vmatpush2.xpose.msra.mxu0 0.0
        %1597 = vmatprep.subr.mxu0 0.0
        %1598 = vmatpush2.xpose.msra.mxu0 0.0
        %1599 = vmatprep.subr.mxu0 0.0
        %1600 = vmatpush2.xpose.msra.mxu0 0.0
        %1601 = vmatprep.subr.mxu0 0.0
        %1602 = vmatpush2.xpose.msra.mxu0 0.0
        %1603 = vmatprep.mubr.f32.mxu0 0.0
        %1604 = vmatmul.mubr.f32.gmra.mxu0 %v1534
        %v1605 = vpop.f32.mrf.mxu0
        %v1606 = vadd.f32 0.0, %v1605
        %v1607 = vpop.f32.mrf.mxu0
        %1608 = vdwg.mxu0
        %v1610 = vsel %vm908, %v1365, 0
        %v1613 = vsel %vm908, %v1240, 0
        %1615 = vmatprep.subr.mxu0 0.0
        %1616 = vmatpush1.xpose.msra.mxu0 0.0
        %1617 = vmatprep.subr.mxu0 0.0
        %1618 = vmatpush1.xpose.msra.mxu0 0.0
        %1619 = vmatprep.subr.mxu0 0.0
        %1620 = vmatpush1.xpose.msra.mxu0 0.0
        %1621 = vmatprep.subr.mxu0 0.0
        %1622 = vmatpush1.xpose.msra.mxu0 0.0
        %1623 = vmatprep.subr.mxu0 0.0
        %1624 = vmatpush1.xpose.msra.mxu0 0.0
        %1625 = vmatprep.subr.mxu0 0.0
        %1626 = vmatpush1.xpose.msra.mxu0 0.0
        %1627 = vmatprep.subr.mxu0 0.0
        %1628 = vmatpush1.xpose.msra.mxu0 0.0
        %1629 = vmatprep.subr.mxu0 0.0
        %1630 = vmatpush1.xpose.msra.mxu0 0.0
        %1631 = vmatprep.subr.mxu0 0.0
        %1632 = vmatpush1.xpose.msra.mxu0 0.0
        %1633 = vmatprep.subr.mxu0 0.0
        %1634 = vmatpush1.xpose.msra.mxu0 0.0
        %1635 = vmatprep.subr.mxu0 0.0
        %1636 = vmatpush1.xpose.msra.mxu0 0.0
        %1637 = vmatprep.subr.mxu0 0.0
        %1638 = vmatpush1.xpose.msra.mxu0 0.0
        %1639 = vmatprep.subr.mxu0 0.0
        %1640 = vmatpush1.xpose.msra.mxu0 0.0
        %1641 = vmatprep.subr.mxu0 0.0
        %1642 = vmatpush1.xpose.msra.mxu0 0.0
        %1643 = vmatprep.subr.mxu0 0.0
        %1644 = vmatpush1.xpose.msra.mxu0 0.0
        %1645 = vmatprep.subr.mxu0 0.0
        %1646 = vmatpush1.xpose.msra.mxu0 %v1613
        %1647 = vmatprep.subr.mxu0 0.0
        %1648 = vmatpush2.xpose.msra.mxu0 0.0
        %1649 = vmatprep.subr.mxu0 0.0
        %1650 = vmatpush2.xpose.msra.mxu0 0.0
        %1651 = vmatprep.subr.mxu0 0.0
        %1652 = vmatpush2.xpose.msra.mxu0 0.0
        %1653 = vmatprep.subr.mxu0 0.0
        %1654 = vmatpush2.xpose.msra.mxu0 0.0
        %1655 = vmatprep.subr.mxu0 0.0
        %1656 = vmatpush2.xpose.msra.mxu0 0.0
        %1657 = vmatprep.subr.mxu0 0.0
        %1658 = vmatpush2.xpose.msra.mxu0 0.0
        %1659 = vmatprep.subr.mxu0 0.0
        %1660 = vmatpush2.xpose.msra.mxu0 0.0
        %1661 = vmatprep.subr.mxu0 0.0
        %1662 = vmatpush2.xpose.msra.mxu0 0.0
        %1663 = vmatprep.subr.mxu0 0.0
        %1664 = vmatpush2.xpose.msra.mxu0 0.0
        %1665 = vmatprep.subr.mxu0 0.0
        %1666 = vmatpush2.xpose.msra.mxu0 0.0
        %1667 = vmatprep.subr.mxu0 0.0
        %1668 = vmatpush2.xpose.msra.mxu0 0.0
        %1669 = vmatprep.subr.mxu0 0.0
        %1670 = vmatpush2.xpose.msra.mxu0 0.0
        %1671 = vmatprep.subr.mxu0 0.0
        %1672 = vmatpush2.xpose.msra.mxu0 0.0
        %1673 = vmatprep.subr.mxu0 0.0
        %1674 = vmatpush2.xpose.msra.mxu0 0.0
        %1675 = vmatprep.subr.mxu0 0.0
        %1676 = vmatpush2.xpose.msra.mxu0 0.0
        %1677 = vmatprep.subr.mxu0 0.0
        %1678 = vmatpush2.xpose.msra.mxu0 0.0
        %1679 = vmatprep.mubr.f32.mxu0 0.0
        %1680 = vmatmul.mubr.f32.gmra.mxu0 %v1610
        %v1681 = vpop.f32.mrf.mxu0
        %v1682 = vadd.f32 0.0, %v1681
        %v1683 = vpop.f32.mrf.mxu0
        %1684 = vdwg.mxu0
        %1685 = vxpose.xlu0.b32.start [1/16] %v1454, 128
        %1686 = vxpose.xlu0.b32.cont [2/16] 0.0, 128
        %1687 = vxpose.xlu0.b32.cont [3/16] 0.0, 128
        %1688 = vxpose.xlu0.b32.cont [4/16] 0.0, 128
        %1689 = vxpose.xlu0.b32.cont [5/16] 0.0, 128
        %1690 = vxpose.xlu0.b32.cont [6/16] 0.0, 128
        %1691 = vxpose.xlu0.b32.cont [7/16] 0.0, 128
        %1692 = vxpose.xlu0.b32.cont [8/16] 0.0, 128
        %1693 = vxpose.xlu0.b32.cont [9/16] 0.0, 128
        %1694 = vxpose.xlu0.b32.cont [10/16] 0.0, 128
        %1695 = vxpose.xlu0.b32.cont [11/16] 0.0, 128
        %1696 = vxpose.xlu0.b32.cont [12/16] 0.0, 128
        %1697 = vxpose.xlu0.b32.cont [13/16] 0.0, 128
        %1698 = vxpose.xlu0.b32.cont [14/16] 0.0, 128
        %1699 = vxpose.xlu0.b32.cont [15/16] 0.0, 128
        %1700 = vxpose.xlu0.b32.end [16/16] 0.0, 128
        %v1701 = vpop.trf.xlu0
        %v1702 = vpop.trf.xlu0
        %v1703 = vpop.trf.xlu0
        %v1704 = vpop.trf.xlu0
        %v1705 = vpop.trf.xlu0
        %v1706 = vpop.trf.xlu0
        %v1707 = vpop.trf.xlu0
        %v1708 = vpop.trf.xlu0
        %v1709 = vpop.trf.xlu0
        %v1710 = vpop.trf.xlu0
        %v1711 = vpop.trf.xlu0
        %v1712 = vpop.trf.xlu0
        %v1713 = vpop.trf.xlu0
        %v1714 = vpop.trf.xlu0
        %v1715 = vpop.trf.xlu0
        %v1716 = vpop.trf.xlu0
        %1717 = vxpose.xlu0.b32.start [1/16] %v1530, 128
        %1718 = vxpose.xlu0.b32.cont [2/16] 0.0, 128
        %1719 = vxpose.xlu0.b32.cont [3/16] 0.0, 128
        %1720 = vxpose.xlu0.b32.cont [4/16] 0.0, 128
        %1721 = vxpose.xlu0.b32.cont [5/16] 0.0, 128
        %1722 = vxpose.xlu0.b32.cont [6/16] 0.0, 128
        %1723 = vxpose.xlu0.b32.cont [7/16] 0.0, 128
        %1724 = vxpose.xlu0.b32.cont [8/16] 0.0, 128
        %1725 = vxpose.xlu0.b32.cont [9/16] 0.0, 128
        %1726 = vxpose.xlu0.b32.cont [10/16] 0.0, 128
        %1727 = vxpose.xlu0.b32.cont [11/16] 0.0, 128
        %1728 = vxpose.xlu0.b32.cont [12/16] 0.0, 128
        %1729 = vxpose.xlu0.b32.cont [13/16] 0.0, 128
        %1730 = vxpose.xlu0.b32.cont [14/16] 0.0, 128
        %1731 = vxpose.xlu0.b32.cont [15/16] 0.0, 128
        %1732 = vxpose.xlu0.b32.end [16/16] 0.0, 128
        %v1733 = vpop.trf.xlu0
        %v1734 = vpop.trf.xlu0
        %v1735 = vpop.trf.xlu0
        %v1736 = vpop.trf.xlu0
        %v1737 = vpop.trf.xlu0
        %v1738 = vpop.trf.xlu0
        %v1739 = vpop.trf.xlu0
        %v1740 = vpop.trf.xlu0
        %v1741 = vpop.trf.xlu0
        %v1742 = vpop.trf.xlu0
        %v1743 = vpop.trf.xlu0
        %v1744 = vpop.trf.xlu0
        %v1745 = vpop.trf.xlu0
        %v1746 = vpop.trf.xlu0
        %v1747 = vpop.trf.xlu0
        %v1748 = vpop.trf.xlu0
        %1749 = vxpose.xlu0.b32.start [1/16] %v1606, 128
        %1750 = vxpose.xlu0.b32.cont [2/16] 0.0, 128
        %1751 = vxpose.xlu0.b32.cont [3/16] 0.0, 128
        %1752 = vxpose.xlu0.b32.cont [4/16] 0.0, 128
        %1753 = vxpose.xlu0.b32.cont [5/16] 0.0, 128
        %1754 = vxpose.xlu0.b32.cont [6/16] 0.0, 128
        %1755 = vxpose.xlu0.b32.cont [7/16] 0.0, 128
        %1756 = vxpose.xlu0.b32.cont [8/16] 0.0, 128
        %1757 = vxpose.xlu0.b32.cont [9/16] 0.0, 128
        %1758 = vxpose.xlu0.b32.cont [10/16] 0.0, 128
        %1759 = vxpose.xlu0.b32.cont [11/16] 0.0, 128
        %1760 = vxpose.xlu0.b32.cont [12/16] 0.0, 128
        %1761 = vxpose.xlu0.b32.cont [13/16] 0.0, 128
        %1762 = vxpose.xlu0.b32.cont [14/16] 0.0, 128
        %1763 = vxpose.xlu0.b32.cont [15/16] 0.0, 128
        %1764 = vxpose.xlu0.b32.end [16/16] 0.0, 128
        %v1765 = vpop.trf.xlu0
        %v1766 = vpop.trf.xlu0
        %v1767 = vpop.trf.xlu0
        %v1768 = vpop.trf.xlu0
        %v1769 = vpop.trf.xlu0
        %v1770 = vpop.trf.xlu0
        %v1771 = vpop.trf.xlu0
        %v1772 = vpop.trf.xlu0
        %v1773 = vpop.trf.xlu0
        %v1774 = vpop.trf.xlu0
        %v1775 = vpop.trf.xlu0
        %v1776 = vpop.trf.xlu0
        %v1777 = vpop.trf.xlu0
        %v1778 = vpop.trf.xlu0
        %v1779 = vpop.trf.xlu0
        %v1780 = vpop.trf.xlu0
        %1781 = vxpose.xlu0.b32.start [1/16] %v1682, 128
        %1782 = vxpose.xlu0.b32.cont [2/16] 0.0, 128
        %1783 = vxpose.xlu0.b32.cont [3/16] 0.0, 128
        %1784 = vxpose.xlu0.b32.cont [4/16] 0.0, 128
        %1785 = vxpose.xlu0.b32.cont [5/16] 0.0, 128
        %1786 = vxpose.xlu0.b32.cont [6/16] 0.0, 128
        %1787 = vxpose.xlu0.b32.cont [7/16] 0.0, 128
        %1788 = vxpose.xlu0.b32.cont [8/16] 0.0, 128
        %1789 = vxpose.xlu0.b32.cont [9/16] 0.0, 128
        %1790 = vxpose.xlu0.b32.cont [10/16] 0.0, 128
        %1791 = vxpose.xlu0.b32.cont [11/16] 0.0, 128
        %1792 = vxpose.xlu0.b32.cont [12/16] 0.0, 128
        %1793 = vxpose.xlu0.b32.cont [13/16] 0.0, 128
        %1794 = vxpose.xlu0.b32.cont [14/16] 0.0, 128
        %1795 = vxpose.xlu0.b32.cont [15/16] 0.0, 128
        %1796 = vxpose.xlu0.b32.end [16/16] 0.0, 128
        %v1797 = vpop.trf.xlu0
        %v1798 = vpop.trf.xlu0
        %v1799 = vpop.trf.xlu0
        %v1800 = vpop.trf.xlu0
        %v1801 = vpop.trf.xlu0
        %v1802 = vpop.trf.xlu0
        %v1803 = vpop.trf.xlu0
        %v1804 = vpop.trf.xlu0
        %v1805 = vpop.trf.xlu0
        %v1806 = vpop.trf.xlu0
        %v1807 = vpop.trf.xlu0
        %v1808 = vpop.trf.xlu0
        %v1809 = vpop.trf.xlu0
        %v1810 = vpop.trf.xlu0
        %v1811 = vpop.trf.xlu0
        %v1812 = vpop.trf.xlu0
        %v1813 = vcombine.low %v1701, %v1765
        %v1814 = vcombine.high %v1701, %v1765
        %v1816 = vunpack.c.l.s4 1983009808
        %v1817 = vunpack.c.0.s8 %v1816
        %v1818 = vlaneseq
        %v1819 = vshrl.u32 %v1818, 7
        %v1820 = vsub.s32 %v1817, %v1819
        %v1821 = vrot.slane %v1813, %v1820
        %v1823 = vunpack.c.l.s4 1983009808
        %v1824 = vunpack.c.0.s8 %v1823
        %v1825 = vlaneseq
        %v1826 = vshrl.u32 %v1825, 7
        %v1827 = vsub.s32 %v1824, %v1826
        %v1828 = vrot.slane %v1814, %v1827
        %v1829 = vcombine.low %v1733, %v1797
        %v1830 = vcombine.high %v1733, %v1797
        %v1832 = vunpack.c.l.s4 1983009808
        %v1833 = vunpack.c.0.s8 %v1832
        %v1834 = vlaneseq
        %v1835 = vshrl.u32 %v1834, 7
        %v1836 = vsub.s32 %v1833, %v1835
        %v1837 = vrot.slane %v1829, %v1836
        %v1839 = vunpack.c.l.s4 1983009808
        %v1840 = vunpack.c.0.s8 %v1839
        %v1841 = vlaneseq
        %v1842 = vshrl.u32 %v1841, 7
        %v1843 = vsub.s32 %v1840, %v1842
        %v1844 = vrot.slane %v1830, %v1843
        %v1845 = vcombine.low %v1821, %v1837
        %v1846 = vcombine.high %v1821, %v1837
        %v1848 = vunpack.c.l.s4 1934713408
        %v1849 = vunpack.c.0.s8 %v1848
        %v1850 = vlaneseq
        %v1851 = vshrl.u32 %v1850, 7
        %v1852 = vsub.s32 %v1849, %v1851
        %v1853 = vrot.slane %v1845, %v1852
        %v1855 = vunpack.c.l.s4 1934713408
        %v1856 = vunpack.c.0.s8 %v1855
        %v1857 = vlaneseq
        %v1858 = vshrl.u32 %v1857, 7
        %v1859 = vsub.s32 %v1856, %v1858
        %v1860 = vrot.slane %v1846, %v1859
        %v1861 = vcombine.low %v1828, %v1844
        %v1862 = vcombine.high %v1828, %v1844
        %v1864 = vunpack.c.l.s4 1934713408
        %v1865 = vunpack.c.0.s8 %v1864
        %v1866 = vlaneseq
        %v1867 = vshrl.u32 %v1866, 7
        %v1868 = vsub.s32 %v1865, %v1867
        %v1869 = vrot.slane %v1861, %v1868
        %v1871 = vunpack.c.l.s4 1934713408
        %v1872 = vunpack.c.0.s8 %v1871
        %v1873 = vlaneseq
        %v1874 = vshrl.u32 %v1873, 7
        %v1875 = vsub.s32 %v1872, %v1874
        %v1876 = vrot.slane %v1862, %v1875
        %v1877 = vcombine.high %v1853, 0.0
        %v1878 = vcombine.high %v1860, 0.0
        %v1879 = vcombine.high %v1869, 0.0
        %v1880 = vcombine.high %v1876, 0.0
        %v1881 = vcombine.low %v1853, %v1860
        %v1883 = vunpack.c.l.s4 1983009808
        %v1884 = vunpack.c.0.s8 %v1883
        %v1885 = vlaneseq
        %v1886 = vshrl.u32 %v1885, 7
        %v1887 = vsub.s32 %v1884, %v1886
        %v1888 = vrot.slane %v1881, %v1887
        %v1889 = vcombine.low %v1877, %v1878
        %v1891 = vunpack.c.l.s4 1983009808
        %v1892 = vunpack.c.0.s8 %v1891
        %v1893 = vlaneseq
        %v1894 = vshrl.u32 %v1893, 7
        %v1895 = vsub.s32 %v1892, %v1894
        %v1896 = vrot.slane %v1889, %v1895
        %v1897 = vcombine.low %v1869, %v1876
        %v1899 = vunpack.c.l.s4 1983009808
        %v1900 = vunpack.c.0.s8 %v1899
        %v1901 = vlaneseq
        %v1902 = vshrl.u32 %v1901, 7
        %v1903 = vsub.s32 %v1900, %v1902
        %v1904 = vrot.slane %v1897, %v1903
        %v1905 = vcombine.low %v1879, %v1880
        %v1907 = vunpack.c.l.s4 1983009808
        %v1908 = vunpack.c.0.s8 %v1907
        %v1909 = vlaneseq
        %v1910 = vshrl.u32 %v1909, 7
        %v1911 = vsub.s32 %v1908, %v1910
        %v1912 = vrot.slane %v1905, %v1911
        %v1913 = vcombine.low %v1888, %v1896
        %v1914 = vcombine.high %v1888, %v1896
        %v1916 = vunpack.c.l.s4 1934713408
        %v1917 = vunpack.c.0.s8 %v1916
        %v1918 = vlaneseq
        %v1919 = vshrl.u32 %v1918, 7
        %v1920 = vsub.s32 %v1917, %v1919
        %v1921 = vrot.slane %v1913, %v1920
        %v1923 = vunpack.c.l.s4 1934713408
        %v1924 = vunpack.c.0.s8 %v1923
        %v1925 = vlaneseq
        %v1926 = vshrl.u32 %v1925, 7
        %v1927 = vsub.s32 %v1924, %v1926
        %v1928 = vrot.slane %v1914, %v1927
        %v1929 = vcombine.low %v1904, %v1912
        %v1930 = vcombine.high %v1904, %v1912
        %v1932 = vunpack.c.l.s4 1934713408
        %v1933 = vunpack.c.0.s8 %v1932
        %v1934 = vlaneseq
        %v1935 = vshrl.u32 %v1934, 7
        %v1936 = vsub.s32 %v1933, %v1935
        %v1937 = vrot.slane %v1929, %v1936
        %v1939 = vunpack.c.l.s4 1934713408
        %v1940 = vunpack.c.0.s8 %v1939
        %v1941 = vlaneseq
        %v1942 = vshrl.u32 %v1941, 7
        %v1943 = vsub.s32 %v1940, %v1942
        %v1944 = vrot.slane %v1930, %v1943
        %v1945 = vcombine.low %v1921, %v1937
        %v1946 = vcombine.high %v1921, %v1937
        %v1947 = vcombine.low %v1928, %v1944
        %v1948 = vcombine.high %v1928, %v1944
        %1950 = vrot.lane.b32.xlu0 %v1946, 8
        %v1951 = vpop.permute.xlu0 %1950
        %1954 = vrot.lane.b32.xlu0 %v1947, 16
        %v1955 = vpop.permute.xlu0 %1954
        %1958 = vrot.lane.b32.xlu0 %v1948, 24
        %v1959 = vpop.permute.xlu0 %1958
        %v1961 = vsel %vm908, %v1945, %v1951
        %vm1962 = vcmask 130048
        %v1963 = vsel %vm1962, %v1961, %v1955
        %vm1964 = vcmask 195584
        %v1965 = vsel %vm1964, %v1963, %v1959
        %v1966 = vld [vmem:[%s6] sm:$0xff]
        %v1967 = vld [vmem:[%s6 + $0x8] sm:$0xff]
        %v1968 = vld [vmem:[%s6 + $0x10] sm:$0xff]
        %v1969 = vld [vmem:[%s6 + $0x18] sm:$0xff]
        %v1970 = vld [vmem:[%s7] sm:$0x1]
        %v1972 = vlaneseq
        %v1973 = vshrl.u32 %v1972, 7
        %v1974 = vsub.s32 0, %v1973
        %v1975 = vrot.slane %v1970, %v1974
        %v1978 = vsel %vm641, %v1965, 0
        %1980 = vmatprep.subr.mxu0 0.0
        %1981 = vmatpush1.msra.mxu0 0.0
        %1982 = vmatprep.subr.mxu0 0.0
        %1983 = vmatpush1.msra.mxu0 0.0
        %1984 = vmatprep.subr.mxu0 0.0
        %1985 = vmatpush1.msra.mxu0 0.0
        %1986 = vmatprep.subr.mxu0 0.0
        %1987 = vmatpush1.msra.mxu0 0.0
        %1988 = vmatprep.subr.mxu0 0.0
        %1989 = vmatpush1.msra.mxu0 0.0
        %1990 = vmatprep.subr.mxu0 0.0
        %1991 = vmatpush1.msra.mxu0 0.0
        %1992 = vmatprep.subr.mxu0 0.0
        %1993 = vmatpush1.msra.mxu0 0.0
        %1994 = vmatprep.subr.mxu0 0.0
        %1995 = vmatpush1.msra.mxu0 0.0
        %1996 = vmatprep.subr.mxu0 0.0
        %1997 = vmatpush1.msra.mxu0 0.0
        %1998 = vmatprep.subr.mxu0 0.0
        %1999 = vmatpush1.msra.mxu0 0.0
        %2000 = vmatprep.subr.mxu0 0.0
        %2001 = vmatpush1.msra.mxu0 0.0
        %2002 = vmatprep.subr.mxu0 0.0
        %2003 = vmatpush1.msra.mxu0 0.0
        %2004 = vmatprep.subr.mxu0 0.0
        %2005 = vmatpush1.msra.mxu0 %v1969
        %2006 = vmatprep.subr.mxu0 0.0
        %2007 = vmatpush1.msra.mxu0 %v1968
        %2008 = vmatprep.subr.mxu0 0.0
        %2009 = vmatpush1.msra.mxu0 %v1967
        %2010 = vmatprep.subr.mxu0 0.0
        %2011 = vmatpush1.msra.mxu0 %v1966
        %2012 = vmatprep.subr.mxu0 0.0
        %2013 = vmatpush2.msra.mxu0 0.0
        %2014 = vmatprep.subr.mxu0 0.0
        %2015 = vmatpush2.msra.mxu0 0.0
        %2016 = vmatprep.subr.mxu0 0.0
        %2017 = vmatpush2.msra.mxu0 0.0
        %2018 = vmatprep.subr.mxu0 0.0
        %2019 = vmatpush2.msra.mxu0 0.0
        %2020 = vmatprep.subr.mxu0 0.0
        %2021 = vmatpush2.msra.mxu0 0.0
        %2022 = vmatprep.subr.mxu0 0.0
        %2023 = vmatpush2.msra.mxu0 0.0
        %2024 = vmatprep.subr.mxu0 0.0
        %2025 = vmatpush2.msra.mxu0 0.0
        %2026 = vmatprep.subr.mxu0 0.0
        %2027 = vmatpush2.msra.mxu0 0.0
        %2028 = vmatprep.subr.mxu0 0.0
        %2029 = vmatpush2.msra.mxu0 0.0
        %2030 = vmatprep.subr.mxu0 0.0
        %2031 = vmatpush2.msra.mxu0 0.0
        %2032 = vmatprep.subr.mxu0 0.0
        %2033 = vmatpush2.msra.mxu0 0.0
        %2034 = vmatprep.subr.mxu0 0.0
        %2035 = vmatpush2.msra.mxu0 0.0
        %2036 = vmatprep.subr.mxu0 0.0
        %2037 = vmatpush2.msra.mxu0 0.0
        %2038 = vmatprep.subr.mxu0 0.0
        %2039 = vmatpush2.msra.mxu0 0.0
        %2040 = vmatprep.subr.mxu0 0.0
        %2041 = vmatpush2.msra.mxu0 0.0
        %2042 = vmatprep.subr.mxu0 0.0
        %2043 = vmatpush2.msra.mxu0 0.0
        %2044 = vmatprep.mubr.f32.mxu0 0.0
        %2045 = vmatmul.mubr.f32.gmra.mxu0 %v1978
        %v2046 = vpop.f32.mrf.mxu0
        %v2047 = vadd.f32 %v1975, %v2046
        %v2048 = vpop.f32.mrf.mxu0
        %2049 = vdwg.mxu0
        %v2050 = vadd.f32 %v2047, %v669
        %v2051 = vld [vmem:[%s8] sm:$0x1]
        %v2052 = vld [vmem:[%s9] sm:$0x1]
        %v2053 = vsel %vm641, %v2050, 0.0
        %2054 = vadd.xlane.f32.xlu0 %v2053
        %v2055 = vpop.xlane.xlu0 %2054
        %v2056 = vmul.f32 %v2055, %v645
        %v2057 = vsub.f32 %v2050, %v2056
        %v2058 = vmul.f32 %v2057, %v2057
        %v2059 = vsel %vm641, %v2058, 0.0
        %2060 = vadd.xlane.f32.xlu0 %v2059
        %v2061 = vpop.xlane.xlu0 %2060
        %v2062 = vmul.f32 %v2061, %v645
        %v2063 = vadd.f32 %v2062, 1e-12
        %v2064 = vrsqrt.pop %v2063
        %v2065 = vmul.f32 %v2057, %v2064
        %v2067 = vlaneseq
        %v2068 = vshrl.u32 %v2067, 7
        %v2069 = vsub.s32 0, %v2068
        %v2070 = vrot.slane %v2051, %v2069
        %v2072 = vmul.f32 %v2065, %v2070
        %v2074 = vlaneseq
        %v2075 = vshrl.u32 %v2074, 7
        %v2076 = vsub.s32 0, %v2075
        %v2077 = vrot.slane %v2052, %v2076
        %v2079 = vadd.f32 %v2072, %v2077
        %v2080 = vld [vmem:[%s10] sm:$0xff]
        %v2081 = vld [vmem:[%s10 + $0x8] sm:$0xff]
        %v2082 = vld [vmem:[%s10 + $0x10] sm:$0xff]
        %v2083 = vld [vmem:[%s10 + $0x18] sm:$0xff]
        %v2084 = vld [vmem:[%s11] sm:$0x1]
        %v2086 = vlaneseq
        %v2087 = vshrl.u32 %v2086, 7
        %v2088 = vsub.s32 0, %v2087
        %v2089 = vrot.slane %v2084, %v2088
        %v2092 = vsel %vm641, %v2079, 0
        %2094 = vmatprep.subr.mxu0 0.0
        %2095 = vmatpush1.msra.mxu0 0.0
        %2096 = vmatprep.subr.mxu0 0.0
        %2097 = vmatpush1.msra.mxu0 0.0
        %2098 = vmatprep.subr.mxu0 0.0
        %2099 = vmatpush1.msra.mxu0 0.0
        %2100 = vmatprep.subr.mxu0 0.0
        %2101 = vmatpush1.msra.mxu0 0.0
        %2102 = vmatprep.subr.mxu0 0.0
        %2103 = vmatpush1.msra.mxu0 0.0
        %2104 = vmatprep.subr.mxu0 0.0
        %2105 = vmatpush1.msra.mxu0 0.0
        %2106 = vmatprep.subr.mxu0 0.0
        %2107 = vmatpush1.msra.mxu0 0.0
        %2108 = vmatprep.subr.mxu0 0.0
        %2109 = vmatpush1.msra.mxu0 0.0
        %2110 = vmatprep.subr.mxu0 0.0
        %2111 = vmatpush1.msra.mxu0 0.0
        %2112 = vmatprep.subr.mxu0 0.0
        %2113 = vmatpush1.msra.mxu0 0.0
        %2114 = vmatprep.subr.mxu0 0.0
        %2115 = vmatpush1.msra.mxu0 0.0
        %2116 = vmatprep.subr.mxu0 0.0
        %2117 = vmatpush1.msra.mxu0 0.0
        %2118 = vmatprep.subr.mxu0 0.0
        %2119 = vmatpush1.msra.mxu0 %v2083
        %2120 = vmatprep.subr.mxu0 0.0
        %2121 = vmatpush1.msra.mxu0 %v2082
        %2122 = vmatprep.subr.mxu0 0.0
        %2123 = vmatpush1.msra.mxu0 %v2081
        %2124 = vmatprep.subr.mxu0 0.0
        %2125 = vmatpush1.msra.mxu0 %v2080
        %2126 = vmatprep.subr.mxu0 0.0
        %2127 = vmatpush2.msra.mxu0 0.0
        %2128 = vmatprep.subr.mxu0 0.0
        %2129 = vmatpush2.msra.mxu0 0.0
        %2130 = vmatprep.subr.mxu0 0.0
        %2131 = vmatpush2.msra.mxu0 0.0
        %2132 = vmatprep.subr.mxu0 0.0
        %2133 = vmatpush2.msra.mxu0 0.0
        %2134 = vmatprep.subr.mxu0 0.0
        %2135 = vmatpush2.msra.mxu0 0.0
        %2136 = vmatprep.subr.mxu0 0.0
        %2137 = vmatpush2.msra.mxu0 0.0
        %2138 = vmatprep.subr.mxu0 0.0
        %2139 = vmatpush2.msra.mxu0 0.0
        %2140 = vmatprep.subr.mxu0 0.0
        %2141 = vmatpush2.msra.mxu0 0.0
        %2142 = vmatprep.subr.mxu0 0.0
        %2143 = vmatpush2.msra.mxu0 0.0
        %2144 = vmatprep.subr.mxu0 0.0
        %2145 = vmatpush2.msra.mxu0 0.0
        %2146 = vmatprep.subr.mxu0 0.0
        %2147 = vmatpush2.msra.mxu0 0.0
        %2148 = vmatprep.subr.mxu0 0.0
        %2149 = vmatpush2.msra.mxu0 0.0
        %2150 = vmatprep.subr.mxu0 0.0
        %2151 = vmatpush2.msra.mxu0 0.0
        %2152 = vmatprep.subr.mxu0 0.0
        %2153 = vmatpush2.msra.mxu0 0.0
        %2154 = vmatprep.subr.mxu0 0.0
        %2155 = vmatpush2.msra.mxu0 0.0
        %2156 = vmatprep.subr.mxu0 0.0
        %2157 = vmatpush2.msra.mxu0 0.0
        %2158 = vmatprep.mubr.f32.mxu0 0.0
        %2159 = vmatmul.mubr.f32.gmra.mxu0 %v2092
        %v2160 = vpop.f32.mrf.mxu0
        %v2161 = vadd.f32 %v2089, %v2160
        %v2162 = vpop.f32.mrf.mxu0
        %2163 = vdwg.mxu0
        %v2164 = vmul.f32 %v2161, 0.5
        %v2165 = vmul.f32 %v2161, 0.044715
        %v2166 = vmul.f32 %v2165, %v2161
        %v2167 = vmul.f32 %v2166, %v2161
        %v2168 = vadd.f32 %v2161, %v2167
        %v2169 = vmul.f32 %v2168, 0.7978846
        %v2170 = vtanh.pop %v2169
        %v2171 = vadd.f32 %v2170, 1.0
        %v2172 = vmul.f32 %v2164, %v2171
        %v2173 = vld [vmem:[%s12] sm:$0xff]
        %v2174 = vld [vmem:[%s12 + $0x8] sm:$0xff]
        %v2175 = vld [vmem:[%s12 + $0x10] sm:$0xff]
        %v2176 = vld [vmem:[%s12 + $0x18] sm:$0xff]
        %v2177 = vld [vmem:[%s12 + $0x20] sm:$0xff]
        %v2178 = vld [vmem:[%s12 + $0x28] sm:$0xff]
        %v2179 = vld [vmem:[%s12 + $0x30] sm:$0xff]
        %v2180 = vld [vmem:[%s12 + $0x38] sm:$0xff]
        %v2181 = vld [vmem:[%s13] sm:$0x1]
        %v2183 = vlaneseq
        %v2184 = vshrl.u32 %v2183, 7
        %v2185 = vsub.s32 0, %v2184
        %v2186 = vrot.slane %v2181, %v2185
        %vm2188 = vcmask 523264
        %v2190 = vsel %vm2188, %v2172, 0
        %2192 = vmatprep.subr.mxu0 0.0
        %2193 = vmatpush1.msra.mxu0 0.0
        %2194 = vmatprep.subr.mxu0 0.0
        %2195 = vmatpush1.msra.mxu0 0.0
        %2196 = vmatprep.subr.mxu0 0.0
        %2197 = vmatpush1.msra.mxu0 0.0
        %2198 = vmatprep.subr.mxu0 0.0
        %2199 = vmatpush1.msra.mxu0 0.0
        %2200 = vmatprep.subr.mxu0 0.0
        %2201 = vmatpush1.msra.mxu0 0.0
        %2202 = vmatprep.subr.mxu0 0.0
        %2203 = vmatpush1.msra.mxu0 0.0
        %2204 = vmatprep.subr.mxu0 0.0
        %2205 = vmatpush1.msra.mxu0 0.0
        %2206 = vmatprep.subr.mxu0 0.0
        %2207 = vmatpush1.msra.mxu0 0.0
        %2208 = vmatprep.subr.mxu0 0.0
        %2209 = vmatpush1.msra.mxu0 %v2180
        %2210 = vmatprep.subr.mxu0 0.0
        %2211 = vmatpush1.msra.mxu0 %v2179
        %2212 = vmatprep.subr.mxu0 0.0
        %2213 = vmatpush1.msra.mxu0 %v2178
        %2214 = vmatprep.subr.mxu0 0.0
        %2215 = vmatpush1.msra.mxu0 %v2177
        %2216 = vmatprep.subr.mxu0 0.0
        %2217 = vmatpush1.msra.mxu0 %v2176
        %2218 = vmatprep.subr.mxu0 0.0
        %2219 = vmatpush1.msra.mxu0 %v2175
        %2220 = vmatprep.subr.mxu0 0.0
        %2221 = vmatpush1.msra.mxu0 %v2174
        %2222 = vmatprep.subr.mxu0 0.0
        %2223 = vmatpush1.msra.mxu0 %v2173
        %2224 = vmatprep.subr.mxu0 0.0
        %2225 = vmatpush2.msra.mxu0 0.0
        %2226 = vmatprep.subr.mxu0 0.0
        %2227 = vmatpush2.msra.mxu0 0.0
        %2228 = vmatprep.subr.mxu0 0.0
        %2229 = vmatpush2.msra.mxu0 0.0
        %2230 = vmatprep.subr.mxu0 0.0
        %2231 = vmatpush2.msra.mxu0 0.0
        %2232 = vmatprep.subr.mxu0 0.0
        %2233 = vmatpush2.msra.mxu0 0.0
        %2234 = vmatprep.subr.mxu0 0.0
        %2235 = vmatpush2.msra.mxu0 0.0
        %2236 = vmatprep.subr.mxu0 0.0
        %2237 = vmatpush2.msra.mxu0 0.0
        %2238 = vmatprep.subr.mxu0 0.0
        %2239 = vmatpush2.msra.mxu0 0.0
        %2240 = vmatprep.subr.mxu0 0.0
        %2241 = vmatpush2.msra.mxu0 0.0
        %2242 = vmatprep.subr.mxu0 0.0
        %2243 = vmatpush2.msra.mxu0 0.0
        %2244 = vmatprep.subr.mxu0 0.0
        %2245 = vmatpush2.msra.mxu0 0.0
        %2246 = vmatprep.subr.mxu0 0.0
        %2247 = vmatpush2.msra.mxu0 0.0
        %2248 = vmatprep.subr.mxu0 0.0
        %2249 = vmatpush2.msra.mxu0 0.0
        %2250 = vmatprep.subr.mxu0 0.0
        %2251 = vmatpush2.msra.mxu0 0.0
        %2252 = vmatprep.subr.mxu0 0.0
        %2253 = vmatpush2.msra.mxu0 0.0
        %2254 = vmatprep.subr.mxu0 0.0
        %2255 = vmatpush2.msra.mxu0 0.0
        %2256 = vmatprep.mubr.f32.mxu0 0.0
        %2257 = vmatmul.mubr.f32.gmra.mxu0 %v2190
        %v2258 = vpop.f32.mrf.mxu0
        %v2259 = vadd.f32 %v2186, %v2258
        %v2260 = vpop.f32.mrf.mxu0
        %2261 = vdwg.mxu0
        %v2262 = vadd.f32 %v2259, %v2079
        %v2263 = vld [vmem:[%s14] sm:$0x1]
        %v2264 = vld [vmem:[%s15] sm:$0x1]
        %v2265 = vsel %vm641, %v2262, 0.0
        %2266 = vadd.xlane.f32.xlu0 %v2265
        %v2267 = vpop.xlane.xlu0 %2266
        %v2268 = vmul.f32 %v2267, %v645
        %v2269 = vsub.f32 %v2262, %v2268
        %v2270 = vmul.f32 %v2269, %v2269
        %v2271 = vsel %vm641, %v2270, 0.0
        %2272 = vadd.xlane.f32.xlu0 %v2271
        %v2273 = vpop.xlane.xlu0 %2272
        %v2274 = vmul.f32 %v2273, %v645
        %v2275 = vadd.f32 %v2274, 1e-12
        %v2276 = vrsqrt.pop %v2275
        %v2277 = vmul.f32 %v2269, %v2276
        %v2279 = vlaneseq
        %v2280 = vshrl.u32 %v2279, 7
        %v2281 = vsub.s32 0, %v2280
        %v2282 = vrot.slane %v2263, %v2281
        %v2284 = vmul.f32 %v2277, %v2282
        %v2286 = vlaneseq
        %v2287 = vshrl.u32 %v2286, 7
        %v2288 = vsub.s32 0, %v2287
        %v2289 = vrot.slane %v2264, %v2288
        %v2291 = vadd.f32 %v2284, %v2289
        %s2292 = scalar_lea.vmem %s4, 32
        %v2293 = vld [vmem:[%s2292] sm:$0xff]
        %v2294 = vld [vmem:[%s2292 + $0x8] sm:$0xff]
        %v2295 = vld [vmem:[%s2292 + $0x10] sm:$0xff]
        %v2296 = vld [vmem:[%s2292 + $0x18] sm:$0xff]
        %s2297 = scalar_lea.vmem %s5, 1
        %v2298 = vld [vmem:[%s2297] sm:$0x1]
        %v2300 = vlaneseq
        %v2301 = vshrl.u32 %v2300, 7
        %v2302 = vsub.s32 0, %v2301
        %v2303 = vrot.slane %v2298, %v2302
        %v2306 = vsel %vm641, %v2291, 0
        %2308 = vmatprep.subr.mxu0 0.0
        %2309 = vmatpush1.msra.mxu0 0.0
        %2310 = vmatprep.subr.mxu0 0.0
        %2311 = vmatpush1.msra.mxu0 0.0
        %2312 = vmatprep.subr.mxu0 0.0
        %2313 = vmatpush1.msra.mxu0 0.0
        %2314 = vmatprep.subr.mxu0 0.0
        %2315 = vmatpush1.msra.mxu0 0.0
        %2316 = vmatprep.subr.mxu0 0.0
        %2317 = vmatpush1.msra.mxu0 0.0
        %2318 = vmatprep.subr.mxu0 0.0
        %2319 = vmatpush1.msra.mxu0 0.0
        %2320 = vmatprep.subr.mxu0 0.0
        %2321 = vmatpush1.msra.mxu0 0.0
        %2322 = vmatprep.subr.mxu0 0.0
        %2323 = vmatpush1.msra.mxu0 0.0
        %2324 = vmatprep.subr.mxu0 0.0
        %2325 = vmatpush1.msra.mxu0 0.0
        %2326 = vmatprep.subr.mxu0 0.0
        %2327 = vmatpush1.msra.mxu0 0.0
        %2328 = vmatprep.subr.mxu0 0.0
        %2329 = vmatpush1.msra.mxu0 0.0
        %2330 = vmatprep.subr.mxu0 0.0
        %2331 = vmatpush1.msra.mxu0 0.0
        %2332 = vmatprep.subr.mxu0 0.0
        %2333 = vmatpush1.msra.mxu0 %v2296
        %2334 = vmatprep.subr.mxu0 0.0
        %2335 = vmatpush1.msra.mxu0 %v2295
        %2336 = vmatprep.subr.mxu0 0.0
        %2337 = vmatpush1.msra.mxu0 %v2294
        %2338 = vmatprep.subr.mxu0 0.0
        %2339 = vmatpush1.msra.mxu0 %v2293
        %2340 = vmatprep.subr.mxu0 0.0
        %2341 = vmatpush2.msra.mxu0 0.0
        %2342 = vmatprep.subr.mxu0 0.0
        %2343 = vmatpush2.msra.mxu0 0.0
        %2344 = vmatprep.subr.mxu0 0.0
        %2345 = vmatpush2.msra.mxu0 0.0
        %2346 = vmatprep.subr.mxu0 0.0
        %2347 = vmatpush2.msra.mxu0 0.0
        %2348 = vmatprep.subr.mxu0 0.0
        %2349 = vmatpush2.msra.mxu0 0.0
        %2350 = vmatprep.subr.mxu0 0.0
        %2351 = vmatpush2.msra.mxu0 0.0
        %2352 = vmatprep.subr.mxu0 0.0
        %2353 = vmatpush2.msra.mxu0 0.0
        %2354 = vmatprep.subr.mxu0 0.0
        %2355 = vmatpush2.msra.mxu0 0.0
        %2356 = vmatprep.subr.mxu0 0.0
        %2357 = vmatpush2.msra.mxu0 0.0
        %2358 = vmatprep.subr.mxu0 0.0
        %2359 = vmatpush2.msra.mxu0 0.0
        %2360 = vmatprep.subr.mxu0 0.0
        %2361 = vmatpush2.msra.mxu0 0.0
        %2362 = vmatprep.subr.mxu0 0.0
        %2363 = vmatpush2.msra.mxu0 0.0
        %2364 = vmatprep.subr.mxu0 0.0
        %2365 = vmatpush2.msra.mxu0 0.0
        %2366 = vmatprep.subr.mxu0 0.0
        %2367 = vmatpush2.msra.mxu0 0.0
        %2368 = vmatprep.subr.mxu0 0.0
        %2369 = vmatpush2.msra.mxu0 0.0
        %2370 = vmatprep.subr.mxu0 0.0
        %2371 = vmatpush2.msra.mxu0 0.0
        %2372 = vmatprep.mubr.f32.mxu0 0.0
        %2373 = vmatmul.mubr.f32.gmra.mxu0 %v2306
        %v2374 = vpop.f32.mrf.mxu0
        %v2375 = vadd.f32 %v2303, %v2374
        %v2376 = vpop.f32.mrf.mxu0
        %2377 = vdwg.mxu0
        %2379 = vrot.lane.b32.xlu0 %v2375, 120
        %v2380 = vpop.permute.xlu0 %2379
        %2381 = vrot.lane.b32.xlu0 %v2375, 112
        %v2382 = vpop.permute.xlu0 %2381
        %2383 = vrot.lane.b32.xlu0 %v2375, 104
        %v2384 = vpop.permute.xlu0 %2383
        %2385 = vrot.lane.b32.xlu0 %v2375, 96
        %v2386 = vpop.permute.xlu0 %2385
        %2387 = vrot.lane.b32.xlu0 %v2380, 96
        %v2388 = vpop.permute.xlu0 %2387
        %2389 = vrot.lane.b32.xlu0 %v2382, 96
        %v2390 = vpop.permute.xlu0 %2389
        %2391 = vrot.lane.b32.xlu0 %v2384, 96
        %v2392 = vpop.permute.xlu0 %2391
        %2397 = vxpose.xlu0.b32.start [1/16] %v2386, 128
        %2398 = vxpose.xlu0.b32.cont [2/16] 0.0, 128
        %2399 = vxpose.xlu0.b32.cont [3/16] 0.0, 128
        %2400 = vxpose.xlu0.b32.cont [4/16] 0.0, 128
        %2401 = vxpose.xlu0.b32.cont [5/16] 0.0, 128
        %2402 = vxpose.xlu0.b32.cont [6/16] 0.0, 128
        %2403 = vxpose.xlu0.b32.cont [7/16] 0.0, 128
        %2404 = vxpose.xlu0.b32.cont [8/16] 0.0, 128
        %2405 = vxpose.xlu0.b32.cont [9/16] 0.0, 128
        %2406 = vxpose.xlu0.b32.cont [10/16] 0.0, 128
        %2407 = vxpose.xlu0.b32.cont [11/16] 0.0, 128
        %2408 = vxpose.xlu0.b32.cont [12/16] 0.0, 128
        %2409 = vxpose.xlu0.b32.cont [13/16] 0.0, 128
        %2410 = vxpose.xlu0.b32.cont [14/16] 0.0, 128
        %2411 = vxpose.xlu0.b32.cont [15/16] 0.0, 128
        %2412 = vxpose.xlu0.b32.end [16/16] 0.0, 128
        %v2413 = vpop.trf.xlu0
        %v2414 = vpop.trf.xlu0
        %v2415 = vpop.trf.xlu0
        %v2416 = vpop.trf.xlu0
        %v2417 = vpop.trf.xlu0
        %v2418 = vpop.trf.xlu0
        %v2419 = vpop.trf.xlu0
        %v2420 = vpop.trf.xlu0
        %v2421 = vpop.trf.xlu0
        %v2422 = vpop.trf.xlu0
        %v2423 = vpop.trf.xlu0
        %v2424 = vpop.trf.xlu0
        %v2425 = vpop.trf.xlu0
        %v2426 = vpop.trf.xlu0
        %v2427 = vpop.trf.xlu0
        %v2428 = vpop.trf.xlu0
        %2429 = vxpose.xlu0.b32.start [1/16] %v2388, 128
        %2430 = vxpose.xlu0.b32.cont [2/16] 0.0, 128
        %2431 = vxpose.xlu0.b32.cont [3/16] 0.0, 128
        %2432 = vxpose.xlu0.b32.cont [4/16] 0.0, 128
        %2433 = vxpose.xlu0.b32.cont [5/16] 0.0, 128
        %2434 = vxpose.xlu0.b32.cont [6/16] 0.0, 128
        %2435 = vxpose.xlu0.b32.cont [7/16] 0.0, 128
        %2436 = vxpose.xlu0.b32.cont [8/16] 0.0, 128
        %2437 = vxpose.xlu0.b32.cont [9/16] 0.0, 128
        %2438 = vxpose.xlu0.b32.cont [10/16] 0.0, 128
        %2439 = vxpose.xlu0.b32.cont [11/16] 0.0, 128
        %2440 = vxpose.xlu0.b32.cont [12/16] 0.0, 128
        %2441 = vxpose.xlu0.b32.cont [13/16] 0.0, 128
        %2442 = vxpose.xlu0.b32.cont [14/16] 0.0, 128
        %2443 = vxpose.xlu0.b32.cont [15/16] 0.0, 128
        %2444 = vxpose.xlu0.b32.end [16/16] 0.0, 128
        %v2445 = vpop.trf.xlu0
        %v2446 = vpop.trf.xlu0
        %v2447 = vpop.trf.xlu0
        %v2448 = vpop.trf.xlu0
        %v2449 = vpop.trf.xlu0
        %v2450 = vpop.trf.xlu0
        %v2451 = vpop.trf.xlu0
        %v2452 = vpop.trf.xlu0
        %v2453 = vpop.trf.xlu0
        %v2454 = vpop.trf.xlu0
        %v2455 = vpop.trf.xlu0
        %v2456 = vpop.trf.xlu0
        %v2457 = vpop.trf.xlu0
        %v2458 = vpop.trf.xlu0
        %v2459 = vpop.trf.xlu0
        %v2460 = vpop.trf.xlu0
        %2461 = vxpose.xlu0.b32.start [1/16] %v2390, 128
        %2462 = vxpose.xlu0.b32.cont [2/16] 0.0, 128
        %2463 = vxpose.xlu0.b32.cont [3/16] 0.0, 128
        %2464 = vxpose.xlu0.b32.cont [4/16] 0.0, 128
        %2465 = vxpose.xlu0.b32.cont [5/16] 0.0, 128
        %2466 = vxpose.xlu0.b32.cont [6/16] 0.0, 128
        %2467 = vxpose.xlu0.b32.cont [7/16] 0.0, 128
        %2468 = vxpose.xlu0.b32.cont [8/16] 0.0, 128
        %2469 = vxpose.xlu0.b32.cont [9/16] 0.0, 128
        %2470 = vxpose.xlu0.b32.cont [10/16] 0.0, 128
        %2471 = vxpose.xlu0.b32.cont [11/16] 0.0, 128
        %2472 = vxpose.xlu0.b32.cont [12/16] 0.0, 128
        %2473 = vxpose.xlu0.b32.cont [13/16] 0.0, 128
        %2474 = vxpose.xlu0.b32.cont [14/16] 0.0, 128
        %2475 = vxpose.xlu0.b32.cont [15/16] 0.0, 128
        %2476 = vxpose.xlu0.b32.end [16/16] 0.0, 128
        %v2477 = vpop.trf.xlu0
        %v2478 = vpop.trf.xlu0
        %v2479 = vpop.trf.xlu0
        %v2480 = vpop.trf.xlu0
        %v2481 = vpop.trf.xlu0
        %v2482 = vpop.trf.xlu0
        %v2483 = vpop.trf.xlu0
        %v2484 = vpop.trf.xlu0
        %v2485 = vpop.trf.xlu0
        %v2486 = vpop.trf.xlu0
        %v2487 = vpop.trf.xlu0
        %v2488 = vpop.trf.xlu0
        %v2489 = vpop.trf.xlu0
        %v2490 = vpop.trf.xlu0
        %v2491 = vpop.trf.xlu0
        %v2492 = vpop.trf.xlu0
        %2493 = vxpose.xlu0.b32.start [1/16] %v2392, 128
        %2494 = vxpose.xlu0.b32.cont [2/16] 0.0, 128
        %2495 = vxpose.xlu0.b32.cont [3/16] 0.0, 128
        %2496 = vxpose.xlu0.b32.cont [4/16] 0.0, 128
        %2497 = vxpose.xlu0.b32.cont [5/16] 0.0, 128
        %2498 = vxpose.xlu0.b32.cont [6/16] 0.0, 128
        %2499 = vxpose.xlu0.b32.cont [7/16] 0.0, 128
        %2500 = vxpose.xlu0.b32.cont [8/16] 0.0, 128
        %2501 = vxpose.xlu0.b32.cont [9/16] 0.0, 128
        %2502 = vxpose.xlu0.b32.cont [10/16] 0.0, 128
        %2503 = vxpose.xlu0.b32.cont [11/16] 0.0, 128
        %2504 = vxpose.xlu0.b32.cont [12/16] 0.0, 128
        %2505 = vxpose.xlu0.b32.cont [13/16] 0.0, 128
        %2506 = vxpose.xlu0.b32.cont [14/16] 0.0, 128
        %2507 = vxpose.xlu0.b32.cont [15/16] 0.0, 128
        %2508 = vxpose.xlu0.b32.end [16/16] 0.0, 128
        %v2509 = vpop.trf.xlu0
        %v2510 = vpop.trf.xlu0
        %v2511 = vpop.trf.xlu0
        %v2512 = vpop.trf.xlu0
        %v2513 = vpop.trf.xlu0
        %v2514 = vpop.trf.xlu0
        %v2515 = vpop.trf.xlu0
        %v2516 = vpop.trf.xlu0
        %v2517 = vpop.trf.xlu0
        %v2518 = vpop.trf.xlu0
        %v2519 = vpop.trf.xlu0
        %v2520 = vpop.trf.xlu0
        %v2521 = vpop.trf.xlu0
        %v2522 = vpop.trf.xlu0
        %v2523 = vpop.trf.xlu0
        %v2524 = vpop.trf.xlu0
        %v2525 = vsel %vm908, %v2375, 0
        %2527 = vmatprep.subr.mxu0 0.0
        %2528 = vmatpush1.msra.mxu0 0.0
        %2529 = vmatprep.subr.mxu0 0.0
        %2530 = vmatpush1.msra.mxu0 0.0
        %2531 = vmatprep.subr.mxu0 0.0
        %2532 = vmatpush1.msra.mxu0 0.0
        %2533 = vmatprep.subr.mxu0 0.0
        %2534 = vmatpush1.msra.mxu0 0.0
        %2535 = vmatprep.subr.mxu0 0.0
        %2536 = vmatpush1.msra.mxu0 0.0
        %2537 = vmatprep.subr.mxu0 0.0
        %2538 = vmatpush1.msra.mxu0 0.0
        %2539 = vmatprep.subr.mxu0 0.0
        %2540 = vmatpush1.msra.mxu0 0.0
        %2541 = vmatprep.subr.mxu0 0.0
        %2542 = vmatpush1.msra.mxu0 0.0
        %2543 = vmatprep.subr.mxu0 0.0
        %2544 = vmatpush1.msra.mxu0 0.0
        %2545 = vmatprep.subr.mxu0 0.0
        %2546 = vmatpush1.msra.mxu0 0.0
        %2547 = vmatprep.subr.mxu0 0.0
        %2548 = vmatpush1.msra.mxu0 0.0
        %2549 = vmatprep.subr.mxu0 0.0
        %2550 = vmatpush1.msra.mxu0 0.0
        %2551 = vmatprep.subr.mxu0 0.0
        %2552 = vmatpush1.msra.mxu0 0.0
        %2553 = vmatprep.subr.mxu0 0.0
        %2554 = vmatpush1.msra.mxu0 0.0
        %2555 = vmatprep.subr.mxu0 0.0
        %2556 = vmatpush1.msra.mxu0 0.0
        %2557 = vmatprep.subr.mxu0 0.0
        %2558 = vmatpush1.msra.mxu0 %v2413
        %2559 = vmatprep.subr.mxu0 0.0
        %2560 = vmatpush2.msra.mxu0 0.0
        %2561 = vmatprep.subr.mxu0 0.0
        %2562 = vmatpush2.msra.mxu0 0.0
        %2563 = vmatprep.subr.mxu0 0.0
        %2564 = vmatpush2.msra.mxu0 0.0
        %2565 = vmatprep.subr.mxu0 0.0
        %2566 = vmatpush2.msra.mxu0 0.0
        %2567 = vmatprep.subr.mxu0 0.0
        %2568 = vmatpush2.msra.mxu0 0.0
        %2569 = vmatprep.subr.mxu0 0.0
        %2570 = vmatpush2.msra.mxu0 0.0
        %2571 = vmatprep.subr.mxu0 0.0
        %2572 = vmatpush2.msra.mxu0 0.0
        %2573 = vmatprep.subr.mxu0 0.0
        %2574 = vmatpush2.msra.mxu0 0.0
        %2575 = vmatprep.subr.mxu0 0.0
        %2576 = vmatpush2.msra.mxu0 0.0
        %2577 = vmatprep.subr.mxu0 0.0
        %2578 = vmatpush2.msra.mxu0 0.0
        %2579 = vmatprep.subr.mxu0 0.0
        %2580 = vmatpush2.msra.mxu0 0.0
        %2581 = vmatprep.subr.mxu0 0.0
        %2582 = vmatpush2.msra.mxu0 0.0
        %2583 = vmatprep.subr.mxu0 0.0
        %2584 = vmatpush2.msra.mxu0 0.0
        %2585 = vmatprep.subr.mxu0 0.0
        %2586 = vmatpush2.msra.mxu0 0.0
        %2587 = vmatprep.subr.mxu0 0.0
        %2588 = vmatpush2.msra.mxu0 0.0
        %2589 = vmatprep.subr.mxu0 0.0
        %2590 = vmatpush2.msra.mxu0 0.0
        %2591 = vmatprep.mubr.f32.mxu0 0.0
        %2592 = vmatmul.mubr.f32.gmra.mxu0 %v2525
        %v2593 = vpop.f32.mrf.mxu0
        %v2594 = vadd.f32 %v766, %v2593
        %v2595 = vpop.f32.mrf.mxu0
        %2596 = vdwg.mxu0
        %v2597 = vsel %vm908, %v2380, 0
        %2599 = vmatprep.subr.mxu0 0.0
        %2600 = vmatpush1.msra.mxu0 0.0
        %2601 = vmatprep.subr.mxu0 0.0
        %2602 = vmatpush1.msra.mxu0 0.0
        %2603 = vmatprep.subr.mxu0 0.0
        %2604 = vmatpush1.msra.mxu0 0.0
        %2605 = vmatprep.subr.mxu0 0.0
        %2606 = vmatpush1.msra.mxu0 0.0
        %2607 = vmatprep.subr.mxu0 0.0
        %2608 = vmatpush1.msra.mxu0 0.0
        %2609 = vmatprep.subr.mxu0 0.0
        %2610 = vmatpush1.msra.mxu0 0.0
        %2611 = vmatprep.subr.mxu0 0.0
        %2612 = vmatpush1.msra.mxu0 0.0
        %2613 = vmatprep.subr.mxu0 0.0
        %2614 = vmatpush1.msra.mxu0 0.0
        %2615 = vmatprep.subr.mxu0 0.0
        %2616 = vmatpush1.msra.mxu0 0.0
        %2617 = vmatprep.subr.mxu0 0.0
        %2618 = vmatpush1.msra.mxu0 0.0
        %2619 = vmatprep.subr.mxu0 0.0
        %2620 = vmatpush1.msra.mxu0 0.0
        %2621 = vmatprep.subr.mxu0 0.0
        %2622 = vmatpush1.msra.mxu0 0.0
        %2623 = vmatprep.subr.mxu0 0.0
        %2624 = vmatpush1.msra.mxu0 0.0
        %2625 = vmatprep.subr.mxu0 0.0
        %2626 = vmatpush1.msra.mxu0 0.0
        %2627 = vmatprep.subr.mxu0 0.0
        %2628 = vmatpush1.msra.mxu0 0.0
        %2629 = vmatprep.subr.mxu0 0.0
        %2630 = vmatpush1.msra.mxu0 %v2445
        %2631 = vmatprep.subr.mxu0 0.0
        %2632 = vmatpush2.msra.mxu0 0.0
        %2633 = vmatprep.subr.mxu0 0.0
        %2634 = vmatpush2.msra.mxu0 0.0
        %2635 = vmatprep.subr.mxu0 0.0
        %2636 = vmatpush2.msra.mxu0 0.0
        %2637 = vmatprep.subr.mxu0 0.0
        %2638 = vmatpush2.msra.mxu0 0.0
        %2639 = vmatprep.subr.mxu0 0.0
        %2640 = vmatpush2.msra.mxu0 0.0
        %2641 = vmatprep.subr.mxu0 0.0
        %2642 = vmatpush2.msra.mxu0 0.0
        %2643 = vmatprep.subr.mxu0 0.0
        %2644 = vmatpush2.msra.mxu0 0.0
        %2645 = vmatprep.subr.mxu0 0.0
        %2646 = vmatpush2.msra.mxu0 0.0
        %2647 = vmatprep.subr.mxu0 0.0
        %2648 = vmatpush2.msra.mxu0 0.0
        %2649 = vmatprep.subr.mxu0 0.0
        %2650 = vmatpush2.msra.mxu0 0.0
        %2651 = vmatprep.subr.mxu0 0.0
        %2652 = vmatpush2.msra.mxu0 0.0
        %2653 = vmatprep.subr.mxu0 0.0
        %2654 = vmatpush2.msra.mxu0 0.0
        %2655 = vmatprep.subr.mxu0 0.0
        %2656 = vmatpush2.msra.mxu0 0.0
        %2657 = vmatprep.subr.mxu0 0.0
        %2658 = vmatpush2.msra.mxu0 0.0
        %2659 = vmatprep.subr.mxu0 0.0
        %2660 = vmatpush2.msra.mxu0 0.0
        %2661 = vmatprep.subr.mxu0 0.0
        %2662 = vmatpush2.msra.mxu0 0.0
        %2663 = vmatprep.mubr.f32.mxu0 0.0
        %2664 = vmatmul.mubr.f32.gmra.mxu0 %v2597
        %v2665 = vpop.f32.mrf.mxu0
        %v2666 = vadd.f32 %v766, %v2665
        %v2667 = vpop.f32.mrf.mxu0
        %2668 = vdwg.mxu0
        %v2669 = vsel %vm908, %v2382, 0
        %2671 = vmatprep.subr.mxu0 0.0
        %2672 = vmatpush1.msra.mxu0 0.0
        %2673 = vmatprep.subr.mxu0 0.0
        %2674 = vmatpush1.msra.mxu0 0.0
        %2675 = vmatprep.subr.mxu0 0.0
        %2676 = vmatpush1.msra.mxu0 0.0
        %2677 = vmatprep.subr.mxu0 0.0
        %2678 = vmatpush1.msra.mxu0 0.0
        %2679 = vmatprep.subr.mxu0 0.0
        %2680 = vmatpush1.msra.mxu0 0.0
        %2681 = vmatprep.subr.mxu0 0.0
        %2682 = vmatpush1.msra.mxu0 0.0
        %2683 = vmatprep.subr.mxu0 0.0
        %2684 = vmatpush1.msra.mxu0 0.0
        %2685 = vmatprep.subr.mxu0 0.0
        %2686 = vmatpush1.msra.mxu0 0.0
        %2687 = vmatprep.subr.mxu0 0.0
        %2688 = vmatpush1.msra.mxu0 0.0
        %2689 = vmatprep.subr.mxu0 0.0
        %2690 = vmatpush1.msra.mxu0 0.0
        %2691 = vmatprep.subr.mxu0 0.0
        %2692 = vmatpush1.msra.mxu0 0.0
        %2693 = vmatprep.subr.mxu0 0.0
        %2694 = vmatpush1.msra.mxu0 0.0
        %2695 = vmatprep.subr.mxu0 0.0
        %2696 = vmatpush1.msra.mxu0 0.0
        %2697 = vmatprep.subr.mxu0 0.0
        %2698 = vmatpush1.msra.mxu0 0.0
        %2699 = vmatprep.subr.mxu0 0.0
        %2700 = vmatpush1.msra.mxu0 0.0
        %2701 = vmatprep.subr.mxu0 0.0
        %2702 = vmatpush1.msra.mxu0 %v2477
        %2703 = vmatprep.subr.mxu0 0.0
        %2704 = vmatpush2.msra.mxu0 0.0
        %2705 = vmatprep.subr.mxu0 0.0
        %2706 = vmatpush2.msra.mxu0 0.0
        %2707 = vmatprep.subr.mxu0 0.0
        %2708 = vmatpush2.msra.mxu0 0.0
        %2709 = vmatprep.subr.mxu0 0.0
        %2710 = vmatpush2.msra.mxu0 0.0
        %2711 = vmatprep.subr.mxu0 0.0
        %2712 = vmatpush2.msra.mxu0 0.0
        %2713 = vmatprep.subr.mxu0 0.0
        %2714 = vmatpush2.msra.mxu0 0.0
        %2715 = vmatprep.subr.mxu0 0.0
        %2716 = vmatpush2.msra.mxu0 0.0
        %2717 = vmatprep.subr.mxu0 0.0
        %2718 = vmatpush2.msra.mxu0 0.0
        %2719 = vmatprep.subr.mxu0 0.0
        %2720 = vmatpush2.msra.mxu0 0.0
        %2721 = vmatprep.subr.mxu0 0.0
        %2722 = vmatpush2.msra.mxu0 0.0
        %2723 = vmatprep.subr.mxu0 0.0
        %2724 = vmatpush2.msra.mxu0 0.0
        %2725 = vmatprep.subr.mxu0 0.0
        %2726 = vmatpush2.msra.mxu0 0.0
        %2727 = vmatprep.subr.mxu0 0.0
        %2728 = vmatpush2.msra.mxu0 0.0
        %2729 = vmatprep.subr.mxu0 0.0
        %2730 = vmatpush2.msra.mxu0 0.0
        %2731 = vmatprep.subr.mxu0 0.0
        %2732 = vmatpush2.msra.mxu0 0.0
        %2733 = vmatprep.subr.mxu0 0.0
        %2734 = vmatpush2.msra.mxu0 0.0
        %2735 = vmatprep.mubr.f32.mxu0 0.0
        %2736 = vmatmul.mubr.f32.gmra.mxu0 %v2669
        %v2737 = vpop.f32.mrf.mxu0
        %v2738 = vadd.f32 %v766, %v2737
        %v2739 = vpop.f32.mrf.mxu0
        %2740 = vdwg.mxu0
        %v2741 = vsel %vm908, %v2384, 0
        %2743 = vmatprep.subr.mxu0 0.0
        %2744 = vmatpush1.msra.mxu0 0.0
        %2745 = vmatprep.subr.mxu0 0.0
        %2746 = vmatpush1.msra.mxu0 0.0
        %2747 = vmatprep.subr.mxu0 0.0
        %2748 = vmatpush1.msra.mxu0 0.0
        %2749 = vmatprep.subr.mxu0 0.0
        %2750 = vmatpush1.msra.mxu0 0.0
        %2751 = vmatprep.subr.mxu0 0.0
        %2752 = vmatpush1.msra.mxu0 0.0
        %2753 = vmatprep.subr.mxu0 0.0
        %2754 = vmatpush1.msra.mxu0 0.0
        %2755 = vmatprep.subr.mxu0 0.0
        %2756 = vmatpush1.msra.mxu0 0.0
        %2757 = vmatprep.subr.mxu0 0.0
        %2758 = vmatpush1.msra.mxu0 0.0
        %2759 = vmatprep.subr.mxu0 0.0
        %2760 = vmatpush1.msra.mxu0 0.0
        %2761 = vmatprep.subr.mxu0 0.0
        %2762 = vmatpush1.msra.mxu0 0.0
        %2763 = vmatprep.subr.mxu0 0.0
        %2764 = vmatpush1.msra.mxu0 0.0
        %2765 = vmatprep.subr.mxu0 0.0
        %2766 = vmatpush1.msra.mxu0 0.0
        %2767 = vmatprep.subr.mxu0 0.0
        %2768 = vmatpush1.msra.mxu0 0.0
        %2769 = vmatprep.subr.mxu0 0.0
        %2770 = vmatpush1.msra.mxu0 0.0
        %2771 = vmatprep.subr.mxu0 0.0
        %2772 = vmatpush1.msra.mxu0 0.0
        %2773 = vmatprep.subr.mxu0 0.0
        %2774 = vmatpush1.msra.mxu0 %v2509
        %2775 = vmatprep.subr.mxu0 0.0
        %2776 = vmatpush2.msra.mxu0 0.0
        %2777 = vmatprep.subr.mxu0 0.0
        %2778 = vmatpush2.msra.mxu0 0.0
        %2779 = vmatprep.subr.mxu0 0.0
        %2780 = vmatpush2.msra.mxu0 0.0
        %2781 = vmatprep.subr.mxu0 0.0
        %2782 = vmatpush2.msra.mxu0 0.0
        %2783 = vmatprep.subr.mxu0 0.0
        %2784 = vmatpush2.msra.mxu0 0.0
        %2785 = vmatprep.subr.mxu0 0.0
        %2786 = vmatpush2.msra.mxu0 0.0
        %2787 = vmatprep.subr.mxu0 0.0
        %2788 = vmatpush2.msra.mxu0 0.0
        %2789 = vmatprep.subr.mxu0 0.0
        %2790 = vmatpush2.msra.mxu0 0.0
        %2791 = vmatprep.subr.mxu0 0.0
        %2792 = vmatpush2.msra.mxu0 0.0
        %2793 = vmatprep.subr.mxu0 0.0
        %2794 = vmatpush2.msra.mxu0 0.0
        %2795 = vmatprep.subr.mxu0 0.0
        %2796 = vmatpush2.msra.mxu0 0.0
        %2797 = vmatprep.subr.mxu0 0.0
        %2798 = vmatpush2.msra.mxu0 0.0
        %2799 = vmatprep.subr.mxu0 0.0
        %2800 = vmatpush2.msra.mxu0 0.0
        %2801 = vmatprep.subr.mxu0 0.0
        %2802 = vmatpush2.msra.mxu0 0.0
        %2803 = vmatprep.subr.mxu0 0.0
        %2804 = vmatpush2.msra.mxu0 0.0
        %2805 = vmatprep.subr.mxu0 0.0
        %2806 = vmatpush2.msra.mxu0 0.0
        %2807 = vmatprep.mubr.f32.mxu0 0.0
        %2808 = vmatmul.mubr.f32.gmra.mxu0 %v2741
        %v2809 = vpop.f32.mrf.mxu0
        %v2810 = vadd.f32 %v766, %v2809
        %v2811 = vpop.f32.mrf.mxu0
        %2812 = vdwg.mxu0
        %v2813 = vsel %vm908, %v2594, -inf
        %2814 = vmax.xlane.f32.xlu0 %v2813
        %v2815 = vpop.xlane.xlu0 %2814
        %v2816 = vsel %vm908, %v2666, -inf
        %2817 = vmax.xlane.f32.xlu0 %v2816
        %v2818 = vpop.xlane.xlu0 %2817
        %v2819 = vsel %vm908, %v2738, -inf
        %2820 = vmax.xlane.f32.xlu0 %v2819
        %v2821 = vpop.xlane.xlu0 %2820
        %v2822 = vsel %vm908, %v2810, -inf
        %2823 = vmax.xlane.f32.xlu0 %v2822
        %v2824 = vpop.xlane.xlu0 %2823
        %v2825 = vsub.f32 %v2594, %v2815
        %v2826 = vsub.f32 %v2666, %v2818
        %v2827 = vsub.f32 %v2738, %v2821
        %v2828 = vsub.f32 %v2810, %v2824
        %v2829 = vmul.f32 %v2825, 1.442695
        %v2830 = vpow.pop %v2829
        %v2831 = vmul.f32 %v2826, 1.442695
        %v2832 = vpow.pop %v2831
        %v2833 = vmul.f32 %v2827, 1.442695
        %v2834 = vpow.pop %v2833
        %v2835 = vmul.f32 %v2828, 1.442695
        %v2836 = vpow.pop %v2835
        %v2837 = vsel %vm908, %v2830, 0.0
        %2838 = vadd.xlane.f32.xlu0 %v2837
        %v2839 = vpop.xlane.xlu0 %2838
        %v2840 = vsel %vm908, %v2832, 0.0
        %2841 = vadd.xlane.f32.xlu0 %v2840
        %v2842 = vpop.xlane.xlu0 %2841
        %v2843 = vsel %vm908, %v2834, 0.0
        %2844 = vadd.xlane.f32.xlu0 %v2843
        %v2845 = vpop.xlane.xlu0 %2844
        %v2846 = vsel %vm908, %v2836, 0.0
        %2847 = vadd.xlane.f32.xlu0 %v2846
        %v2848 = vpop.xlane.xlu0 %2847
        %v2849 = vrcp.pop %v2839
        %v2850 = vrcp.pop %v2842
        %v2851 = vrcp.pop %v2845
        %v2852 = vrcp.pop %v2848
        %v2853 = vmul.f32 %v2830, %v2849
        %v2854 = vmul.f32 %v2832, %v2850
        %v2855 = vmul.f32 %v2834, %v2851
        %v2856 = vmul.f32 %v2836, %v2852
        %2857 = vrot.lane.b32.xlu0 %v2375, 64
        %v2858 = vpop.permute.xlu0 %2857
        %2859 = vrot.lane.b32.xlu0 %v2380, 64
        %v2860 = vpop.permute.xlu0 %2859
        %2861 = vrot.lane.b32.xlu0 %v2382, 64
        %v2862 = vpop.permute.xlu0 %2861
        %2863 = vrot.lane.b32.xlu0 %v2384, 64
        %v2864 = vpop.permute.xlu0 %2863
        %2869 = vxpose.xlu0.b32.start [1/16] %v2858, 128
        %2870 = vxpose.xlu0.b32.cont [2/16] 0.0, 128
        %2871 = vxpose.xlu0.b32.cont [3/16] 0.0, 128
        %2872 = vxpose.xlu0.b32.cont [4/16] 0.0, 128
        %2873 = vxpose.xlu0.b32.cont [5/16] 0.0, 128
        %2874 = vxpose.xlu0.b32.cont [6/16] 0.0, 128
        %2875 = vxpose.xlu0.b32.cont [7/16] 0.0, 128
        %2876 = vxpose.xlu0.b32.cont [8/16] 0.0, 128
        %2877 = vxpose.xlu0.b32.cont [9/16] 0.0, 128
        %2878 = vxpose.xlu0.b32.cont [10/16] 0.0, 128
        %2879 = vxpose.xlu0.b32.cont [11/16] 0.0, 128
        %2880 = vxpose.xlu0.b32.cont [12/16] 0.0, 128
        %2881 = vxpose.xlu0.b32.cont [13/16] 0.0, 128
        %2882 = vxpose.xlu0.b32.cont [14/16] 0.0, 128
        %2883 = vxpose.xlu0.b32.cont [15/16] 0.0, 128
        %2884 = vxpose.xlu0.b32.end [16/16] 0.0, 128
        %v2885 = vpop.trf.xlu0
        %v2886 = vpop.trf.xlu0
        %v2887 = vpop.trf.xlu0
        %v2888 = vpop.trf.xlu0
        %v2889 = vpop.trf.xlu0
        %v2890 = vpop.trf.xlu0
        %v2891 = vpop.trf.xlu0
        %v2892 = vpop.trf.xlu0
        %v2893 = vpop.trf.xlu0
        %v2894 = vpop.trf.xlu0
        %v2895 = vpop.trf.xlu0
        %v2896 = vpop.trf.xlu0
        %v2897 = vpop.trf.xlu0
        %v2898 = vpop.trf.xlu0
        %v2899 = vpop.trf.xlu0
        %v2900 = vpop.trf.xlu0
        %2901 = vxpose.xlu0.b32.start [1/16] %v2860, 128
        %2902 = vxpose.xlu0.b32.cont [2/16] 0.0, 128
        %2903 = vxpose.xlu0.b32.cont [3/16] 0.0, 128
        %2904 = vxpose.xlu0.b32.cont [4/16] 0.0, 128
        %2905 = vxpose.xlu0.b32.cont [5/16] 0.0, 128
        %2906 = vxpose.xlu0.b32.cont [6/16] 0.0, 128
        %2907 = vxpose.xlu0.b32.cont [7/16] 0.0, 128
        %2908 = vxpose.xlu0.b32.cont [8/16] 0.0, 128
        %2909 = vxpose.xlu0.b32.cont [9/16] 0.0, 128
        %2910 = vxpose.xlu0.b32.cont [10/16] 0.0, 128
        %2911 = vxpose.xlu0.b32.cont [11/16] 0.0, 128
        %2912 = vxpose.xlu0.b32.cont [12/16] 0.0, 128
        %2913 = vxpose.xlu0.b32.cont [13/16] 0.0, 128
        %2914 = vxpose.xlu0.b32.cont [14/16] 0.0, 128
        %2915 = vxpose.xlu0.b32.cont [15/16] 0.0, 128
        %2916 = vxpose.xlu0.b32.end [16/16] 0.0, 128
        %v2917 = vpop.trf.xlu0
        %v2918 = vpop.trf.xlu0
        %v2919 = vpop.trf.xlu0
        %v2920 = vpop.trf.xlu0
        %v2921 = vpop.trf.xlu0
        %v2922 = vpop.trf.xlu0
        %v2923 = vpop.trf.xlu0
        %v2924 = vpop.trf.xlu0
        %v2925 = vpop.trf.xlu0
        %v2926 = vpop.trf.xlu0
        %v2927 = vpop.trf.xlu0
        %v2928 = vpop.trf.xlu0
        %v2929 = vpop.trf.xlu0
        %v2930 = vpop.trf.xlu0
        %v2931 = vpop.trf.xlu0
        %v2932 = vpop.trf.xlu0
        %2933 = vxpose.xlu0.b32.start [1/16] %v2862, 128
        %2934 = vxpose.xlu0.b32.cont [2/16] 0.0, 128
        %2935 = vxpose.xlu0.b32.cont [3/16] 0.0, 128
        %2936 = vxpose.xlu0.b32.cont [4/16] 0.0, 128
        %2937 = vxpose.xlu0.b32.cont [5/16] 0.0, 128
        %2938 = vxpose.xlu0.b32.cont [6/16] 0.0, 128
        %2939 = vxpose.xlu0.b32.cont [7/16] 0.0, 128
        %2940 = vxpose.xlu0.b32.cont [8/16] 0.0, 128
        %2941 = vxpose.xlu0.b32.cont [9/16] 0.0, 128
        %2942 = vxpose.xlu0.b32.cont [10/16] 0.0, 128
        %2943 = vxpose.xlu0.b32.cont [11/16] 0.0, 128
        %2944 = vxpose.xlu0.b32.cont [12/16] 0.0, 128
        %2945 = vxpose.xlu0.b32.cont [13/16] 0.0, 128
        %2946 = vxpose.xlu0.b32.cont [14/16] 0.0, 128
        %2947 = vxpose.xlu0.b32.cont [15/16] 0.0, 128
        %2948 = vxpose.xlu0.b32.end [16/16] 0.0, 128
        %v2949 = vpop.trf.xlu0
        %v2950 = vpop.trf.xlu0
        %v2951 = vpop.trf.xlu0
        %v2952 = vpop.trf.xlu0
        %v2953 = vpop.trf.xlu0
        %v2954 = vpop.trf.xlu0
        %v2955 = vpop.trf.xlu0
        %v2956 = vpop.trf.xlu0
        %v2957 = vpop.trf.xlu0
        %v2958 = vpop.trf.xlu0
        %v2959 = vpop.trf.xlu0
        %v2960 = vpop.trf.xlu0
        %v2961 = vpop.trf.xlu0
        %v2962 = vpop.trf.xlu0
        %v2963 = vpop.trf.xlu0
        %v2964 = vpop.trf.xlu0
        %2965 = vxpose.xlu0.b32.start [1/16] %v2864, 128
        %2966 = vxpose.xlu0.b32.cont [2/16] 0.0, 128
        %2967 = vxpose.xlu0.b32.cont [3/16] 0.0, 128
        %2968 = vxpose.xlu0.b32.cont [4/16] 0.0, 128
        %2969 = vxpose.xlu0.b32.cont [5/16] 0.0, 128
        %2970 = vxpose.xlu0.b32.cont [6/16] 0.0, 128
        %2971 = vxpose.xlu0.b32.cont [7/16] 0.0, 128
        %2972 = vxpose.xlu0.b32.cont [8/16] 0.0, 128
        %2973 = vxpose.xlu0.b32.cont [9/16] 0.0, 128
        %2974 = vxpose.xlu0.b32.cont [10/16] 0.0, 128
        %2975 = vxpose.xlu0.b32.cont [11/16] 0.0, 128
        %2976 = vxpose.xlu0.b32.cont [12/16] 0.0, 128
        %2977 = vxpose.xlu0.b32.cont [13/16] 0.0, 128
        %2978 = vxpose.xlu0.b32.cont [14/16] 0.0, 128
        %2979 = vxpose.xlu0.b32.cont [15/16] 0.0, 128
        %2980 = vxpose.xlu0.b32.end [16/16] 0.0, 128
        %v2981 = vpop.trf.xlu0
        %v2982 = vpop.trf.xlu0
        %v2983 = vpop.trf.xlu0
        %v2984 = vpop.trf.xlu0
        %v2985 = vpop.trf.xlu0
        %v2986 = vpop.trf.xlu0
        %v2987 = vpop.trf.xlu0
        %v2988 = vpop.trf.xlu0
        %v2989 = vpop.trf.xlu0
        %v2990 = vpop.trf.xlu0
        %v2991 = vpop.trf.xlu0
        %v2992 = vpop.trf.xlu0
        %v2993 = vpop.trf.xlu0
        %v2994 = vpop.trf.xlu0
        %v2995 = vpop.trf.xlu0
        %v2996 = vpop.trf.xlu0
        %v2998 = vsel %vm908, %v2885, 0
        %v3001 = vsel %vm908, %v2853, 0
        %3003 = vmatprep.subr.mxu0 0.0
        %3004 = vmatpush1.xpose.msra.mxu0 0.0
        %3005 = vmatprep.subr.mxu0 0.0
        %3006 = vmatpush1.xpose.msra.mxu0 0.0
        %3007 = vmatprep.subr.mxu0 0.0
        %3008 = vmatpush1.xpose.msra.mxu0 0.0
        %3009 = vmatprep.subr.mxu0 0.0
        %3010 = vmatpush1.xpose.msra.mxu0 0.0
        %3011 = vmatprep.subr.mxu0 0.0
        %3012 = vmatpush1.xpose.msra.mxu0 0.0
        %3013 = vmatprep.subr.mxu0 0.0
        %3014 = vmatpush1.xpose.msra.mxu0 0.0
        %3015 = vmatprep.subr.mxu0 0.0
        %3016 = vmatpush1.xpose.msra.mxu0 0.0
        %3017 = vmatprep.subr.mxu0 0.0
        %3018 = vmatpush1.xpose.msra.mxu0 0.0
        %3019 = vmatprep.subr.mxu0 0.0
        %3020 = vmatpush1.xpose.msra.mxu0 0.0
        %3021 = vmatprep.subr.mxu0 0.0
        %3022 = vmatpush1.xpose.msra.mxu0 0.0
        %3023 = vmatprep.subr.mxu0 0.0
        %3024 = vmatpush1.xpose.msra.mxu0 0.0
        %3025 = vmatprep.subr.mxu0 0.0
        %3026 = vmatpush1.xpose.msra.mxu0 0.0
        %3027 = vmatprep.subr.mxu0 0.0
        %3028 = vmatpush1.xpose.msra.mxu0 0.0
        %3029 = vmatprep.subr.mxu0 0.0
        %3030 = vmatpush1.xpose.msra.mxu0 0.0
        %3031 = vmatprep.subr.mxu0 0.0
        %3032 = vmatpush1.xpose.msra.mxu0 0.0
        %3033 = vmatprep.subr.mxu0 0.0
        %3034 = vmatpush1.xpose.msra.mxu0 %v3001
        %3035 = vmatprep.subr.mxu0 0.0
        %3036 = vmatpush2.xpose.msra.mxu0 0.0
        %3037 = vmatprep.subr.mxu0 0.0
        %3038 = vmatpush2.xpose.msra.mxu0 0.0
        %3039 = vmatprep.subr.mxu0 0.0
        %3040 = vmatpush2.xpose.msra.mxu0 0.0
        %3041 = vmatprep.subr.mxu0 0.0
        %3042 = vmatpush2.xpose.msra.mxu0 0.0
        %3043 = vmatprep.subr.mxu0 0.0
        %3044 = vmatpush2.xpose.msra.mxu0 0.0
        %3045 = vmatprep.subr.mxu0 0.0
        %3046 = vmatpush2.xpose.msra.mxu0 0.0
        %3047 = vmatprep.subr.mxu0 0.0
        %3048 = vmatpush2.xpose.msra.mxu0 0.0
        %3049 = vmatprep.subr.mxu0 0.0
        %3050 = vmatpush2.xpose.msra.mxu0 0.0
        %3051 = vmatprep.subr.mxu0 0.0
        %3052 = vmatpush2.xpose.msra.mxu0 0.0
        %3053 = vmatprep.subr.mxu0 0.0
        %3054 = vmatpush2.xpose.msra.mxu0 0.0
        %3055 = vmatprep.subr.mxu0 0.0
        %3056 = vmatpush2.xpose.msra.mxu0 0.0
        %3057 = vmatprep.subr.mxu0 0.0
        %3058 = vmatpush2.xpose.msra.mxu0 0.0
        %3059 = vmatprep.subr.mxu0 0.0
        %3060 = vmatpush2.xpose.msra.mxu0 0.0
        %3061 = vmatprep.subr.mxu0 0.0
        %3062 = vmatpush2.xpose.msra.mxu0 0.0
        %3063 = vmatprep.subr.mxu0 0.0
        %3064 = vmatpush2.xpose.msra.mxu0 0.0
        %3065 = vmatprep.subr.mxu0 0.0
        %3066 = vmatpush2.xpose.msra.mxu0 0.0
        %3067 = vmatprep.mubr.f32.mxu0 0.0
        %3068 = vmatmul.mubr.f32.gmra.mxu0 %v2998
        %v3069 = vpop.f32.mrf.mxu0
        %v3070 = vadd.f32 0.0, %v3069
        %v3071 = vpop.f32.mrf.mxu0
        %3072 = vdwg.mxu0
        %v3074 = vsel %vm908, %v2917, 0
        %v3077 = vsel %vm908, %v2854, 0
        %3079 = vmatprep.subr.mxu0 0.0
        %3080 = vmatpush1.xpose.msra.mxu0 0.0
        %3081 = vmatprep.subr.mxu0 0.0
        %3082 = vmatpush1.xpose.msra.mxu0 0.0
        %3083 = vmatprep.subr.mxu0 0.0
        %3084 = vmatpush1.xpose.msra.mxu0 0.0
        %3085 = vmatprep.subr.mxu0 0.0
        %3086 = vmatpush1.xpose.msra.mxu0 0.0
        %3087 = vmatprep.subr.mxu0 0.0
        %3088 = vmatpush1.xpose.msra.mxu0 0.0
        %3089 = vmatprep.subr.mxu0 0.0
        %3090 = vmatpush1.xpose.msra.mxu0 0.0
        %3091 = vmatprep.subr.mxu0 0.0
        %3092 = vmatpush1.xpose.msra.mxu0 0.0
        %3093 = vmatprep.subr.mxu0 0.0
        %3094 = vmatpush1.xpose.msra.mxu0 0.0
        %3095 = vmatprep.subr.mxu0 0.0
        %3096 = vmatpush1.xpose.msra.mxu0 0.0
        %3097 = vmatprep.subr.mxu0 0.0
        %3098 = vmatpush1.xpose.msra.mxu0 0.0
        %3099 = vmatprep.subr.mxu0 0.0
        %3100 = vmatpush1.xpose.msra.mxu0 0.0
        %3101 = vmatprep.subr.mxu0 0.0
        %3102 = vmatpush1.xpose.msra.mxu0 0.0
        %3103 = vmatprep.subr.mxu0 0.0
        %3104 = vmatpush1.xpose.msra.mxu0 0.0
        %3105 = vmatprep.subr.mxu0 0.0
        %3106 = vmatpush1.xpose.msra.mxu0 0.0
        %3107 = vmatprep.subr.mxu0 0.0
        %3108 = vmatpush1.xpose.msra.mxu0 0.0
        %3109 = vmatprep.subr.mxu0 0.0
        %3110 = vmatpush1.xpose.msra.mxu0 %v3077
        %3111 = vmatprep.subr.mxu0 0.0
        %3112 = vmatpush2.xpose.msra.mxu0 0.0
        %3113 = vmatprep.subr.mxu0 0.0
        %3114 = vmatpush2.xpose.msra.mxu0 0.0
        %3115 = vmatprep.subr.mxu0 0.0
        %3116 = vmatpush2.xpose.msra.mxu0 0.0
        %3117 = vmatprep.subr.mxu0 0.0
        %3118 = vmatpush2.xpose.msra.mxu0 0.0
        %3119 = vmatprep.subr.mxu0 0.0
        %3120 = vmatpush2.xpose.msra.mxu0 0.0
        %3121 = vmatprep.subr.mxu0 0.0
        %3122 = vmatpush2.xpose.msra.mxu0 0.0
        %3123 = vmatprep.subr.mxu0 0.0
        %3124 = vmatpush2.xpose.msra.mxu0 0.0
        %3125 = vmatprep.subr.mxu0 0.0
        %3126 = vmatpush2.xpose.msra.mxu0 0.0
        %3127 = vmatprep.subr.mxu0 0.0
        %3128 = vmatpush2.xpose.msra.mxu0 0.0
        %3129 = vmatprep.subr.mxu0 0.0
        %3130 = vmatpush2.xpose.msra.mxu0 0.0
        %3131 = vmatprep.subr.mxu0 0.0
        %3132 = vmatpush2.xpose.msra.mxu0 0.0
        %3133 = vmatprep.subr.mxu0 0.0
        %3134 = vmatpush2.xpose.msra.mxu0 0.0
        %3135 = vmatprep.subr.mxu0 0.0
        %3136 = vmatpush2.xpose.msra.mxu0 0.0
        %3137 = vmatprep.subr.mxu0 0.0
        %3138 = vmatpush2.xpose.msra.mxu0 0.0
        %3139 = vmatprep.subr.mxu0 0.0
        %3140 = vmatpush2.xpose.msra.mxu0 0.0
        %3141 = vmatprep.subr.mxu0 0.0
        %3142 = vmatpush2.xpose.msra.mxu0 0.0
        %3143 = vmatprep.mubr.f32.mxu0 0.0
        %3144 = vmatmul.mubr.f32.gmra.mxu0 %v3074
        %v3145 = vpop.f32.mrf.mxu0
        %v3146 = vadd.f32 0.0, %v3145
        %v3147 = vpop.f32.mrf.mxu0
        %3148 = vdwg.mxu0
        %v3150 = vsel %vm908, %v2949, 0
        %v3153 = vsel %vm908, %v2855, 0
        %3155 = vmatprep.subr.mxu0 0.0
        %3156 = vmatpush1.xpose.msra.mxu0 0.0
        %3157 = vmatprep.subr.mxu0 0.0
        %3158 = vmatpush1.xpose.msra.mxu0 0.0
        %3159 = vmatprep.subr.mxu0 0.0
        %3160 = vmatpush1.xpose.msra.mxu0 0.0
        %3161 = vmatprep.subr.mxu0 0.0
        %3162 = vmatpush1.xpose.msra.mxu0 0.0
        %3163 = vmatprep.subr.mxu0 0.0
        %3164 = vmatpush1.xpose.msra.mxu0 0.0
        %3165 = vmatprep.subr.mxu0 0.0
        %3166 = vmatpush1.xpose.msra.mxu0 0.0
        %3167 = vmatprep.subr.mxu0 0.0
        %3168 = vmatpush1.xpose.msra.mxu0 0.0
        %3169 = vmatprep.subr.mxu0 0.0
        %3170 = vmatpush1.xpose.msra.mxu0 0.0
        %3171 = vmatprep.subr.mxu0 0.0
        %3172 = vmatpush1.xpose.msra.mxu0 0.0
        %3173 = vmatprep.subr.mxu0 0.0
        %3174 = vmatpush1.xpose.msra.mxu0 0.0
        %3175 = vmatprep.subr.mxu0 0.0
        %3176 = vmatpush1.xpose.msra.mxu0 0.0
        %3177 = vmatprep.subr.mxu0 0.0
        %3178 = vmatpush1.xpose.msra.mxu0 0.0
        %3179 = vmatprep.subr.mxu0 0.0
        %3180 = vmatpush1.xpose.msra.mxu0 0.0
        %3181 = vmatprep.subr.mxu0 0.0
        %3182 = vmatpush1.xpose.msra.mxu0 0.0
        %3183 = vmatprep.subr.mxu0 0.0
        %3184 = vmatpush1.xpose.msra.mxu0 0.0
        %3185 = vmatprep.subr.mxu0 0.0
        %3186 = vmatpush1.xpose.msra.mxu0 %v3153
        %3187 = vmatprep.subr.mxu0 0.0
        %3188 = vmatpush2.xpose.msra.mxu0 0.0
        %3189 = vmatprep.subr.mxu0 0.0
        %3190 = vmatpush2.xpose.msra.mxu0 0.0
        %3191 = vmatprep.subr.mxu0 0.0
        %3192 = vmatpush2.xpose.msra.mxu0 0.0
        %3193 = vmatprep.subr.mxu0 0.0
        %3194 = vmatpush2.xpose.msra.mxu0 0.0
        %3195 = vmatprep.subr.mxu0 0.0
        %3196 = vmatpush2.xpose.msra.mxu0 0.0
        %3197 = vmatprep.subr.mxu0 0.0
        %3198 = vmatpush2.xpose.msra.mxu0 0.0
        %3199 = vmatprep.subr.mxu0 0.0
        %3200 = vmatpush2.xpose.msra.mxu0 0.0
        %3201 = vmatprep.subr.mxu0 0.0
        %3202 = vmatpush2.xpose.msra.mxu0 0.0
        %3203 = vmatprep.subr.mxu0 0.0
        %3204 = vmatpush2.xpose.msra.mxu0 0.0
        %3205 = vmatprep.subr.mxu0 0.0
        %3206 = vmatpush2.xpose.msra.mxu0 0.0
        %3207 = vmatprep.subr.mxu0 0.0
        %3208 = vmatpush2.xpose.msra.mxu0 0.0
        %3209 = vmatprep.subr.mxu0 0.0
        %3210 = vmatpush2.xpose.msra.mxu0 0.0
        %3211 = vmatprep.subr.mxu0 0.0
        %3212 = vmatpush2.xpose.msra.mxu0 0.0
        %3213 = vmatprep.subr.mxu0 0.0
        %3214 = vmatpush2.xpose.msra.mxu0 0.0
        %3215 = vmatprep.subr.mxu0 0.0
        %3216 = vmatpush2.xpose.msra.mxu0 0.0
        %3217 = vmatprep.subr.mxu0 0.0
        %3218 = vmatpush2.xpose.msra.mxu0 0.0
        %3219 = vmatprep.mubr.f32.mxu0 0.0
        %3220 = vmatmul.mubr.f32.gmra.mxu0 %v3150
        %v3221 = vpop.f32.mrf.mxu0
        %v3222 = vadd.f32 0.0, %v3221
        %v3223 = vpop.f32.mrf.mxu0
        %3224 = vdwg.mxu0
        %v3226 = vsel %vm908, %v2981, 0
        %v3229 = vsel %vm908, %v2856, 0
        %3231 = vmatprep.subr.mxu0 0.0
        %3232 = vmatpush1.xpose.msra.mxu0 0.0
        %3233 = vmatprep.subr.mxu0 0.0
        %3234 = vmatpush1.xpose.msra.mxu0 0.0
        %3235 = vmatprep.subr.mxu0 0.0
        %3236 = vmatpush1.xpose.msra.mxu0 0.0
        %3237 = vmatprep.subr.mxu0 0.0
        %3238 = vmatpush1.xpose.msra.mxu0 0.0
        %3239 = vmatprep.subr.mxu0 0.0
        %3240 = vmatpush1.xpose.msra.mxu0 0.0
        %3241 = vmatprep.subr.mxu0 0.0
        %3242 = vmatpush1.xpose.msra.mxu0 0.0
        %3243 = vmatprep.subr.mxu0 0.0
        %3244 = vmatpush1.xpose.msra.mxu0 0.0
        %3245 = vmatprep.subr.mxu0 0.0
        %3246 = vmatpush1.xpose.msra.mxu0 0.0
        %3247 = vmatprep.subr.mxu0 0.0
        %3248 = vmatpush1.xpose.msra.mxu0 0.0
        %3249 = vmatprep.subr.mxu0 0.0
        %3250 = vmatpush1.xpose.msra.mxu0 0.0
        %3251 = vmatprep.subr.mxu0 0.0
        %3252 = vmatpush1.xpose.msra.mxu0 0.0
        %3253 = vmatprep.subr.mxu0 0.0
        %3254 = vmatpush1.xpose.msra.mxu0 0.0
        %3255 = vmatprep.subr.mxu0 0.0
        %3256 = vmatpush1.xpose.msra.mxu0 0.0
        %3257 = vmatprep.subr.mxu0 0.0
        %3258 = vmatpush1.xpose.msra.mxu0 0.0
        %3259 = vmatprep.subr.mxu0 0.0
        %3260 = vmatpush1.xpose.msra.mxu0 0.0
        %3261 = vmatprep.subr.mxu0 0.0
        %3262 = vmatpush1.xpose.msra.mxu0 %v3229
        %3263 = vmatprep.subr.mxu0 0.0
        %3264 = vmatpush2.xpose.msra.mxu0 0.0
        %3265 = vmatprep.subr.mxu0 0.0
        %3266 = vmatpush2.xpose.msra.mxu0 0.0
        %3267 = vmatprep.subr.mxu0 0.0
        %3268 = vmatpush2.xpose.msra.mxu0 0.0
        %3269 = vmatprep.subr.mxu0 0.0
        %3270 = vmatpush2.xpose.msra.mxu0 0.0
        %3271 = vmatprep.subr.mxu0 0.0
        %3272 = vmatpush2.xpose.msra.mxu0 0.0
        %3273 = vmatprep.subr.mxu0 0.0
        %3274 = vmatpush2.xpose.msra.mxu0 0.0
        %3275 = vmatprep.subr.mxu0 0.0
        %3276 = vmatpush2.xpose.msra.mxu0 0.0
        %3277 = vmatprep.subr.mxu0 0.0
        %3278 = vmatpush2.xpose.msra.mxu0 0.0
        %3279 = vmatprep.subr.mxu0 0.0
        %3280 = vmatpush2.xpose.msra.mxu0 0.0
        %3281 = vmatprep.subr.mxu0 0.0
        %3282 = vmatpush2.xpose.msra.mxu0 0.0
        %3283 = vmatprep.subr.mxu0 0.0
        %3284 = vmatpush2.xpose.msra.mxu0 0.0
        %3285 = vmatprep.subr.mxu0 0.0
        %3286 = vmatpush2.xpose.msra.mxu0 0.0
        %3287 = vmatprep.subr.mxu0 0.0
        %3288 = vmatpush2.xpose.msra.mxu0 0.0
        %3289 = vmatprep.subr.mxu0 0.0
        %3290 = vmatpush2.xpose.msra.mxu0 0.0
        %3291 = vmatprep.subr.mxu0 0.0
        %3292 = vmatpush2.xpose.msra.mxu0 0.0
        %3293 = vmatprep.subr.mxu0 0.0
        %3294 = vmatpush2.xpose.msra.mxu0 0.0
        %3295 = vmatprep.mubr.f32.mxu0 0.0
        %3296 = vmatmul.mubr.f32.gmra.mxu0 %v3226
        %v3297 = vpop.f32.mrf.mxu0
        %v3298 = vadd.f32 0.0, %v3297
        %v3299 = vpop.f32.mrf.mxu0
        %3300 = vdwg.mxu0
        %3301 = vxpose.xlu0.b32.start [1/16] %v3070, 128
        %3302 = vxpose.xlu0.b32.cont [2/16] 0.0, 128
        %3303 = vxpose.xlu0.b32.cont [3/16] 0.0, 128
        %3304 = vxpose.xlu0.b32.cont [4/16] 0.0, 128
        %3305 = vxpose.xlu0.b32.cont [5/16] 0.0, 128
        %3306 = vxpose.xlu0.b32.cont [6/16] 0.0, 128
        %3307 = vxpose.xlu0.b32.cont [7/16] 0.0, 128
        %3308 = vxpose.xlu0.b32.cont [8/16] 0.0, 128
        %3309 = vxpose.xlu0.b32.cont [9/16] 0.0, 128
        %3310 = vxpose.xlu0.b32.cont [10/16] 0.0, 128
        %3311 = vxpose.xlu0.b32.cont [11/16] 0.0, 128
        %3312 = vxpose.xlu0.b32.cont [12/16] 0.0, 128
        %3313 = vxpose.xlu0.b32.cont [13/16] 0.0, 128
        %3314 = vxpose.xlu0.b32.cont [14/16] 0.0, 128
        %3315 = vxpose.xlu0.b32.cont [15/16] 0.0, 128
        %3316 = vxpose.xlu0.b32.end [16/16] 0.0, 128
        %v3317 = vpop.trf.xlu0
        %v3318 = vpop.trf.xlu0
        %v3319 = vpop.trf.xlu0
        %v3320 = vpop.trf.xlu0
        %v3321 = vpop.trf.xlu0
        %v3322 = vpop.trf.xlu0
        %v3323 = vpop.trf.xlu0
        %v3324 = vpop.trf.xlu0
        %v3325 = vpop.trf.xlu0
        %v3326 = vpop.trf.xlu0
        %v3327 = vpop.trf.xlu0
        %v3328 = vpop.trf.xlu0
        %v3329 = vpop.trf.xlu0
        %v3330 = vpop.trf.xlu0
        %v3331 = vpop.trf.xlu0
        %v3332 = vpop.trf.xlu0
        %3333 = vxpose.xlu0.b32.start [1/16] %v3146, 128
        %3334 = vxpose.xlu0.b32.cont [2/16] 0.0, 128
        %3335 = vxpose.xlu0.b32.cont [3/16] 0.0, 128
        %3336 = vxpose.xlu0.b32.cont [4/16] 0.0, 128
        %3337 = vxpose.xlu0.b32.cont [5/16] 0.0, 128
        %3338 = vxpose.xlu0.b32.cont [6/16] 0.0, 128
        %3339 = vxpose.xlu0.b32.cont [7/16] 0.0, 128
        %3340 = vxpose.xlu0.b32.cont [8/16] 0.0, 128
        %3341 = vxpose.xlu0.b32.cont [9/16] 0.0, 128
        %3342 = vxpose.xlu0.b32.cont [10/16] 0.0, 128
        %3343 = vxpose.xlu0.b32.cont [11/16] 0.0, 128
        %3344 = vxpose.xlu0.b32.cont [12/16] 0.0, 128
        %3345 = vxpose.xlu0.b32.cont [13/16] 0.0, 128
        %3346 = vxpose.xlu0.b32.cont [14/16] 0.0, 128
        %3347 = vxpose.xlu0.b32.cont [15/16] 0.0, 128
        %3348 = vxpose.xlu0.b32.end [16/16] 0.0, 128
        %v3349 = vpop.trf.xlu0
        %v3350 = vpop.trf.xlu0
        %v3351 = vpop.trf.xlu0
        %v3352 = vpop.trf.xlu0
        %v3353 = vpop.trf.xlu0
        %v3354 = vpop.trf.xlu0
        %v3355 = vpop.trf.xlu0
        %v3356 = vpop.trf.xlu0
        %v3357 = vpop.trf.xlu0
        %v3358 = vpop.trf.xlu0
        %v3359 = vpop.trf.xlu0
        %v3360 = vpop.trf.xlu0
        %v3361 = vpop.trf.xlu0
        %v3362 = vpop.trf.xlu0
        %v3363 = vpop.trf.xlu0
        %v3364 = vpop.trf.xlu0
        %3365 = vxpose.xlu0.b32.start [1/16] %v3222, 128
        %3366 = vxpose.xlu0.b32.cont [2/16] 0.0, 128
        %3367 = vxpose.xlu0.b32.cont [3/16] 0.0, 128
        %3368 = vxpose.xlu0.b32.cont [4/16] 0.0, 128
        %3369 = vxpose.xlu0.b32.cont [5/16] 0.0, 128
        %3370 = vxpose.xlu0.b32.cont [6/16] 0.0, 128
        %3371 = vxpose.xlu0.b32.cont [7/16] 0.0, 128
        %3372 = vxpose.xlu0.b32.cont [8/16] 0.0, 128
        %3373 = vxpose.xlu0.b32.cont [9/16] 0.0, 128
        %3374 = vxpose.xlu0.b32.cont [10/16] 0.0, 128
        %3375 = vxpose.xlu0.b32.cont [11/16] 0.0, 128
        %3376 = vxpose.xlu0.b32.cont [12/16] 0.0, 128
        %3377 = vxpose.xlu0.b32.cont [13/16] 0.0, 128
        %3378 = vxpose.xlu0.b32.cont [14/16] 0.0, 128
        %3379 = vxpose.xlu0.b32.cont [15/16] 0.0, 128
        %3380 = vxpose.xlu0.b32.end [16/16] 0.0, 128
        %v3381 = vpop.trf.xlu0
        %v3382 = vpop.trf.xlu0
        %v3383 = vpop.trf.xlu0
        %v3384 = vpop.trf.xlu0
        %v3385 = vpop.trf.xlu0
        %v3386 = vpop.trf.xlu0
        %v3387 = vpop.trf.xlu0
        %v3388 = vpop.trf.xlu0
        %v3389 = vpop.trf.xlu0
        %v3390 = vpop.trf.xlu0
        %v3391 = vpop.trf.xlu0
        %v3392 = vpop.trf.xlu0
        %v3393 = vpop.trf.xlu0
        %v3394 = vpop.trf.xlu0
        %v3395 = vpop.trf.xlu0
        %v3396 = vpop.trf.xlu0
        %3397 = vxpose.xlu0.b32.start [1/16] %v3298, 128
        %3398 = vxpose.xlu0.b32.cont [2/16] 0.0, 128
        %3399 = vxpose.xlu0.b32.cont [3/16] 0.0, 128
        %3400 = vxpose.xlu0.b32.cont [4/16] 0.0, 128
        %3401 = vxpose.xlu0.b32.cont [5/16] 0.0, 128
        %3402 = vxpose.xlu0.b32.cont [6/16] 0.0, 128
        %3403 = vxpose.xlu0.b32.cont [7/16] 0.0, 128
        %3404 = vxpose.xlu0.b32.cont [8/16] 0.0, 128
        %3405 = vxpose.xlu0.b32.cont [9/16] 0.0, 128
        %3406 = vxpose.xlu0.b32.cont [10/16] 0.0, 128
        %3407 = vxpose.xlu0.b32.cont [11/16] 0.0, 128
        %3408 = vxpose.xlu0.b32.cont [12/16] 0.0, 128
        %3409 = vxpose.xlu0.b32.cont [13/16] 0.0, 128
        %3410 = vxpose.xlu0.b32.cont [14/16] 0.0, 128
        %3411 = vxpose.xlu0.b32.cont [15/16] 0.0, 128
        %3412 = vxpose.xlu0.b32.end [16/16] 0.0, 128
        %v3413 = vpop.trf.xlu0
        %v3414 = vpop.trf.xlu0
        %v3415 = vpop.trf.xlu0
        %v3416 = vpop.trf.xlu0
        %v3417 = vpop.trf.xlu0
        %v3418 = vpop.trf.xlu0
        %v3419 = vpop.trf.xlu0
        %v3420 = vpop.trf.xlu0
        %v3421 = vpop.trf.xlu0
        %v3422 = vpop.trf.xlu0
        %v3423 = vpop.trf.xlu0
        %v3424 = vpop.trf.xlu0
        %v3425 = vpop.trf.xlu0
        %v3426 = vpop.trf.xlu0
        %v3427 = vpop.trf.xlu0
        %v3428 = vpop.trf.xlu0
        %v3429 = vcombine.low %v3317, %v3381
        %v3430 = vcombine.high %v3317, %v3381
        %v3432 = vunpack.c.l.s4 1983009808
        %v3433 = vunpack.c.0.s8 %v3432
        %v3434 = vlaneseq
        %v3435 = vshrl.u32 %v3434, 7
        %v3436 = vsub.s32 %v3433, %v3435
        %v3437 = vrot.slane %v3429, %v3436
        %v3439 = vunpack.c.l.s4 1983009808
        %v3440 = vunpack.c.0.s8 %v3439
        %v3441 = vlaneseq
        %v3442 = vshrl.u32 %v3441, 7
        %v3443 = vsub.s32 %v3440, %v3442
        %v3444 = vrot.slane %v3430, %v3443
        %v3445 = vcombine.low %v3349, %v3413
        %v3446 = vcombine.high %v3349, %v3413
        %v3448 = vunpack.c.l.s4 1983009808
        %v3449 = vunpack.c.0.s8 %v3448
        %v3450 = vlaneseq
        %v3451 = vshrl.u32 %v3450, 7
        %v3452 = vsub.s32 %v3449, %v3451
        %v3453 = vrot.slane %v3445, %v3452
        %v3455 = vunpack.c.l.s4 1983009808
        %v3456 = vunpack.c.0.s8 %v3455
        %v3457 = vlaneseq
        %v3458 = vshrl.u32 %v3457, 7
        %v3459 = vsub.s32 %v3456, %v3458
        %v3460 = vrot.slane %v3446, %v3459
        %v3461 = vcombine.low %v3437, %v3453
        %v3462 = vcombine.high %v3437, %v3453
        %v3464 = vunpack.c.l.s4 1934713408
        %v3465 = vunpack.c.0.s8 %v3464
        %v3466 = vlaneseq
        %v3467 = vshrl.u32 %v3466, 7
        %v3468 = vsub.s32 %v3465, %v3467
        %v3469 = vrot.slane %v3461, %v3468
        %v3471 = vunpack.c.l.s4 1934713408
        %v3472 = vunpack.c.0.s8 %v3471
        %v3473 = vlaneseq
        %v3474 = vshrl.u32 %v3473, 7
        %v3475 = vsub.s32 %v3472, %v3474
        %v3476 = vrot.slane %v3462, %v3475
        %v3477 = vcombine.low %v3444, %v3460
        %v3478 = vcombine.high %v3444, %v3460
        %v3480 = vunpack.c.l.s4 1934713408
        %v3481 = vunpack.c.0.s8 %v3480
        %v3482 = vlaneseq
        %v3483 = vshrl.u32 %v3482, 7
        %v3484 = vsub.s32 %v3481, %v3483
        %v3485 = vrot.slane %v3477, %v3484
        %v3487 = vunpack.c.l.s4 1934713408
        %v3488 = vunpack.c.0.s8 %v3487
        %v3489 = vlaneseq
        %v3490 = vshrl.u32 %v3489, 7
        %v3491 = vsub.s32 %v3488, %v3490
        %v3492 = vrot.slane %v3478, %v3491
        %v3493 = vcombine.high %v3469, 0.0
        %v3494 = vcombine.high %v3476, 0.0
        %v3495 = vcombine.high %v3485, 0.0
        %v3496 = vcombine.high %v3492, 0.0
        %v3497 = vcombine.low %v3469, %v3476
        %v3499 = vunpack.c.l.s4 1983009808
        %v3500 = vunpack.c.0.s8 %v3499
        %v3501 = vlaneseq
        %v3502 = vshrl.u32 %v3501, 7
        %v3503 = vsub.s32 %v3500, %v3502
        %v3504 = vrot.slane %v3497, %v3503
        %v3505 = vcombine.low %v3493, %v3494
        %v3507 = vunpack.c.l.s4 1983009808
        %v3508 = vunpack.c.0.s8 %v3507
        %v3509 = vlaneseq
        %v3510 = vshrl.u32 %v3509, 7
        %v3511 = vsub.s32 %v3508, %v3510
        %v3512 = vrot.slane %v3505, %v3511
        %v3513 = vcombine.low %v3485, %v3492
        %v3515 = vunpack.c.l.s4 1983009808
        %v3516 = vunpack.c.0.s8 %v3515
        %v3517 = vlaneseq
        %v3518 = vshrl.u32 %v3517, 7
        %v3519 = vsub.s32 %v3516, %v3518
        %v3520 = vrot.slane %v3513, %v3519
        %v3521 = vcombine.low %v3495, %v3496
        %v3523 = vunpack.c.l.s4 1983009808
        %v3524 = vunpack.c.0.s8 %v3523
        %v3525 = vlaneseq
        %v3526 = vshrl.u32 %v3525, 7
        %v3527 = vsub.s32 %v3524, %v3526
        %v3528 = vrot.slane %v3521, %v3527
        %v3529 = vcombine.low %v3504, %v3512
        %v3530 = vcombine.high %v3504, %v3512
        %v3532 = vunpack.c.l.s4 1934713408
        %v3533 = vunpack.c.0.s8 %v3532
        %v3534 = vlaneseq
        %v3535 = vshrl.u32 %v3534, 7
        %v3536 = vsub.s32 %v3533, %v3535
        %v3537 = vrot.slane %v3529, %v3536
        %v3539 = vunpack.c.l.s4 1934713408
        %v3540 = vunpack.c.0.s8 %v3539
        %v3541 = vlaneseq
        %v3542 = vshrl.u32 %v3541, 7
        %v3543 = vsub.s32 %v3540, %v3542
        %v3544 = vrot.slane %v3530, %v3543
        %v3545 = vcombine.low %v3520, %v3528
        %v3546 = vcombine.high %v3520, %v3528
        %v3548 = vunpack.c.l.s4 1934713408
        %v3549 = vunpack.c.0.s8 %v3548
        %v3550 = vlaneseq
        %v3551 = vshrl.u32 %v3550, 7
        %v3552 = vsub.s32 %v3549, %v3551
        %v3553 = vrot.slane %v3545, %v3552
        %v3555 = vunpack.c.l.s4 1934713408
        %v3556 = vunpack.c.0.s8 %v3555
        %v3557 = vlaneseq
        %v3558 = vshrl.u32 %v3557, 7
        %v3559 = vsub.s32 %v3556, %v3558
        %v3560 = vrot.slane %v3546, %v3559
        %v3561 = vcombine.low %v3537, %v3553
        %v3562 = vcombine.high %v3537, %v3553
        %v3563 = vcombine.low %v3544, %v3560
        %v3564 = vcombine.high %v3544, %v3560
        %3566 = vrot.lane.b32.xlu0 %v3562, 8
        %v3567 = vpop.permute.xlu0 %3566
        %3570 = vrot.lane.b32.xlu0 %v3563, 16
        %v3571 = vpop.permute.xlu0 %3570
        %3574 = vrot.lane.b32.xlu0 %v3564, 24
        %v3575 = vpop.permute.xlu0 %3574
        %v3577 = vsel %vm908, %v3561, %v3567
        %v3578 = vsel %vm1962, %v3577, %v3571
        %v3579 = vsel %vm1964, %v3578, %v3575
        %s3580 = scalar_lea.vmem %s6, 32
        %v3581 = vld [vmem:[%s3580] sm:$0xff]
        %v3582 = vld [vmem:[%s3580 + $0x8] sm:$0xff]
        %v3583 = vld [vmem:[%s3580 + $0x10] sm:$0xff]
        %v3584 = vld [vmem:[%s3580 + $0x18] sm:$0xff]
        %s3585 = scalar_lea.vmem %s7, 1
        %v3586 = vld [vmem:[%s3585] sm:$0x1]
        %v3588 = vlaneseq
        %v3589 = vshrl.u32 %v3588, 7
        %v3590 = vsub.s32 0, %v3589
        %v3591 = vrot.slane %v3586, %v3590
        %v3594 = vsel %vm641, %v3579, 0
        %3596 = vmatprep.subr.mxu0 0.0
        %3597 = vmatpush1.msra.mxu0 0.0
        %3598 = vmatprep.subr.mxu0 0.0
        %3599 = vmatpush1.msra.mxu0 0.0
        %3600 = vmatprep.subr.mxu0 0.0
        %3601 = vmatpush1.msra.mxu0 0.0
        %3602 = vmatprep.subr.mxu0 0.0
        %3603 = vmatpush1.msra.mxu0 0.0
        %3604 = vmatprep.subr.mxu0 0.0
        %3605 = vmatpush1.msra.mxu0 0.0
        %3606 = vmatprep.subr.mxu0 0.0
        %3607 = vmatpush1.msra.mxu0 0.0
        %3608 = vmatprep.subr.mxu0 0.0
        %3609 = vmatpush1.msra.mxu0 0.0
        %3610 = vmatprep.subr.mxu0 0.0
        %3611 = vmatpush1.msra.mxu0 0.0
        %3612 = vmatprep.subr.mxu0 0.0
        %3613 = vmatpush1.msra.mxu0 0.0
        %3614 = vmatprep.subr.mxu0 0.0
        %3615 = vmatpush1.msra.mxu0 0.0
        %3616 = vmatprep.subr.mxu0 0.0
        %3617 = vmatpush1.msra.mxu0 0.0
        %3618 = vmatprep.subr.mxu0 0.0
        %3619 = vmatpush1.msra.mxu0 0.0
        %3620 = vmatprep.subr.mxu0 0.0
        %3621 = vmatpush1.msra.mxu0 %v3584
        %3622 = vmatprep.subr.mxu0 0.0
        %3623 = vmatpush1.msra.mxu0 %v3583
        %3624 = vmatprep.subr.mxu0 0.0
        %3625 = vmatpush1.msra.mxu0 %v3582
        %3626 = vmatprep.subr.mxu0 0.0
        %3627 = vmatpush1.msra.mxu0 %v3581
        %3628 = vmatprep.subr.mxu0 0.0
        %3629 = vmatpush2.msra.mxu0 0.0
        %3630 = vmatprep.subr.mxu0 0.0
        %3631 = vmatpush2.msra.mxu0 0.0
        %3632 = vmatprep.subr.mxu0 0.0
        %3633 = vmatpush2.msra.mxu0 0.0
        %3634 = vmatprep.subr.mxu0 0.0
        %3635 = vmatpush2.msra.mxu0 0.0
        %3636 = vmatprep.subr.mxu0 0.0
        %3637 = vmatpush2.msra.mxu0 0.0
        %3638 = vmatprep.subr.mxu0 0.0
        %3639 = vmatpush2.msra.mxu0 0.0
        %3640 = vmatprep.subr.mxu0 0.0
        %3641 = vmatpush2.msra.mxu0 0.0
        %3642 = vmatprep.subr.mxu0 0.0
        %3643 = vmatpush2.msra.mxu0 0.0
        %3644 = vmatprep.subr.mxu0 0.0
        %3645 = vmatpush2.msra.mxu0 0.0
        %3646 = vmatprep.subr.mxu0 0.0
        %3647 = vmatpush2.msra.mxu0 0.0
        %3648 = vmatprep.subr.mxu0 0.0
        %3649 = vmatpush2.msra.mxu0 0.0
        %3650 = vmatprep.subr.mxu0 0.0
        %3651 = vmatpush2.msra.mxu0 0.0
        %3652 = vmatprep.subr.mxu0 0.0
        %3653 = vmatpush2.msra.mxu0 0.0
        %3654 = vmatprep.subr.mxu0 0.0
        %3655 = vmatpush2.msra.mxu0 0.0
        %3656 = vmatprep.subr.mxu0 0.0
        %3657 = vmatpush2.msra.mxu0 0.0
        %3658 = vmatprep.subr.mxu0 0.0
        %3659 = vmatpush2.msra.mxu0 0.0
        %3660 = vmatprep.mubr.f32.mxu0 0.0
        %3661 = vmatmul.mubr.f32.gmra.mxu0 %v3594
        %v3662 = vpop.f32.mrf.mxu0
        %v3663 = vadd.f32 %v3591, %v3662
        %v3664 = vpop.f32.mrf.mxu0
        %3665 = vdwg.mxu0
        %v3666 = vadd.f32 %v3663, %v2291
        %s3667 = scalar_lea.vmem %s8, 1
        %v3668 = vld [vmem:[%s3667] sm:$0x1]
        %s3669 = scalar_lea.vmem %s9, 1
        %v3670 = vld [vmem:[%s3669] sm:$0x1]
        %v3671 = vsel %vm641, %v3666, 0.0
        %3672 = vadd.xlane.f32.xlu0 %v3671
        %v3673 = vpop.xlane.xlu0 %3672
        %v3674 = vmul.f32 %v3673, %v645
        %v3675 = vsub.f32 %v3666, %v3674
        %v3676 = vmul.f32 %v3675, %v3675
        %v3677 = vsel %vm641, %v3676, 0.0
        %3678 = vadd.xlane.f32.xlu0 %v3677
        %v3679 = vpop.xlane.xlu0 %3678
        %v3680 = vmul.f32 %v3679, %v645
        %v3681 = vadd.f32 %v3680, 1e-12
        %v3682 = vrsqrt.pop %v3681
        %v3683 = vmul.f32 %v3675, %v3682
        %v3685 = vlaneseq
        %v3686 = vshrl.u32 %v3685, 7
        %v3687 = vsub.s32 0, %v3686
        %v3688 = vrot.slane %v3668, %v3687
        %v3690 = vmul.f32 %v3683, %v3688
        %v3692 = vlaneseq
        %v3693 = vshrl.u32 %v3692, 7
        %v3694 = vsub.s32 0, %v3693
        %v3695 = vrot.slane %v3670, %v3694
        %v3697 = vadd.f32 %v3690, %v3695
        %s3698 = scalar_lea.vmem %s10, 32
        %v3699 = vld [vmem:[%s3698] sm:$0xff]
        %v3700 = vld [vmem:[%s3698 + $0x8] sm:$0xff]
        %v3701 = vld [vmem:[%s3698 + $0x10] sm:$0xff]
        %v3702 = vld [vmem:[%s3698 + $0x18] sm:$0xff]
        %s3703 = scalar_lea.vmem %s11, 1
        %v3704 = vld [vmem:[%s3703] sm:$0x1]
        %v3706 = vlaneseq
        %v3707 = vshrl.u32 %v3706, 7
        %v3708 = vsub.s32 0, %v3707
        %v3709 = vrot.slane %v3704, %v3708
        %v3712 = vsel %vm641, %v3697, 0
        %3714 = vmatprep.subr.mxu0 0.0
        %3715 = vmatpush1.msra.mxu0 0.0
        %3716 = vmatprep.subr.mxu0 0.0
        %3717 = vmatpush1.msra.mxu0 0.0
        %3718 = vmatprep.subr.mxu0 0.0
        %3719 = vmatpush1.msra.mxu0 0.0
        %3720 = vmatprep.subr.mxu0 0.0
        %3721 = vmatpush1.msra.mxu0 0.0
        %3722 = vmatprep.subr.mxu0 0.0
        %3723 = vmatpush1.msra.mxu0 0.0
        %3724 = vmatprep.subr.mxu0 0.0
        %3725 = vmatpush1.msra.mxu0 0.0
        %3726 = vmatprep.subr.mxu0 0.0
        %3727 = vmatpush1.msra.mxu0 0.0
        %3728 = vmatprep.subr.mxu0 0.0
        %3729 = vmatpush1.msra.mxu0 0.0
        %3730 = vmatprep.subr.mxu0 0.0
        %3731 = vmatpush1.msra.mxu0 0.0
        %3732 = vmatprep.subr.mxu0 0.0
        %3733 = vmatpush1.msra.mxu0 0.0
        %3734 = vmatprep.subr.mxu0 0.0
        %3735 = vmatpush1.msra.mxu0 0.0
        %3736 = vmatprep.subr.mxu0 0.0
        %3737 = vmatpush1.msra.mxu0 0.0
        %3738 = vmatprep.subr.mxu0 0.0
        %3739 = vmatpush1.msra.mxu0 %v3702
        %3740 = vmatprep.subr.mxu0 0.0
        %3741 = vmatpush1.msra.mxu0 %v3701
        %3742 = vmatprep.subr.mxu0 0.0
        %3743 = vmatpush1.msra.mxu0 %v3700
        %3744 = vmatprep.subr.mxu0 0.0
        %3745 = vmatpush1.msra.mxu0 %v3699
        %3746 = vmatprep.subr.mxu0 0.0
        %3747 = vmatpush2.msra.mxu0 0.0
        %3748 = vmatprep.subr.mxu0 0.0
        %3749 = vmatpush2.msra.mxu0 0.0
        %3750 = vmatprep.subr.mxu0 0.0
        %3751 = vmatpush2.msra.mxu0 0.0
        %3752 = vmatprep.subr.mxu0 0.0
        %3753 = vmatpush2.msra.mxu0 0.0
        %3754 = vmatprep.subr.mxu0 0.0
        %3755 = vmatpush2.msra.mxu0 0.0
        %3756 = vmatprep.subr.mxu0 0.0
        %3757 = vmatpush2.msra.mxu0 0.0
        %3758 = vmatprep.subr.mxu0 0.0
        %3759 = vmatpush2.msra.mxu0 0.0
        %3760 = vmatprep.subr.mxu0 0.0
        %3761 = vmatpush2.msra.mxu0 0.0
        %3762 = vmatprep.subr.mxu0 0.0
        %3763 = vmatpush2.msra.mxu0 0.0
        %3764 = vmatprep.subr.mxu0 0.0
        %3765 = vmatpush2.msra.mxu0 0.0
        %3766 = vmatprep.subr.mxu0 0.0
        %3767 = vmatpush2.msra.mxu0 0.0
        %3768 = vmatprep.subr.mxu0 0.0
        %3769 = vmatpush2.msra.mxu0 0.0
        %3770 = vmatprep.subr.mxu0 0.0
        %3771 = vmatpush2.msra.mxu0 0.0
        %3772 = vmatprep.subr.mxu0 0.0
        %3773 = vmatpush2.msra.mxu0 0.0
        %3774 = vmatprep.subr.mxu0 0.0
        %3775 = vmatpush2.msra.mxu0 0.0
        %3776 = vmatprep.subr.mxu0 0.0
        %3777 = vmatpush2.msra.mxu0 0.0
        %3778 = vmatprep.mubr.f32.mxu0 0.0
        %3779 = vmatmul.mubr.f32.gmra.mxu0 %v3712
        %v3780 = vpop.f32.mrf.mxu0
        %v3781 = vadd.f32 %v3709, %v3780
        %v3782 = vpop.f32.mrf.mxu0
        %3783 = vdwg.mxu0
        %v3784 = vmul.f32 %v3781, 0.5
        %v3785 = vmul.f32 %v3781, 0.044715
        %v3786 = vmul.f32 %v3785, %v3781
        %v3787 = vmul.f32 %v3786, %v3781
        %v3788 = vadd.f32 %v3781, %v3787
        %v3789 = vmul.f32 %v3788, 0.7978846
        %v3790 = vtanh.pop %v3789
        %v3791 = vadd.f32 %v3790, 1.0
        %v3792 = vmul.f32 %v3784, %v3791
        %s3793 = scalar_lea.vmem %s12, 64
        %v3794 = vld [vmem:[%s3793] sm:$0xff]
        %v3795 = vld [vmem:[%s3793 + $0x8] sm:$0xff]
        %v3796 = vld [vmem:[%s3793 + $0x10] sm:$0xff]
        %v3797 = vld [vmem:[%s3793 + $0x18] sm:$0xff]
        %v3798 = vld [vmem:[%s3793 + $0x20] sm:$0xff]
        %v3799 = vld [vmem:[%s3793 + $0x28] sm:$0xff]
        %v3800 = vld [vmem:[%s3793 + $0x30] sm:$0xff]
        %v3801 = vld [vmem:[%s3793 + $0x38] sm:$0xff]
        %s3802 = scalar_lea.vmem %s13, 1
        %v3803 = vld [vmem:[%s3802] sm:$0x1]
        %v3805 = vlaneseq
        %v3806 = vshrl.u32 %v3805, 7
        %v3807 = vsub.s32 0, %v3806
        %v3808 = vrot.slane %v3803, %v3807
        %v3811 = vsel %vm2188, %v3792, 0
        %3813 = vmatprep.subr.mxu0 0.0
        %3814 = vmatpush1.msra.mxu0 0.0
        %3815 = vmatprep.subr.mxu0 0.0
        %3816 = vmatpush1.msra.mxu0 0.0
        %3817 = vmatprep.subr.mxu0 0.0
        %3818 = vmatpush1.msra.mxu0 0.0
        %3819 = vmatprep.subr.mxu0 0.0
        %3820 = vmatpush1.msra.mxu0 0.0
        %3821 = vmatprep.subr.mxu0 0.0
        %3822 = vmatpush1.msra.mxu0 0.0
        %3823 = vmatprep.subr.mxu0 0.0
        %3824 = vmatpush1.msra.mxu0 0.0
        %3825 = vmatprep.subr.mxu0 0.0
        %3826 = vmatpush1.msra.mxu0 0.0
        %3827 = vmatprep.subr.mxu0 0.0
        %3828 = vmatpush1.msra.mxu0 0.0
        %3829 = vmatprep.subr.mxu0 0.0
        %3830 = vmatpush1.msra.mxu0 %v3801
        %3831 = vmatprep.subr.mxu0 0.0
        %3832 = vmatpush1.msra.mxu0 %v3800
        %3833 = vmatprep.subr.mxu0 0.0
        %3834 = vmatpush1.msra.mxu0 %v3799
        %3835 = vmatprep.subr.mxu0 0.0
        %3836 = vmatpush1.msra.mxu0 %v3798
        %3837 = vmatprep.subr.mxu0 0.0
        %3838 = vmatpush1.msra.mxu0 %v3797
        %3839 = vmatprep.subr.mxu0 0.0
        %3840 = vmatpush1.msra.mxu0 %v3796
        %3841 = vmatprep.subr.mxu0 0.0
        %3842 = vmatpush1.msra.mxu0 %v3795
        %3843 = vmatprep.subr.mxu0 0.0
        %3844 = vmatpush1.msra.mxu0 %v3794
        %3845 = vmatprep.subr.mxu0 0.0
        %3846 = vmatpush2.msra.mxu0 0.0
        %3847 = vmatprep.subr.mxu0 0.0
        %3848 = vmatpush2.msra.mxu0 0.0
        %3849 = vmatprep.subr.mxu0 0.0
        %3850 = vmatpush2.msra.mxu0 0.0
        %3851 = vmatprep.subr.mxu0 0.0
        %3852 = vmatpush2.msra.mxu0 0.0
        %3853 = vmatprep.subr.mxu0 0.0
        %3854 = vmatpush2.msra.mxu0 0.0
        %3855 = vmatprep.subr.mxu0 0.0
        %3856 = vmatpush2.msra.mxu0 0.0
        %3857 = vmatprep.subr.mxu0 0.0
        %3858 = vmatpush2.msra.mxu0 0.0
        %3859 = vmatprep.subr.mxu0 0.0
        %3860 = vmatpush2.msra.mxu0 0.0
        %3861 = vmatprep.subr.mxu0 0.0
        %3862 = vmatpush2.msra.mxu0 0.0
        %3863 = vmatprep.subr.mxu0 0.0
        %3864 = vmatpush2.msra.mxu0 0.0
        %3865 = vmatprep.subr.mxu0 0.0
        %3866 = vmatpush2.msra.mxu0 0.0
        %3867 = vmatprep.subr.mxu0 0.0
        %3868 = vmatpush2.msra.mxu0 0.0
        %3869 = vmatprep.subr.mxu0 0.0
        %3870 = vmatpush2.msra.mxu0 0.0
        %3871 = vmatprep.subr.mxu0 0.0
        %3872 = vmatpush2.msra.mxu0 0.0
        %3873 = vmatprep.subr.mxu0 0.0
        %3874 = vmatpush2.msra.mxu0 0.0
        %3875 = vmatprep.subr.mxu0 0.0
        %3876 = vmatpush2.msra.mxu0 0.0
        %3877 = vmatprep.mubr.f32.mxu0 0.0
        %3878 = vmatmul.mubr.f32.gmra.mxu0 %v3811
        %v3879 = vpop.f32.mrf.mxu0
        %v3880 = vadd.f32 %v3808, %v3879
        %v3881 = vpop.f32.mrf.mxu0
        %3882 = vdwg.mxu0
        %v3883 = vadd.f32 %v3880, %v3697
        %s3884 = scalar_lea.vmem %s14, 1
        %v3885 = vld [vmem:[%s3884] sm:$0x1]
        %s3886 = scalar_lea.vmem %s15, 1
        %v3887 = vld [vmem:[%s3886] sm:$0x1]
        %v3888 = vsel %vm641, %v3883, 0.0
        %3889 = vadd.xlane.f32.xlu0 %v3888
        %v3890 = vpop.xlane.xlu0 %3889
        %v3891 = vmul.f32 %v3890, %v645
        %v3892 = vsub.f32 %v3883, %v3891
        %v3893 = vmul.f32 %v3892, %v3892
        %v3894 = vsel %vm641, %v3893, 0.0
        %3895 = vadd.xlane.f32.xlu0 %v3894
        %v3896 = vpop.xlane.xlu0 %3895
        %v3897 = vmul.f32 %v3896, %v645
        %v3898 = vadd.f32 %v3897, 1e-12
        %v3899 = vrsqrt.pop %v3898
        %v3900 = vmul.f32 %v3892, %v3899
        %v3902 = vlaneseq
        %v3903 = vshrl.u32 %v3902, 7
        %v3904 = vsub.s32 0, %v3903
        %v3905 = vrot.slane %v3885, %v3904
        %v3907 = vmul.f32 %v3900, %v3905
        %v3909 = vlaneseq
        %v3910 = vshrl.u32 %v3909, 7
        %v3911 = vsub.s32 0, %v3910
        %v3912 = vrot.slane %v3887, %v3911
        %v3914 = vadd.f32 %v3907, %v3912
        %v3915 = vld [vmem:[%s16] sm:$0xff]
        %v3916 = vld [vmem:[%s16 + $0x8] sm:$0xff]
        %v3917 = vld [vmem:[%s16 + $0x10] sm:$0xff]
        %v3918 = vld [vmem:[%s16 + $0x18] sm:$0xff]
        %v3919 = vld [vmem:[%s17] sm:$0x1]
        %v3921 = vsel %vm641, %v3914, 0
        %3923 = vmatprep.subr.mxu0 0.0
        %3924 = vmatpush1.msra.mxu0 0.0
        %3925 = vmatprep.subr.mxu0 0.0
        %3926 = vmatpush1.msra.mxu0 0.0
        %3927 = vmatprep.subr.mxu0 0.0
        %3928 = vmatpush1.msra.mxu0 0.0
        %3929 = vmatprep.subr.mxu0 0.0
        %3930 = vmatpush1.msra.mxu0 0.0
        %3931 = vmatprep.subr.mxu0 0.0
        %3932 = vmatpush1.msra.mxu0 0.0
        %3933 = vmatprep.subr.mxu0 0.0
        %3934 = vmatpush1.msra.mxu0 0.0
        %3935 = vmatprep.subr.mxu0 0.0
        %3936 = vmatpush1.msra.mxu0 0.0
        %3937 = vmatprep.subr.mxu0 0.0
        %3938 = vmatpush1.msra.mxu0 0.0
        %3939 = vmatprep.subr.mxu0 0.0
        %3940 = vmatpush1.msra.mxu0 0.0
        %3941 = vmatprep.subr.mxu0 0.0
        %3942 = vmatpush1.msra.mxu0 0.0
        %3943 = vmatprep.subr.mxu0 0.0
        %3944 = vmatpush1.msra.mxu0 0.0
        %3945 = vmatprep.subr.mxu0 0.0
        %3946 = vmatpush1.msra.mxu0 0.0
        %3947 = vmatprep.subr.mxu0 0.0
        %3948 = vmatpush1.msra.mxu0 %v3918
        %3949 = vmatprep.subr.mxu0 0.0
        %3950 = vmatpush1.msra.mxu0 %v3917
        %3951 = vmatprep.subr.mxu0 0.0
        %3952 = vmatpush1.msra.mxu0 %v3916
        %3953 = vmatprep.subr.mxu0 0.0
        %3954 = vmatpush1.msra.mxu0 %v3915
        %3955 = vmatprep.subr.mxu0 0.0
        %3956 = vmatpush2.msra.mxu0 0.0
        %3957 = vmatprep.subr.mxu0 0.0
        %3958 = vmatpush2.msra.mxu0 0.0
        %3959 = vmatprep.subr.mxu0 0.0
        %3960 = vmatpush2.msra.mxu0 0.0
        %3961 = vmatprep.subr.mxu0 0.0
        %3962 = vmatpush2.msra.mxu0 0.0
        %3963 = vmatprep.subr.mxu0 0.0
        %3964 = vmatpush2.msra.mxu0 0.0
        %3965 = vmatprep.subr.mxu0 0.0
        %3966 = vmatpush2.msra.mxu0 0.0
        %3967 = vmatprep.subr.mxu0 0.0
        %3968 = vmatpush2.msra.mxu0 0.0
        %3969 = vmatprep.subr.mxu0 0.0
        %3970 = vmatpush2.msra.mxu0 0.0
        %3971 = vmatprep.subr.mxu0 0.0
        %3972 = vmatpush2.msra.mxu0 0.0
        %3973 = vmatprep.subr.mxu0 0.0
        %3974 = vmatpush2.msra.mxu0 0.0
        %3975 = vmatprep.subr.mxu0 0.0
        %3976 = vmatpush2.msra.mxu0 0.0
        %3977 = vmatprep.subr.mxu0 0.0
        %3978 = vmatpush2.msra.mxu0 0.0
        %3979 = vmatprep.subr.mxu0 0.0
        %3980 = vmatpush2.msra.mxu0 0.0
        %3981 = vmatprep.subr.mxu0 0.0
        %3982 = vmatpush2.msra.mxu0 0.0
        %3983 = vmatprep.subr.mxu0 0.0
        %3984 = vmatpush2.msra.mxu0 0.0
        %3985 = vmatprep.subr.mxu0 0.0
        %3986 = vmatpush2.msra.mxu0 0.0
        %3987 = vmatprep.mubr.f32.mxu0 0.0
        %3988 = vmatmul.mubr.f32.gmra.mxu0 %v3921
        %v3989 = vpop.f32.mrf.mxu0
        %v3990 = vadd.f32 %v3919, %v3989
        %v3991 = vpop.f32.mrf.mxu0
        %3992 = vdwg.mxu0
        %v3993 = vtanh.pop %v3990
        %v3994 = vld [vmem:[%s18] sm:$0xff]
        %v3995 = vld [vmem:[%s18 + $0x8] sm:$0xff]
        %v3996 = vld [vmem:[%s18 + $0x10] sm:$0xff]
        %v3997 = vld [vmem:[%s18 + $0x18] sm:$0xff]
        %v3998 = vld [vmem:[%s19] sm:$0x1]
        %v4000 = vsel %vm641, %v3993, 0
        %4002 = vmatprep.subr.mxu0 0.0
        %4003 = vmatpush1.msra.mxu0 0.0
        %4004 = vmatprep.subr.mxu0 0.0
        %4005 = vmatpush1.msra.mxu0 0.0
        %4006 = vmatprep.subr.mxu0 0.0
        %4007 = vmatpush1.msra.mxu0 0.0
        %4008 = vmatprep.subr.mxu0 0.0
        %4009 = vmatpush1.msra.mxu0 0.0
        %4010 = vmatprep.subr.mxu0 0.0
        %4011 = vmatpush1.msra.mxu0 0.0
        %4012 = vmatprep.subr.mxu0 0.0
        %4013 = vmatpush1.msra.mxu0 0.0
        %4014 = vmatprep.subr.mxu0 0.0
        %4015 = vmatpush1.msra.mxu0 0.0
        %4016 = vmatprep.subr.mxu0 0.0
        %4017 = vmatpush1.msra.mxu0 0.0
        %4018 = vmatprep.subr.mxu0 0.0
        %4019 = vmatpush1.msra.mxu0 0.0
        %4020 = vmatprep.subr.mxu0 0.0
        %4021 = vmatpush1.msra.mxu0 0.0
        %4022 = vmatprep.subr.mxu0 0.0
        %4023 = vmatpush1.msra.mxu0 0.0
        %4024 = vmatprep.subr.mxu0 0.0
        %4025 = vmatpush1.msra.mxu0 0.0
        %4026 = vmatprep.subr.mxu0 0.0
        %4027 = vmatpush1.msra.mxu0 %v3997
        %4028 = vmatprep.subr.mxu0 0.0
        %4029 = vmatpush1.msra.mxu0 %v3996
        %4030 = vmatprep.subr.mxu0 0.0
        %4031 = vmatpush1.msra.mxu0 %v3995
        %4032 = vmatprep.subr.mxu0 0.0
        %4033 = vmatpush1.msra.mxu0 %v3994
        %4034 = vmatprep.subr.mxu0 0.0
        %4035 = vmatpush2.msra.mxu0 0.0
        %4036 = vmatprep.subr.mxu0 0.0
        %4037 = vmatpush2.msra.mxu0 0.0
        %4038 = vmatprep.subr.mxu0 0.0
        %4039 = vmatpush2.msra.mxu0 0.0
        %4040 = vmatprep.subr.mxu0 0.0
        %4041 = vmatpush2.msra.mxu0 0.0
        %4042 = vmatprep.subr.mxu0 0.0
        %4043 = vmatpush2.msra.mxu0 0.0
        %4044 = vmatprep.subr.mxu0 0.0
        %4045 = vmatpush2.msra.mxu0 0.0
        %4046 = vmatprep.subr.mxu0 0.0
        %4047 = vmatpush2.msra.mxu0 0.0
        %4048 = vmatprep.subr.mxu0 0.0
        %4049 = vmatpush2.msra.mxu0 0.0
        %4050 = vmatprep.subr.mxu0 0.0
        %4051 = vmatpush2.msra.mxu0 0.0
        %4052 = vmatprep.subr.mxu0 0.0
        %4053 = vmatpush2.msra.mxu0 0.0
        %4054 = vmatprep.subr.mxu0 0.0
        %4055 = vmatpush2.msra.mxu0 0.0
        %4056 = vmatprep.subr.mxu0 0.0
        %4057 = vmatpush2.msra.mxu0 0.0
        %4058 = vmatprep.subr.mxu0 0.0
        %4059 = vmatpush2.msra.mxu0 0.0
        %4060 = vmatprep.subr.mxu0 0.0
        %4061 = vmatpush2.msra.mxu0 0.0
        %4062 = vmatprep.subr.mxu0 0.0
        %4063 = vmatpush2.msra.mxu0 0.0
        %4064 = vmatprep.subr.mxu0 0.0
        %4065 = vmatpush2.msra.mxu0 0.0
        %4066 = vmatprep.mubr.f32.mxu0 0.0
        %4067 = vmatmul.mubr.f32.gmra.mxu0 %v4000
        %v4068 = vpop.f32.mrf.mxu0
        %v4069 = vadd.f32 %v3998, %v4068
        %v4070 = vpop.f32.mrf.mxu0
        %4071 = vdwg.mxu0
        %4072 = vst [vmem:[%s630] sm:$0x1] %v4069
        %s4073 = sand.u32 %s472, 1
        %s4074 = scalar_lea.sflag [#allocation3], %s4073
        %s4075 = sand.u32 %s472, 1
        %s4076 = scalar_lea.vmem [#allocation2], %s4075
        // Predicated region
        $region101: #{natureza_classifier_forward.1} parent=99 // pred_check
          %p4077 = pneg %p482
        $region102: #{natureza_classifier_forward.1} parent=99 // pred_check_branch
          %4079 = sbr.rel (%p4077) target = $region104
        $region103: #{natureza_classifier_forward.1} parent=99 // pred_region
          %s4081 = ssub.s32 16, 16
          %4082 = vsyncadd %s4074, %s4081
          %s4083 = smul.addr %s34, 16
          %s4084 = scalar_lea.hbm %s20, %s4083
          %s4086 = sshll.u32 %s4076, 4
          %s4087 = int_to_ptr.vmem [resolvable:$true] %s4086
          %4089 = dma.vmem_to_hbm [thread:$0]  %s4087, 16, %s4084, %s4074
        $region104: #{natureza_classifier_forward.1} parent=99 // pred_fallthru
          _
      $region100: #{natureza_classifier_forward.1} parent=5 // pred_fallthru
        _
      %p4090 = scmp.le.s32.totalorder 2, %s29
      // Predicated region
      $region105: #{natureza_classifier_forward.1} parent=5 // pred_check
        %p4091 = pneg %p4090
      $region106: #{natureza_classifier_forward.1} parent=5 // pred_check_branch
        %4093 = sbr.rel (%p4091) target = $region108
      $region107: #{natureza_classifier_forward.1} parent=5 // pred_region
        %s4094 = ssub.s32 %s29, 2
        // Predicated region
        $region109: #{natureza_classifier_forward.1} parent=107 // pred_check
          %p4095 = pneg %p488
        $region110: #{natureza_classifier_forward.1} parent=107 // pred_check_branch
          %4097 = sbr.rel (%p4095) target = $region112
        $region111: #{natureza_classifier_forward.1} parent=107 // pred_region
          %s4098 = sand.u32 %s473, 1
          %s4099 = scalar_lea.sflag [#allocation3], %s4098
          %s4100 = sand.u32 %s473, 1
          %s4101 = scalar_lea.vmem [#allocation2], %s4100
          %4102 = dma.done %s4099, 16
        $region112: #{natureza_classifier_forward.1} parent=107 // pred_fallthru
          _
      $region108: #{natureza_classifier_forward.1} parent=5 // pred_fallthru
        _
    $region6: #{natureza_classifier_forward.1} parent=1 // loop_footer
      %s33 = sadd.s32 1, %s29
    $region7: #{natureza_classifier_forward.1} parent=1 // loop_footer_branch
      %28 = sbr.rel target = $region3
    $region8: #{natureza_classifier_forward.1} parent=1 // loop_exit
      _
    %4103 = vsyncpa [#allocation3], 1
    %s4104 = scalar_lea.sflag [#allocation3], 1
    %4105 = vsyncpa %s4104, 1

</llo_original>
